<compile_context>
chip_gen: v6e
topology: v6e:2x2x1
jax: 0.10.0
libtpu: 0.0.40
codegen_flags: <defaults>
</compile_context>

<pallas_src>
from functools import partial

import numpy as np
import jax
import jax.numpy as jnp
from jax.experimental import pallas as pl
from jax.experimental.pallas import tpu as pltpu

LANE = 128


def _round_up(x, m):
    return (x + m - 1) // m * m


def _pad2(m, rows, cols):
    return jnp.pad(m, ((0, rows - m.shape[0]), (0, cols - m.shape[1])))


# ----------------------------------------------------------------------------
# Pallas kernels
# ----------------------------------------------------------------------------
def _conv_gemm_pool_kernel(cols_ref, w_ref, b_ref, pool_ref, o_ref):
    """One image per grid step: pooled = P @ tanh(cols @ W + b)."""
    acc = jnp.dot(cols_ref[...], w_ref[...], preferred_element_type=jnp.float32)
    acc = jnp.tanh(acc + b_ref[...])                       # f32 bias + tanh
    pooled = jnp.dot(pool_ref[...], acc, preferred_element_type=jnp.float32)
    o_ref[...] = pooled.astype(o_ref.dtype)                # lane-dense (N=128)


def _head_kernel(x_ref, w3_ref, b3_ref, w4_ref, b4_ref, w5_ref, b5_ref, o_ref):
    """conv3(=GEMM)+tanh -> fc1+tanh -> fc2, fully VMEM-resident."""
    h = jnp.dot(x_ref[...], w3_ref[...], preferred_element_type=jnp.float32)
    h = jnp.tanh(h + b3_ref[...])
    h = jnp.dot(h.astype(jnp.bfloat16), w4_ref[...],
                preferred_element_type=jnp.float32)
    h = jnp.tanh(h + b4_ref[...])
    o = jnp.dot(h.astype(jnp.bfloat16), w5_ref[...],
                preferred_element_type=jnp.float32)
    o_ref[...] = (o + b5_ref[...]).astype(o_ref.dtype)


# ----------------------------------------------------------------------------
# pallas_call wrappers
# ----------------------------------------------------------------------------
def conv_gemm_pool(cols, w, b, pool, *, rows_in, rows_out):
    """cols: (B*rows_in, Kp) bf16, w: (Kp, 128) bf16, b: (1,128) f32,
    pool: (rows_out, rows_in) f32  ->  (B*rows_out, 128) f32."""
    M, Kp = cols.shape
    n_img = M // rows_in
    N = w.shape[1]
    flops = n_img * 2 * (rows_in * Kp * N + rows_out * rows_in * N)
    bytes_accessed = (cols.size * cols.dtype.itemsize + w.size * 2 + b.size * 4
                      + pool.size * 4 + n_img * rows_out * N * 4)
    return pl.pallas_call(
        _conv_gemm_pool_kernel,
        out_shape=jax.ShapeDtypeStruct((n_img * rows_out, N), jnp.float32),
        grid_spec=pltpu.PrefetchScalarGridSpec(
            num_scalar_prefetch=0,
            grid=(n_img,),
            in_specs=[
                pl.BlockSpec((rows_in, Kp), lambda i: (i, 0)),
                pl.BlockSpec((Kp, N), lambda i: (0, 0)),
                pl.BlockSpec((1, N), lambda i: (0, 0)),
                pl.BlockSpec((rows_out, rows_in), lambda i: (0, 0)),
            ],
            out_specs=pl.BlockSpec((rows_out, N), lambda i: (i, 0)),
        ),
        compiler_params=pltpu.CompilerParams(dimension_semantics=("parallel",)),
        cost_estimate=pl.CostEstimate(flops=flops,
                                      transcendentals=n_img * rows_in * N,
                                      bytes_accessed=bytes_accessed),
    )(cols, w, b, pool)


def head_fused(x, w3, b3, w4, b4, w5, b5):
    """x: (Bp, 512) bf16 -> logits (Bp, 128) f32 (padded classes)."""
    Bp, K = x.shape
    N = w3.shape[1]
    TB = 128 if Bp % 128 == 0 else Bp          # tile batch rows when possible
    flops = 2 * Bp * (K * N + N * N + N * N)
    bytes_accessed = (x.size * 2 + (w3.size + w4.size + w5.size) * 2
                      + (b3.size + b4.size + b5.size) * 4 + Bp * N * 4)
    return pl.pallas_call(
        _head_kernel,
        out_shape=jax.ShapeDtypeStruct((Bp, N), jnp.float32),
        grid_spec=pltpu.PrefetchScalarGridSpec(
            num_scalar_prefetch=0,
            grid=(Bp // TB,),
            in_specs=[
                pl.BlockSpec((TB, K), lambda i: (i, 0)),
                pl.BlockSpec((K, N), lambda i: (0, 0)),
                pl.BlockSpec((1, N), lambda i: (0, 0)),
                pl.BlockSpec((N, N), lambda i: (0, 0)),
                pl.BlockSpec((1, N), lambda i: (0, 0)),
                pl.BlockSpec((N, N), lambda i: (0, 0)),
                pl.BlockSpec((1, N), lambda i: (0, 0)),
            ],
            out_specs=pl.BlockSpec((TB, N), lambda i: (i, 0)),
        ),
        compiler_params=pltpu.CompilerParams(dimension_semantics=("parallel",)),
        cost_estimate=pl.CostEstimate(flops=flops, transcendentals=2 * Bp * N,
                                      bytes_accessed=bytes_accessed),
    )(x, w3, b3, w4, b4, w5, b5)


# ----------------------------------------------------------------------------
# Parameters (deterministic, PyTorch shapes) + one-time padded/NHWC repack
# ----------------------------------------------------------------------------
def init_params(key, num_classes=10):
    keys = jax.random.split(key, 10)
    scale = 0.1
    return {
        "conv1_w": jax.random.normal(keys[0], (6, 1, 5, 5), jnp.float32) * scale,
        "conv1_b": jax.random.normal(keys[1], (6,), jnp.float32) * scale,
        "conv2_w": jax.random.normal(keys[2], (16, 6, 5, 5), jnp.float32) * scale,
        "conv2_b": jax.random.normal(keys[3], (16,), jnp.float32) * scale,
        "conv3_w": jax.random.normal(keys[4], (120, 16, 5, 5), jnp.float32) * scale,
        "conv3_b": jax.random.normal(keys[5], (120,), jnp.float32) * scale,
        "fc1_w": jax.random.normal(keys[6], (50, 120), jnp.float32) * scale,
        "fc1_b": jax.random.normal(keys[7], (50,), jnp.float32) * scale,
        # fc2 implemented as in_features=50 for shape consistency (see TODO)
        "fc2_w": jax.random.normal(keys[8], (num_classes, 50), jnp.float32) * scale,
        "fc2_b": jax.random.normal(keys[9], (num_classes,), jnp.float32) * scale,
    }


def _make_pool_matrix(conv_h, conv_w, rows_in, rows_out):
    """(rows_out, rows_in) matrix averaging 2x2 windows of (conv_h, conv_w) rows."""
    ph, pw = conv_h // 2, conv_w // 2
    P = np.zeros((rows_out, rows_in), np.float32)
    for i in range(ph):
        for j in range(pw):
            p = i * pw + j
            for di in (0, 1):
                for dj in (0, 1):
                    P[p, (2 * i + di) * conv_w + (2 * j + dj)] = 0.25
    return jnp.asarray(P)


def prepare_params(p):
    """Repack weights once: (kh,kw,ci,co) / transposed FC, zero-padded, bf16."""
    bf16, f32 = jnp.bfloat16, jnp.float32
    return {
        "w1": _pad2(p["conv1_w"].transpose(2, 3, 1, 0).reshape(25, 6), 128, LANE).astype(bf16),
        "b1": _pad2(p["conv1_b"].reshape(1, -1), 1, LANE).astype(f32),
        "w2": _pad2(p["conv2_w"].transpose(2, 3, 1, 0).reshape(150, 16), 256, LANE).astype(bf16),
        "b2": _pad2(p["conv2_b"].reshape(1, -1), 1, LANE).astype(f32),
        "w3": _pad2(p["conv3_w"].transpose(2, 3, 1, 0).reshape(400, 120), 512, LANE).astype(bf16),
        "b3": _pad2(p["conv3_b"].reshape(1, -1), 1, LANE).astype(f32),
        "w4": _pad2(p["fc1_w"].T, LANE, LANE).astype(bf16),
        "b4": _pad2(p["fc1_b"].reshape(1, -1), 1, LANE).astype(f32),
        "w5": _pad2(p["fc2_w"].T, LANE, LANE).astype(bf16),
        "b5": _pad2(p["fc2_b"].reshape(1, -1), 1, LANE).astype(f32),
        "pool1": _make_pool_matrix(28, 28, 784, 200),   # 28x28 -> 14x14 (+pad)
        "pool2": _make_pool_matrix(10, 10, 128, 32),    # 10x10 -> 5x5  (+pad)
    }


# ----------------------------------------------------------------------------
# Forward pass (jit-compiled; only thin slicing/padding glue outside Pallas)
# ----------------------------------------------------------------------------
def _im2col_nhwc(x, k):
    """x: (B, H, W, C) -> (B, OH*OW, k*k*C); K index = (kh*k + kw)*C + ci."""
    B, H, W, C = x.shape
    oh, ow = H - k + 1, W - k + 1
    cols = jnp.concatenate(
        [x[:, i:i + oh, j:j + ow, :] for i in range(k) for j in range(k)], axis=-1)
    return cols.reshape(B, oh * ow, k * k * C)


def lenet5_forward(prep, x, num_classes=10):
    """x: (B, 1, 32, 32) f32 -> logits (B, num_classes) f32."""
    B = x.shape[0]
    x = x.reshape(B, 32, 32, 1)                              # C=1: NCHW -> NHWC

    # conv1 (1->6, 5x5) + tanh + avgpool2, fused in one kernel
    cols1 = _im2col_nhwc(x, 5)                               # (B, 784, 25)
    cols1 = jnp.pad(cols1, ((0, 0), (0, 0), (0, 128 - 25)))  # K -> 128 (zeros)
    cols1 = cols1.reshape(B * 784, 128).astype(jnp.bfloat16)
    p1 = conv_gemm_pool(cols1, prep["w1"], prep["b1"], prep["pool1"],
                        rows_in=784, rows_out=200)           # (B*200, 128) f32
    p1 = p1.reshape(B, 200, 128)[:, :196, :6].reshape(B, 14, 14, 6)

    # conv2 (6->16, 5x5) + tanh + avgpool2, fused in one kernel
    cols2 = _im2col_nhwc(p1, 5)                              # (B, 100, 150)
    cols2 = jnp.pad(cols2, ((0, 0), (0, 128 - 100), (0, 256 - 150)))
    cols2 = cols2.reshape(B * 128, 256).astype(jnp.bfloat16)
    p2 = conv_gemm_pool(cols2, prep["w2"], prep["b2"], prep["pool2"],
                        rows_in=128, rows_out=32)            # (B*32, 128) f32
    p2 = p2.reshape(B, 32, 128)[:, :25, :16].reshape(B, 400)  # (kh*5+kw)*16+ci

    # conv3 + tanh + fc1 + tanh + fc2: single fused head kernel
    Bp = _round_up(B, 8)
    x3 = jnp.pad(p2, ((0, Bp - B), (0, 512 - 400))).astype(jnp.bfloat16)
    logits = head_fused(x3, prep["w3"], prep["b3"], prep["w4"], prep["b4"],
                        prep["w5"], prep["b5"])              # (Bp, 128) f32
    return logits[:B, :num_classes]


if __name__ == "__main__":
    key = jax.random.PRNGKey(0)
    pkey, xkey = jax.random.split(key)
    params = init_params(pkey, num_classes=10)
    prep = prepare_params(params)

    # LeNet5 conv stack requires 32x32 single-channel input to reach 120 features.
    x = jax.random.normal(xkey, (2, 1, 32, 32), jnp.float32)

    forward = jax.jit(partial(lenet5_forward, num_classes=10))
    logits = jax.block_until_ready(forward(prep, x))

    assert logits.shape == (2, 10), logits.shape
    assert logits.dtype == jnp.float32
    assert bool(jnp.all(jnp.isfinite(logits)))
    print("KERNEL_OK")
</pallas_src>

<mosaic_0001>
module attributes {stable_mosaic.version = 11 : i64} {
  func.func @_conv_gemm_pool_kernel(%arg0: i32, %arg1: memref<784x128xbf16, #tpu.memory_space<vmem>>, %arg2: memref<128x128xbf16, #tpu.memory_space<vmem>>, %arg3: memref<1x128xf32, #tpu.memory_space<vmem>>, %arg4: memref<200x784xf32, #tpu.memory_space<vmem>>, %arg5: memref<200x128xf32, #tpu.memory_space<vmem>>) attributes {dimension_semantics = [#tpu.dimension_semantics<parallel>], iteration_bounds = array<i64: 2>, scalar_prefetch = 0 : i64, scratch_operands = 0 : i64, tpu.core_type = #tpu.core_type<tc>, window_params = [{transform_indices = @transform_0, window_bounds = array<i64: 784, 128>}, {pipeline_mode = #tpu.pipeline_mode<synchronous>, transform_indices = @transform_1, window_bounds = array<i64: 128, 128>}, {pipeline_mode = #tpu.pipeline_mode<synchronous>, transform_indices = @transform_2, window_bounds = array<i64: 1, 128>}, {pipeline_mode = #tpu.pipeline_mode<synchronous>, transform_indices = @transform_3, window_bounds = array<i64: 200, 784>}, {transform_indices = @transform_4, window_bounds = array<i64: 200, 128>}]} {
    %c0 = arith.constant 0 : index
    %c0_0 = arith.constant 0 : index
    %0 = vector.load %arg1[%c0, %c0_0] : memref<784x128xbf16, #tpu.memory_space<vmem>>, vector<784x128xbf16>
    %c0_1 = arith.constant 0 : index
    %c0_2 = arith.constant 0 : index
    %1 = vector.load %arg2[%c0_1, %c0_2] : memref<128x128xbf16, #tpu.memory_space<vmem>>, vector<128x128xbf16>
    %cst = arith.constant dense<0.000000e+00> : vector<784x128xf32>
    %2 = tpu.matmul %0, %1, %cst {dimension_numbers = #tpu.dot_dimension_numbers<[1], [0], [0], [1], [0, 0, 1, 1], [], []>} : vector<784x128xbf16>, vector<128x128xbf16>, vector<784x128xf32> -> vector<784x128xf32>
    %c0_3 = arith.constant 0 : index
    %c0_4 = arith.constant 0 : index
    %3 = vector.load %arg3[%c0_3, %c0_4] : memref<1x128xf32, #tpu.memory_space<vmem>>, vector<1x128xf32>
    %4 = vector.broadcast %3 : vector<1x128xf32> to vector<784x128xf32>
    %5 = arith.addf %2, %4 : vector<784x128xf32>
    %6 = math.tanh %5 : vector<784x128xf32>
    %c0_5 = arith.constant 0 : index
    %c0_6 = arith.constant 0 : index
    %7 = vector.load %arg4[%c0_5, %c0_6] : memref<200x784xf32, #tpu.memory_space<vmem>>, vector<200x784xf32>
    %cst_7 = arith.constant dense<0.000000e+00> : vector<200x128xf32>
    %8 = tpu.matmul %7, %6, %cst_7 {dimension_numbers = #tpu.dot_dimension_numbers<[1], [0], [0], [1], [0, 0, 1, 1], [], []>} : vector<200x784xf32>, vector<784x128xf32>, vector<200x128xf32> -> vector<200x128xf32>
    %c0_8 = arith.constant 0 : index
    %c0_9 = arith.constant 0 : index
    %9 = vector.load %arg5[%c0_8, %c0_9] : memref<200x128xf32, #tpu.memory_space<vmem>>, vector<200x128xf32>
    tpu.vector_store %arg5[%c0_8, %c0_9], %8 {strides = array<i32>} : memref<200x128xf32, #tpu.memory_space<vmem>>, vector<200x128xf32>,
    return
  }
  func.func @transform_0(%arg0: i32) -> (i32, i32) {
    %c0_i32 = arith.constant 0 : i32
    %c0_i32_0 = arith.constant 0 : i32
    return %arg0, %c0_i32 : i32, i32
  }
  func.func @transform_1(%arg0: i32) -> (i32, i32) {
    %c0_i32 = arith.constant 0 : i32
    %c0_i32_0 = arith.constant 0 : i32
    %c0_i32_1 = arith.constant 0 : i32
    return %c0_i32, %c0_i32_0 : i32, i32
  }
  func.func @transform_2(%arg0: i32) -> (i32, i32) {
    %c0_i32 = arith.constant 0 : i32
    %c0_i32_0 = arith.constant 0 : i32
    %c0_i32_1 = arith.constant 0 : i32
    return %c0_i32, %c0_i32_0 : i32, i32
  }
  func.func @transform_3(%arg0: i32) -> (i32, i32) {
    %c0_i32 = arith.constant 0 : i32
    %c0_i32_0 = arith.constant 0 : i32
    %c0_i32_1 = arith.constant 0 : i32
    return %c0_i32, %c0_i32_0 : i32, i32
  }
  func.func @transform_4(%arg0: i32) -> (i32, i32) {
    %c0_i32 = arith.constant 0 : i32
    %c0_i32_0 = arith.constant 0 : i32
    return %arg0, %c0_i32 : i32, i32
  }
}

module attributes {stable_mosaic.version = 11 : i64} {
  func.func @_conv_gemm_pool_kernel(%arg0: i32, %arg1: memref<128x256xbf16, #tpu.memory_space<vmem>>, %arg2: memref<256x128xbf16, #tpu.memory_space<vmem>>, %arg3: memref<1x128xf32, #tpu.memory_space<vmem>>, %arg4: memref<32x128xf32, #tpu.memory_space<vmem>>, %arg5: memref<32x128xf32, #tpu.memory_space<vmem>>) attributes {dimension_semantics = [#tpu.dimension_semantics<parallel>], iteration_bounds = array<i64: 2>, scalar_prefetch = 0 : i64, scratch_operands = 0 : i64, tpu.core_type = #tpu.core_type<tc>, window_params = [{transform_indices = @transform_0, window_bounds = array<i64: 128, 256>}, {pipeline_mode = #tpu.pipeline_mode<synchronous>, transform_indices = @transform_1, window_bounds = array<i64: 256, 128>}, {pipeline_mode = #tpu.pipeline_mode<synchronous>, transform_indices = @transform_2, window_bounds = array<i64: 1, 128>}, {pipeline_mode = #tpu.pipeline_mode<synchronous>, transform_indices = @transform_3, window_bounds = array<i64: 32, 128>}, {transform_indices = @transform_4, window_bounds = array<i64: 32, 128>}]} {
    %c0 = arith.constant 0 : index
    %c0_0 = arith.constant 0 : index
    %0 = vector.load %arg1[%c0, %c0_0] : memref<128x256xbf16, #tpu.memory_space<vmem>>, vector<128x256xbf16>
    %c0_1 = arith.constant 0 : index
    %c0_2 = arith.constant 0 : index
    %1 = vector.load %arg2[%c0_1, %c0_2] : memref<256x128xbf16, #tpu.memory_space<vmem>>, vector<256x128xbf16>
    %cst = arith.constant dense<0.000000e+00> : vector<128x128xf32>
    %2 = tpu.matmul %0, %1, %cst {dimension_numbers = #tpu.dot_dimension_numbers<[1], [0], [0], [1], [0, 0, 1, 1], [], []>} : vector<128x256xbf16>, vector<256x128xbf16>, vector<128x128xf32> -> vector<128x128xf32>
    %c0_3 = arith.constant 0 : index
    %c0_4 = arith.constant 0 : index
    %3 = vector.load %arg3[%c0_3, %c0_4] : memref<1x128xf32, #tpu.memory_space<vmem>>, vector<1x128xf32>
    %4 = vector.broadcast %3 : vector<1x128xf32> to vector<128x128xf32>
    %5 = arith.addf %2, %4 : vector<128x128xf32>
    %6 = math.tanh %5 : vector<128x128xf32>
    %c0_5 = arith.constant 0 : index
    %c0_6 = arith.constant 0 : index
    %7 = vector.load %arg4[%c0_5, %c0_6] : memref<32x128xf32, #tpu.memory_space<vmem>>, vector<32x128xf32>
    %cst_7 = arith.constant dense<0.000000e+00> : vector<32x128xf32>
    %8 = tpu.matmul %7, %6, %cst_7 {dimension_numbers = #tpu.dot_dimension_numbers<[1], [0], [0], [1], [0, 0, 1, 1], [], []>} : vector<32x128xf32>, vector<128x128xf32>, vector<32x128xf32> -> vector<32x128xf32>
    %c0_8 = arith.constant 0 : index
    %c0_9 = arith.constant 0 : index
    %9 = vector.load %arg5[%c0_8, %c0_9] : memref<32x128xf32, #tpu.memory_space<vmem>>, vector<32x128xf32>
    tpu.vector_store %arg5[%c0_8, %c0_9], %8 {strides = array<i32>} : memref<32x128xf32, #tpu.memory_space<vmem>>, vector<32x128xf32>,
    return
  }
  func.func @transform_0(%arg0: i32) -> (i32, i32) {
    %c0_i32 = arith.constant 0 : i32
    %c0_i32_0 = arith.constant 0 : i32
    return %arg0, %c0_i32 : i32, i32
  }
  func.func @transform_1(%arg0: i32) -> (i32, i32) {
    %c0_i32 = arith.constant 0 : i32
    %c0_i32_0 = arith.constant 0 : i32
    %c0_i32_1 = arith.constant 0 : i32
    return %c0_i32, %c0_i32_0 : i32, i32
  }
  func.func @transform_2(%arg0: i32) -> (i32, i32) {
    %c0_i32 = arith.constant 0 : i32
    %c0_i32_0 = arith.constant 0 : i32
    %c0_i32_1 = arith.constant 0 : i32
    return %c0_i32, %c0_i32_0 : i32, i32
  }
  func.func @transform_3(%arg0: i32) -> (i32, i32) {
    %c0_i32 = arith.constant 0 : i32
    %c0_i32_0 = arith.constant 0 : i32
    %c0_i32_1 = arith.constant 0 : i32
    return %c0_i32, %c0_i32_0 : i32, i32
  }
  func.func @transform_4(%arg0: i32) -> (i32, i32) {
    %c0_i32 = arith.constant 0 : i32
    %c0_i32_0 = arith.constant 0 : i32
    return %arg0, %c0_i32 : i32, i32
  }
}

module attributes {stable_mosaic.version = 11 : i64} {
  func.func @_head_kernel(%arg0: i32, %arg1: memref<8x512xbf16, #tpu.memory_space<vmem>>, %arg2: memref<512x128xbf16, #tpu.memory_space<vmem>>, %arg3: memref<1x128xf32, #tpu.memory_space<vmem>>, %arg4: memref<128x128xbf16, #tpu.memory_space<vmem>>, %arg5: memref<1x128xf32, #tpu.memory_space<vmem>>, %arg6: memref<128x128xbf16, #tpu.memory_space<vmem>>, %arg7: memref<1x128xf32, #tpu.memory_space<vmem>>, %arg8: memref<8x128xf32, #tpu.memory_space<vmem>>) attributes {dimension_semantics = [#tpu.dimension_semantics<parallel>], iteration_bounds = array<i64: 1>, scalar_prefetch = 0 : i64, scratch_operands = 0 : i64, tpu.core_type = #tpu.core_type<tc>, window_params = [{transform_indices = @transform_0, window_bounds = array<i64: 8, 512>}, {pipeline_mode = #tpu.pipeline_mode<synchronous>, transform_indices = @transform_1, window_bounds = array<i64: 512, 128>}, {pipeline_mode = #tpu.pipeline_mode<synchronous>, transform_indices = @transform_2, window_bounds = array<i64: 1, 128>}, {pipeline_mode = #tpu.pipeline_mode<synchronous>, transform_indices = @transform_3, window_bounds = array<i64: 128, 128>}, {pipeline_mode = #tpu.pipeline_mode<synchronous>, transform_indices = @transform_4, window_bounds = array<i64: 1, 128>}, {pipeline_mode = #tpu.pipeline_mode<synchronous>, transform_indices = @transform_5, window_bounds = array<i64: 128, 128>}, {pipeline_mode = #tpu.pipeline_mode<synchronous>, transform_indices = @transform_6, window_bounds = array<i64: 1, 128>}, {transform_indices = @transform_7, window_bounds = array<i64: 8, 128>}]} {
    %c0 = arith.constant 0 : index
    %c0_0 = arith.constant 0 : index
    %0 = vector.load %arg1[%c0, %c0_0] : memref<8x512xbf16, #tpu.memory_space<vmem>>, vector<8x512xbf16>
    %c0_1 = arith.constant 0 : index
    %c0_2 = arith.constant 0 : index
    %1 = vector.load %arg2[%c0_1, %c0_2] : memref<512x128xbf16, #tpu.memory_space<vmem>>, vector<512x128xbf16>
    %cst = arith.constant dense<0.000000e+00> : vector<8x128xf32>
    %2 = tpu.matmul %0, %1, %cst {dimension_numbers = #tpu.dot_dimension_numbers<[1], [0], [0], [1], [0, 0, 1, 1], [], []>} : vector<8x512xbf16>, vector<512x128xbf16>, vector<8x128xf32> -> vector<8x128xf32>
    %c0_3 = arith.constant 0 : index
    %c0_4 = arith.constant 0 : index
    %3 = vector.load %arg3[%c0_3, %c0_4] : memref<1x128xf32, #tpu.memory_space<vmem>>, vector<1x128xf32>
    %4 = vector.broadcast %3 : vector<1x128xf32> to vector<8x128xf32>
    %5 = arith.addf %2, %4 : vector<8x128xf32>
    %6 = math.tanh %5 : vector<8x128xf32>
    %7 = arith.truncf %6 : vector<8x128xf32> to vector<8x128xbf16>
    %c0_5 = arith.constant 0 : index
    %c0_6 = arith.constant 0 : index
    %8 = vector.load %arg4[%c0_5, %c0_6] : memref<128x128xbf16, #tpu.memory_space<vmem>>, vector<128x128xbf16>
    %cst_7 = arith.constant dense<0.000000e+00> : vector<8x128xf32>
    %9 = tpu.matmul %7, %8, %cst_7 {dimension_numbers = #tpu.dot_dimension_numbers<[1], [0], [0], [1], [0, 0, 1, 1], [], []>} : vector<8x128xbf16>, vector<128x128xbf16>, vector<8x128xf32> -> vector<8x128xf32>
    %c0_8 = arith.constant 0 : index
    %c0_9 = arith.constant 0 : index
    %10 = vector.load %arg5[%c0_8, %c0_9] : memref<1x128xf32, #tpu.memory_space<vmem>>, vector<1x128xf32>
    %11 = vector.broadcast %10 : vector<1x128xf32> to vector<8x128xf32>
    %12 = arith.addf %9, %11 : vector<8x128xf32>
    %13 = math.tanh %12 : vector<8x128xf32>
    %14 = arith.truncf %13 : vector<8x128xf32> to vector<8x128xbf16>
    %c0_10 = arith.constant 0 : index
    %c0_11 = arith.constant 0 : index
    %15 = vector.load %arg6[%c0_10, %c0_11] : memref<128x128xbf16, #tpu.memory_space<vmem>>, vector<128x128xbf16>
    %cst_12 = arith.constant dense<0.000000e+00> : vector<8x128xf32>
    %16 = tpu.matmul %14, %15, %cst_12 {dimension_numbers = #tpu.dot_dimension_numbers<[1], [0], [0], [1], [0, 0, 1, 1], [], []>} : vector<8x128xbf16>, vector<128x128xbf16>, vector<8x128xf32> -> vector<8x128xf32>
    %c0_13 = arith.constant 0 : index
    %c0_14 = arith.constant 0 : index
    %17 = vector.load %arg7[%c0_13, %c0_14] : memref<1x128xf32, #tpu.memory_space<vmem>>, vector<1x128xf32>
    %18 = vector.broadcast %17 : vector<1x128xf32> to vector<8x128xf32>
    %19 = arith.addf %16, %18 : vector<8x128xf32>
    %c0_15 = arith.constant 0 : index
    %c0_16 = arith.constant 0 : index
    %20 = vector.load %arg8[%c0_15, %c0_16] : memref<8x128xf32, #tpu.memory_space<vmem>>, vector<8x128xf32>
    tpu.vector_store %arg8[%c0_15, %c0_16], %19 {strides = array<i32>} : memref<8x128xf32, #tpu.memory_space<vmem>>, vector<8x128xf32>,
    return
  }
  func.func @transform_0(%arg0: i32) -> (i32, i32) {
    %c0_i32 = arith.constant 0 : i32
    %c0_i32_0 = arith.constant 0 : i32
    return %arg0, %c0_i32 : i32, i32
  }
  func.func @transform_1(%arg0: i32) -> (i32, i32) {
    %c0_i32 = arith.constant 0 : i32
    %c0_i32_0 = arith.constant 0 : i32
    %c0_i32_1 = arith.constant 0 : i32
    return %c0_i32, %c0_i32_0 : i32, i32
  }
  func.func @transform_2(%arg0: i32) -> (i32, i32) {
    %c0_i32 = arith.constant 0 : i32
    %c0_i32_0 = arith.constant 0 : i32
    %c0_i32_1 = arith.constant 0 : i32
    return %c0_i32, %c0_i32_0 : i32, i32
  }
  func.func @transform_3(%arg0: i32) -> (i32, i32) {
    %c0_i32 = arith.constant 0 : i32
    %c0_i32_0 = arith.constant 0 : i32
    %c0_i32_1 = arith.constant 0 : i32
    return %c0_i32, %c0_i32_0 : i32, i32
  }
  func.func @transform_4(%arg0: i32) -> (i32, i32) {
    %c0_i32 = arith.constant 0 : i32
    %c0_i32_0 = arith.constant 0 : i32
    %c0_i32_1 = arith.constant 0 : i32
    return %c0_i32, %c0_i32_0 : i32, i32
  }
  func.func @transform_5(%arg0: i32) -> (i32, i32) {
    %c0_i32 = arith.constant 0 : i32
    %c0_i32_0 = arith.constant 0 : i32
    %c0_i32_1 = arith.constant 0 : i32
    return %c0_i32, %c0_i32_0 : i32, i32
  }
  func.func @transform_6(%arg0: i32) -> (i32, i32) {
    %c0_i32 = arith.constant 0 : i32
    %c0_i32_0 = arith.constant 0 : i32
    %c0_i32_1 = arith.constant 0 : i32
    return %c0_i32, %c0_i32_0 : i32, i32
  }
  func.func @transform_7(%arg0: i32) -> (i32, i32) {
    %c0_i32 = arith.constant 0 : i32
    %c0_i32_0 = arith.constant 0 : i32
    return %arg0, %c0_i32 : i32, i32
  }
}

</mosaic_0001>

<llo_original>
// kernel: lenet5_forward.3
$region0: #{lenet5_forward.3}
  #allocation0 [shape = 'u32[]', space=smem, size = 0x4, offset = 0x4, fixed_abs, tag = 'smem constant byte address 0x4 - core index']
  #allocation1 [shape = 'u32[144,128]{1,0:T(1,128)}', space=vmem, size = 0x12000, scoped, tag = 'internal scratch']
  %s0 = inlined_call_operand.vmem [shape: bf16[1568,128], index: 0, kind: input, shape index: {}]
  %s1 = inlined_call_operand.vmem [shape: bf16[128,128], index: 1, kind: input, shape index: {}]
  %s2 = inlined_call_operand.vmem [shape: f32[1,128], index: 2, kind: input, shape index: {}]
  %s3 = inlined_call_operand.vmem [shape: f32[200,784], index: 3, kind: input, shape index: {}]
  %s4 = inlined_call_operand.vmem [shape: f32[400,128], index: 4, kind: output, shape index: {}]
  %s5 = sld [smem:[#allocation0]]
  $region49: #{lenet5_forward.3} parent=0
    _
  %s7 = ssub.s32 1, %s5
  %s8 = scalar_select 0, %s7, %s5
  loop: start=0, step=1, limit=4
  $region2: #{lenet5_forward.3} parent=0 // loop_pre_header
    _
  $region3: #{lenet5_forward.3} parent=0 // loop_header
    %s10 = sphi 0, %s14
    %p11 = scmp.ge.s32.totalorder %s10, 4
    %s20 = sphi 0, %s22
    %s23 = sphi 0, %s20
    %s24 = sphi 0, %s23
    %s40 = sphi 0, %s24
    %s44 = sphi 0, %s44
    %s46 = sphi 0, %s44
    %s47 = sphi 0, %s46
    %s61 = sphi 0, %s47
    %s65 = sphi 0, %s65
    %s67 = sphi 0, %s65
    %s68 = sphi 0, %s67
    %s82 = sphi 0, %s68
    %s86 = sphi 0, %s86
    %s88 = sphi 0, %s86
    %s89 = sphi 0, %s88
    %s103 = sphi 0, %s89
    %s109 = sphi 0, %s111
    %s112 = sphi 0, %s109
    %s113 = sphi 0, %s112
    %s129 = sphi 0, %s113
  $region4: #{lenet5_forward.3} parent=0 // loop_header_branch
    %13 = sbr.rel (%p11) target = $region8
  $region5: #{lenet5_forward.3} parent=0 // loop_body
    %s15 = ssub.s32 %s10, 1
    %s16 = ssub.s32 %s10, 2
    %s17 = sadd.s32 %s10, 1
    %s18 = ssub.s32 %s10, %s17
    %p19 = scmp.eq.s32.totalorder %s18, 0
    %s21 = sadd.s32 %s20, 1
    %s22 = scalar_select %p19, %s20, %s21
    %p25 = pneg %p19
    %p26 = scmp.eq.s32.totalorder %s10, 1
    %p27 = por %p25, %p26
    %p28 = scmp.ne.s32.totalorder %s20, %s23
    %p29 = scmp.eq.s32.totalorder %s10, 0
    %p30 = por %p28, %p29
    %p31 = scmp.ne.s32.totalorder %s20, %s23
    %p32 = scmp.eq.s32.totalorder %s15, 1
    %p33 = por %p31, %p32
    %p34 = scmp.ne.s32.totalorder %s23, %s24
    %p35 = scmp.eq.s32.totalorder %s15, 0
    %p36 = por %p34, %p35
    %p37 = scmp.ne.s32.totalorder %s23, %s24
    %p38 = scmp.eq.s32.totalorder %s16, 1
    %p39 = por %p37, %p38
    %p41 = scmp.ne.s32.totalorder %s24, %s40
    %p42 = scmp.eq.s32.totalorder %s16, 0
    %p43 = por %p41, %p42
    %s45 = sadd.s32 %s44, 1
    %p48 = scmp.eq.s32.totalorder %s10, 1
    %p49 = scmp.ne.s32.totalorder %s44, %s46
    %p50 = scmp.eq.s32.totalorder %s10, 0
    %p51 = por %p49, %p50
    %p52 = scmp.ne.s32.totalorder %s44, %s46
    %p53 = scmp.eq.s32.totalorder %s15, 1
    %p54 = por %p52, %p53
    %p55 = scmp.ne.s32.totalorder %s46, %s47
    %p56 = scmp.eq.s32.totalorder %s15, 0
    %p57 = por %p55, %p56
    %p58 = scmp.ne.s32.totalorder %s46, %s47
    %p59 = scmp.eq.s32.totalorder %s16, 1
    %p60 = por %p58, %p59
    %p62 = scmp.ne.s32.totalorder %s47, %s61
    %p63 = scmp.eq.s32.totalorder %s16, 0
    %p64 = por %p62, %p63
    %s66 = sadd.s32 %s65, 1
    %p69 = scmp.eq.s32.totalorder %s10, 1
    %p70 = scmp.ne.s32.totalorder %s65, %s67
    %p71 = scmp.eq.s32.totalorder %s10, 0
    %p72 = por %p70, %p71
    %p73 = scmp.ne.s32.totalorder %s65, %s67
    %p74 = scmp.eq.s32.totalorder %s15, 1
    %p75 = por %p73, %p74
    %p76 = scmp.ne.s32.totalorder %s67, %s68
    %p77 = scmp.eq.s32.totalorder %s15, 0
    %p78 = por %p76, %p77
    %p79 = scmp.ne.s32.totalorder %s67, %s68
    %p80 = scmp.eq.s32.totalorder %s16, 1
    %p81 = por %p79, %p80
    %p83 = scmp.ne.s32.totalorder %s68, %s82
    %p84 = scmp.eq.s32.totalorder %s16, 0
    %p85 = por %p83, %p84
    %s87 = sadd.s32 %s86, 1
    %p90 = scmp.eq.s32.totalorder %s10, 1
    %p91 = scmp.ne.s32.totalorder %s86, %s88
    %p92 = scmp.eq.s32.totalorder %s10, 0
    %p93 = por %p91, %p92
    %p94 = scmp.ne.s32.totalorder %s86, %s88
    %p95 = scmp.eq.s32.totalorder %s15, 1
    %p96 = por %p94, %p95
    %p97 = scmp.ne.s32.totalorder %s88, %s89
    %p98 = scmp.eq.s32.totalorder %s15, 0
    %p99 = por %p97, %p98
    %p100 = scmp.ne.s32.totalorder %s88, %s89
    %p101 = scmp.eq.s32.totalorder %s16, 1
    %p102 = por %p100, %p101
    %p104 = scmp.ne.s32.totalorder %s89, %s103
    %p105 = scmp.eq.s32.totalorder %s16, 0
    %p106 = por %p104, %p105
    %s107 = ssub.s32 %s10, %s17
    %p108 = scmp.eq.s32.totalorder %s107, 0
    %s110 = sadd.s32 %s109, 1
    %s111 = scalar_select %p108, %s109, %s110
    %p114 = pneg %p108
    %p115 = scmp.eq.s32.totalorder %s10, 1
    %p116 = por %p114, %p115
    %p117 = scmp.ne.s32.totalorder %s109, %s112
    %p118 = scmp.eq.s32.totalorder %s10, 0
    %p119 = por %p117, %p118
    %p120 = scmp.ne.s32.totalorder %s109, %s112
    %p121 = scmp.eq.s32.totalorder %s15, 1
    %p122 = por %p120, %p121
    %p123 = scmp.ne.s32.totalorder %s112, %s113
    %p124 = scmp.eq.s32.totalorder %s15, 0
    %p125 = por %p123, %p124
    %p126 = scmp.ne.s32.totalorder %s112, %s113
    %p127 = scmp.eq.s32.totalorder %s16, 1
    %p128 = por %p126, %p127
    %p130 = scmp.ne.s32.totalorder %s113, %s129
    %p131 = scmp.eq.s32.totalorder %s16, 0
    %p132 = por %p130, %p131
    %p133 = scmp.le.s32.totalorder 1, %s10
    %p134 = scmp.lt.s32.totalorder %s10, 3
    %p135 = pnand %p133, %p134
    %p136 = pneg %p135
    // Predicated region
    $region9: #{lenet5_forward.3} parent=5 // pred_check
      _
    $region10: #{lenet5_forward.3} parent=5 // pred_check_branch
      %138 = sbr.rel (%p135) target = $region12
    $region11: #{lenet5_forward.3} parent=5 // pred_region
      %s139 = ssub.s32 %s10, 1
      // Predicated region
      $region13: #{lenet5_forward.3} parent=11 // pred_check
        %p140 = pneg %p57
      $region14: #{lenet5_forward.3} parent=11 // pred_check_branch
        %142 = sbr.rel (%p140) target = $region16
      $region15: #{lenet5_forward.3} parent=11 // pred_region
        _
      $region16: #{lenet5_forward.3} parent=11 // pred_fallthru
        _
      // Predicated region
      $region17: #{lenet5_forward.3} parent=11 // pred_check
        %p143 = pneg %p78
      $region18: #{lenet5_forward.3} parent=11 // pred_check_branch
        %145 = sbr.rel (%p143) target = $region20
      $region19: #{lenet5_forward.3} parent=11 // pred_region
        _
      $region20: #{lenet5_forward.3} parent=11 // pred_fallthru
        _
      // Predicated region
      $region21: #{lenet5_forward.3} parent=11 // pred_check
        %p146 = pneg %p99
      $region22: #{lenet5_forward.3} parent=11 // pred_check_branch
        %148 = sbr.rel (%p146) target = $region24
      $region23: #{lenet5_forward.3} parent=11 // pred_region
        _
      $region24: #{lenet5_forward.3} parent=11 // pred_fallthru
        _
    $region12: #{lenet5_forward.3} parent=5 // pred_fallthru
      _
    %p149 = scmp.lt.s32.totalorder %s10, 2
    // Predicated region
    $region25: #{lenet5_forward.3} parent=5 // pred_check
      %p150 = pneg %p149
    $region26: #{lenet5_forward.3} parent=5 // pred_check_branch
      %152 = sbr.rel (%p150) target = $region28
    $region27: #{lenet5_forward.3} parent=5 // pred_region
      // Predicated region
      $region29: #{lenet5_forward.3} parent=27 // pred_check
        %p153 = pneg %p30
      $region30: #{lenet5_forward.3} parent=27 // pred_check_branch
        %155 = sbr.rel (%p153) target = $region32
      $region31: #{lenet5_forward.3} parent=27 // pred_region
        %s156 = smul.u32 98, %s10
        %p157 = scmp.lt.s32.totalorder %s156, 195
        %s158 = scalar_select %p157, %s156, 195
        %s159 = smul.addr %s158, 4
        %s160 = scalar_lea.vmem %s0, %s159
        %s161 = smul.u32 98, %s10
      $region32: #{lenet5_forward.3} parent=27 // pred_fallthru
        _
    $region28: #{lenet5_forward.3} parent=5 // pred_fallthru
      _
    %p162 = scmp.le.s32.totalorder 1, %s10
    %p163 = scmp.lt.s32.totalorder %s10, 3
    %p164 = pnand %p162, %p163
    %p165 = pneg %p164
    // Predicated region
    $region33: #{lenet5_forward.3} parent=5 // pred_check
      _
    $region34: #{lenet5_forward.3} parent=5 // pred_check_branch
      %167 = sbr.rel (%p164) target = $region36
    $region35: #{lenet5_forward.3} parent=5 // pred_region
      %s168 = ssub.s32 %s10, 1
      %s169 = smul.u32 98, %s15
      %p170 = scmp.lt.s32.totalorder %s169, 195
      %s171 = scalar_select %p170, %s169, 195
      %s172 = smul.addr %s171, 4
      %s173 = scalar_lea.vmem %s0, %s172
      %p174 = pneg %p36
      %p175 = pneg %p33
      %p176 = pneg %p57
      %p177 = pneg %p54
      %p178 = pneg %p78
      %p179 = pneg %p75
      %p180 = pneg %p99
      %p181 = pneg %p96
      %p182 = pneg %p125
      %p183 = pneg %p122
      %s184 = smul.u32 25, %s15
      %p185 = scmp.lt.s32.totalorder %s184, 49
      %s186 = scalar_select %p185, %s184, 49
      %s187 = smul.addr %s186, 8
      %s188 = scalar_lea.vmem %s4, %s187
      %s189 = smul.u32 98, %s15
      %p190 = scmp.lt.s32.totalorder %s189, 195
      %s191 = scalar_select %p190, %s189, 195
      %s192 = smul.addr %s191, 4
      %s193 = scalar_lea.vmem %s0, %s192
      %s194 = smul.u32 98, %s15
      %s195 = smul.u32 25, %s15
      %p196 = scmp.lt.s32.totalorder %s195, 49
      %s197 = scalar_select %p196, %s195, 49
      %s198 = smul.addr %s197, 8
      %s199 = scalar_lea.vmem %s4, %s198
      %s200 = smul.u32 25, %s15
      %v202 = vld [vmem:[%s193] sm:$0xf]
      %v203 = vld [vmem:[%s193 + $0x4] sm:$0xf]
      %v204 = vld [vmem:[%s193 + $0x8] sm:$0xf]
      %v205 = vld [vmem:[%s193 + $0xc] sm:$0xf]
      %v206 = vld [vmem:[%s193 + $0x10] sm:$0xf]
      %v207 = vld [vmem:[%s193 + $0x14] sm:$0xf]
      %v208 = vld [vmem:[%s193 + $0x18] sm:$0xf]
      %v209 = vld [vmem:[%s193 + $0x1c] sm:$0xf]
      %v210 = vld [vmem:[%s193 + $0x20] sm:$0xf]
      %v211 = vld [vmem:[%s193 + $0x24] sm:$0xf]
      %v212 = vld [vmem:[%s193 + $0x28] sm:$0xf]
      %v213 = vld [vmem:[%s193 + $0x2c] sm:$0xf]
      %v214 = vld [vmem:[%s193 + $0x30] sm:$0xf]
      %v215 = vld [vmem:[%s193 + $0x34] sm:$0xf]
      %v216 = vld [vmem:[%s193 + $0x38] sm:$0xf]
      %v217 = vld [vmem:[%s193 + $0x3c] sm:$0xf]
      %v218 = vld [vmem:[%s193 + $0x40] sm:$0xf]
      %v219 = vld [vmem:[%s193 + $0x44] sm:$0xf]
      %v220 = vld [vmem:[%s193 + $0x48] sm:$0xf]
      %v221 = vld [vmem:[%s193 + $0x4c] sm:$0xf]
      %v222 = vld [vmem:[%s193 + $0x50] sm:$0xf]
      %v223 = vld [vmem:[%s193 + $0x54] sm:$0xf]
      %v224 = vld [vmem:[%s193 + $0x58] sm:$0xf]
      %v225 = vld [vmem:[%s193 + $0x5c] sm:$0xf]
      %v226 = vld [vmem:[%s193 + $0x60] sm:$0xf]
      %v227 = vld [vmem:[%s193 + $0x64] sm:$0xf]
      %v228 = vld [vmem:[%s193 + $0x68] sm:$0xf]
      %v229 = vld [vmem:[%s193 + $0x6c] sm:$0xf]
      %v230 = vld [vmem:[%s193 + $0x70] sm:$0xf]
      %v231 = vld [vmem:[%s193 + $0x74] sm:$0xf]
      %v232 = vld [vmem:[%s193 + $0x78] sm:$0xf]
      %v233 = vld [vmem:[%s193 + $0x7c] sm:$0xf]
      %v234 = vld [vmem:[%s193 + $0x80] sm:$0xf]
      %v235 = vld [vmem:[%s193 + $0x84] sm:$0xf]
      %v236 = vld [vmem:[%s193 + $0x88] sm:$0xf]
      %v237 = vld [vmem:[%s193 + $0x8c] sm:$0xf]
      %v238 = vld [vmem:[%s193 + $0x90] sm:$0xf]
      %v239 = vld [vmem:[%s193 + $0x94] sm:$0xf]
      %v240 = vld [vmem:[%s193 + $0x98] sm:$0xf]
      %v241 = vld [vmem:[%s193 + $0x9c] sm:$0xf]
      %v242 = vld [vmem:[%s193 + $0xa0] sm:$0xf]
      %v243 = vld [vmem:[%s193 + $0xa4] sm:$0xf]
      %v244 = vld [vmem:[%s193 + $0xa8] sm:$0xf]
      %v245 = vld [vmem:[%s193 + $0xac] sm:$0xf]
      %v246 = vld [vmem:[%s193 + $0xb0] sm:$0xf]
      %v247 = vld [vmem:[%s193 + $0xb4] sm:$0xf]
      %v248 = vld [vmem:[%s193 + $0xb8] sm:$0xf]
      %v249 = vld [vmem:[%s193 + $0xbc] sm:$0xf]
      %v250 = vld [vmem:[%s193 + $0xc0] sm:$0xf]
      %v251 = vld [vmem:[%s193 + $0xc4] sm:$0xf]
      %v252 = vld [vmem:[%s193 + $0xc8] sm:$0xf]
      %v253 = vld [vmem:[%s193 + $0xcc] sm:$0xf]
      %v254 = vld [vmem:[%s193 + $0xd0] sm:$0xf]
      %v255 = vld [vmem:[%s193 + $0xd4] sm:$0xf]
      %v256 = vld [vmem:[%s193 + $0xd8] sm:$0xf]
      %v257 = vld [vmem:[%s193 + $0xdc] sm:$0xf]
      %v258 = vld [vmem:[%s193 + $0xe0] sm:$0xf]
      %v259 = vld [vmem:[%s193 + $0xe4] sm:$0xf]
      %v260 = vld [vmem:[%s193 + $0xe8] sm:$0xf]
      %v261 = vld [vmem:[%s193 + $0xec] sm:$0xf]
      %v262 = vld [vmem:[%s193 + $0xf0] sm:$0xf]
      %v263 = vld [vmem:[%s193 + $0xf4] sm:$0xf]
      %v264 = vld [vmem:[%s193 + $0xf8] sm:$0xf]
      %v265 = vld [vmem:[%s193 + $0xfc] sm:$0xf]
      %v266 = vld [vmem:[%s193 + $0x100] sm:$0xf]
      %v267 = vld [vmem:[%s193 + $0x104] sm:$0xf]
      %v268 = vld [vmem:[%s193 + $0x108] sm:$0xf]
      %v269 = vld [vmem:[%s193 + $0x10c] sm:$0xf]
      %v270 = vld [vmem:[%s193 + $0x110] sm:$0xf]
      %v271 = vld [vmem:[%s193 + $0x114] sm:$0xf]
      %v272 = vld [vmem:[%s193 + $0x118] sm:$0xf]
      %v273 = vld [vmem:[%s193 + $0x11c] sm:$0xf]
      %v274 = vld [vmem:[%s193 + $0x120] sm:$0xf]
      %v275 = vld [vmem:[%s193 + $0x124] sm:$0xf]
      %v276 = vld [vmem:[%s193 + $0x128] sm:$0xf]
      %v277 = vld [vmem:[%s193 + $0x12c] sm:$0xf]
      %v278 = vld [vmem:[%s193 + $0x130] sm:$0xf]
      %v279 = vld [vmem:[%s193 + $0x134] sm:$0xf]
      %v280 = vld [vmem:[%s193 + $0x138] sm:$0xf]
      %v281 = vld [vmem:[%s193 + $0x13c] sm:$0xf]
      %v282 = vld [vmem:[%s193 + $0x140] sm:$0xf]
      %v283 = vld [vmem:[%s193 + $0x144] sm:$0xf]
      %v284 = vld [vmem:[%s193 + $0x148] sm:$0xf]
      %v285 = vld [vmem:[%s193 + $0x14c] sm:$0xf]
      %v286 = vld [vmem:[%s193 + $0x150] sm:$0xf]
      %v287 = vld [vmem:[%s193 + $0x154] sm:$0xf]
      %v288 = vld [vmem:[%s193 + $0x158] sm:$0xf]
      %v289 = vld [vmem:[%s193 + $0x15c] sm:$0xf]
      %v290 = vld [vmem:[%s193 + $0x160] sm:$0xf]
      %v291 = vld [vmem:[%s193 + $0x164] sm:$0xf]
      %v292 = vld [vmem:[%s193 + $0x168] sm:$0xf]
      %v293 = vld [vmem:[%s193 + $0x16c] sm:$0xf]
      %v294 = vld [vmem:[%s193 + $0x170] sm:$0xf]
      %v295 = vld [vmem:[%s193 + $0x174] sm:$0xf]
      %v296 = vld [vmem:[%s193 + $0x178] sm:$0xf]
      %v297 = vld [vmem:[%s193 + $0x17c] sm:$0xf]
      %v298 = vld [vmem:[%s193 + $0x180] sm:$0xf]
      %v299 = vld [vmem:[%s193 + $0x184] sm:$0xf]
      %v300 = vld [vmem:[%s1] sm:$0xf]
      %v301 = vld [vmem:[%s1 + $0x4] sm:$0xf]
      %v302 = vld [vmem:[%s1 + $0x8] sm:$0xf]
      %v303 = vld [vmem:[%s1 + $0xc] sm:$0xf]
      %v304 = vld [vmem:[%s1 + $0x10] sm:$0xf]
      %v305 = vld [vmem:[%s1 + $0x14] sm:$0xf]
      %v306 = vld [vmem:[%s1 + $0x18] sm:$0xf]
      %v307 = vld [vmem:[%s1 + $0x1c] sm:$0xf]
      %v308 = vld [vmem:[%s1 + $0x20] sm:$0xf]
      %v309 = vld [vmem:[%s1 + $0x24] sm:$0xf]
      %v310 = vld [vmem:[%s1 + $0x28] sm:$0xf]
      %v311 = vld [vmem:[%s1 + $0x2c] sm:$0xf]
      %v312 = vld [vmem:[%s1 + $0x30] sm:$0xf]
      %v313 = vld [vmem:[%s1 + $0x34] sm:$0xf]
      %v314 = vld [vmem:[%s1 + $0x38] sm:$0xf]
      %v315 = vld [vmem:[%s1 + $0x3c] sm:$0xf]
      %v316 = vld [vmem:[%s2] sm:$0x1]
      %v318 = vlaneseq
      %v319 = vshrl.u32 %v318, 7
      %v320 = vsub.s32 0, %v319
      %v321 = vrot.slane %v316, %v320
      %v421 = vunpack.c.l.b16 %v202
      %v422 = vunpack.c.l.b16 %v203
      %v423 = vunpack.c.l.b16 %v204
      %v424 = vunpack.c.l.b16 %v205
      %v425 = vunpack.c.l.b16 %v206
      %v426 = vunpack.c.l.b16 %v207
      %v427 = vunpack.c.l.b16 %v208
      %v428 = vunpack.c.l.b16 %v209
      %v429 = vunpack.c.l.b16 %v210
      %v430 = vunpack.c.l.b16 %v211
      %v431 = vunpack.c.l.b16 %v212
      %v432 = vunpack.c.l.b16 %v213
      %v433 = vunpack.c.l.b16 %v214
      %v434 = vunpack.c.l.b16 %v215
      %v435 = vunpack.c.l.b16 %v216
      %v436 = vunpack.c.l.b16 %v217
      %v437 = vunpack.c.l.b16 %v218
      %v438 = vunpack.c.l.b16 %v219
      %v439 = vunpack.c.l.b16 %v220
      %v440 = vunpack.c.l.b16 %v221
      %v441 = vunpack.c.l.b16 %v222
      %v442 = vunpack.c.l.b16 %v223
      %v443 = vunpack.c.l.b16 %v224
      %v444 = vunpack.c.l.b16 %v225
      %v445 = vunpack.c.l.b16 %v226
      %v446 = vunpack.c.l.b16 %v227
      %v447 = vunpack.c.l.b16 %v228
      %v448 = vunpack.c.l.b16 %v229
      %v449 = vunpack.c.l.b16 %v230
      %v450 = vunpack.c.l.b16 %v231
      %v451 = vunpack.c.l.b16 %v232
      %v452 = vunpack.c.l.b16 %v233
      %v453 = vunpack.c.l.b16 %v234
      %v454 = vunpack.c.l.b16 %v235
      %v455 = vunpack.c.l.b16 %v236
      %v456 = vunpack.c.l.b16 %v237
      %v457 = vunpack.c.l.b16 %v238
      %v458 = vunpack.c.l.b16 %v239
      %v459 = vunpack.c.l.b16 %v240
      %v460 = vunpack.c.l.b16 %v241
      %v461 = vunpack.c.l.b16 %v242
      %v462 = vunpack.c.l.b16 %v243
      %v463 = vunpack.c.l.b16 %v244
      %v464 = vunpack.c.l.b16 %v245
      %v465 = vunpack.c.l.b16 %v246
      %v466 = vunpack.c.l.b16 %v247
      %v467 = vunpack.c.l.b16 %v248
      %v468 = vunpack.c.l.b16 %v249
      %v469 = vunpack.c.l.b16 %v250
      %v470 = vunpack.c.l.b16 %v251
      %v471 = vunpack.c.l.b16 %v252
      %v472 = vunpack.c.l.b16 %v253
      %v473 = vunpack.c.l.b16 %v254
      %v474 = vunpack.c.l.b16 %v255
      %v475 = vunpack.c.l.b16 %v256
      %v476 = vunpack.c.l.b16 %v257
      %v477 = vunpack.c.l.b16 %v258
      %v478 = vunpack.c.l.b16 %v259
      %v479 = vunpack.c.l.b16 %v260
      %v480 = vunpack.c.l.b16 %v261
      %v481 = vunpack.c.l.b16 %v262
      %v482 = vunpack.c.l.b16 %v263
      %v483 = vunpack.c.l.b16 %v264
      %v484 = vunpack.c.l.b16 %v265
      %v485 = vunpack.c.l.b16 %v266
      %v486 = vunpack.c.l.b16 %v267
      %v487 = vunpack.c.l.b16 %v268
      %v488 = vunpack.c.l.b16 %v269
      %v489 = vunpack.c.l.b16 %v270
      %v490 = vunpack.c.l.b16 %v271
      %v491 = vunpack.c.l.b16 %v272
      %v492 = vunpack.c.l.b16 %v273
      %v493 = vunpack.c.l.b16 %v274
      %v494 = vunpack.c.l.b16 %v275
      %v495 = vunpack.c.l.b16 %v276
      %v496 = vunpack.c.l.b16 %v277
      %v497 = vunpack.c.l.b16 %v278
      %v498 = vunpack.c.l.b16 %v279
      %v499 = vunpack.c.l.b16 %v280
      %v500 = vunpack.c.l.b16 %v281
      %v501 = vunpack.c.l.b16 %v282
      %v502 = vunpack.c.l.b16 %v283
      %v503 = vunpack.c.l.b16 %v284
      %v504 = vunpack.c.l.b16 %v285
      %v505 = vunpack.c.l.b16 %v286
      %v506 = vunpack.c.l.b16 %v287
      %v507 = vunpack.c.l.b16 %v288
      %v508 = vunpack.c.l.b16 %v289
      %v509 = vunpack.c.l.b16 %v290
      %v510 = vunpack.c.l.b16 %v291
      %v511 = vunpack.c.l.b16 %v292
      %v512 = vunpack.c.l.b16 %v293
      %v513 = vunpack.c.l.b16 %v294
      %v514 = vunpack.c.l.b16 %v295
      %v515 = vunpack.c.l.b16 %v296
      %v516 = vunpack.c.l.b16 %v297
      %v517 = vunpack.c.l.b16 %v298
      %v518 = vunpack.c.l.b16 %v299
      %v519 = vpack.c.b16 %v422, %v421
      %v520 = vpack.c.b16 %v424, %v423
      %v521 = vpack.c.b16 %v426, %v425
      %v522 = vpack.c.b16 %v428, %v427
      %v523 = vpack.c.b16 %v430, %v429
      %v524 = vpack.c.b16 %v432, %v431
      %v525 = vpack.c.b16 %v434, %v433
      %v526 = vpack.c.b16 %v436, %v435
      %v527 = vpack.c.b16 %v438, %v437
      %v528 = vpack.c.b16 %v440, %v439
      %v529 = vpack.c.b16 %v442, %v441
      %v530 = vpack.c.b16 %v444, %v443
      %v531 = vpack.c.b16 %v446, %v445
      %v532 = vpack.c.b16 %v448, %v447
      %v533 = vpack.c.b16 %v450, %v449
      %v534 = vpack.c.b16 %v452, %v451
      %v535 = vpack.c.b16 %v454, %v453
      %v536 = vpack.c.b16 %v456, %v455
      %v537 = vpack.c.b16 %v458, %v457
      %v538 = vpack.c.b16 %v460, %v459
      %v539 = vpack.c.b16 %v462, %v461
      %v540 = vpack.c.b16 %v464, %v463
      %v541 = vpack.c.b16 %v466, %v465
      %v542 = vpack.c.b16 %v468, %v467
      %v543 = vpack.c.b16 %v470, %v469
      %v544 = vpack.c.b16 %v472, %v471
      %v545 = vpack.c.b16 %v474, %v473
      %v546 = vpack.c.b16 %v476, %v475
      %v547 = vpack.c.b16 %v478, %v477
      %v548 = vpack.c.b16 %v480, %v479
      %v549 = vpack.c.b16 %v482, %v481
      %v550 = vpack.c.b16 %v484, %v483
      %v551 = vpack.c.b16 %v486, %v485
      %v552 = vpack.c.b16 %v488, %v487
      %v553 = vpack.c.b16 %v490, %v489
      %v554 = vpack.c.b16 %v492, %v491
      %v555 = vpack.c.b16 %v494, %v493
      %v556 = vpack.c.b16 %v496, %v495
      %v557 = vpack.c.b16 %v498, %v497
      %v558 = vpack.c.b16 %v500, %v499
      %v559 = vpack.c.b16 %v502, %v501
      %v560 = vpack.c.b16 %v504, %v503
      %v561 = vpack.c.b16 %v506, %v505
      %v562 = vpack.c.b16 %v508, %v507
      %v563 = vpack.c.b16 %v510, %v509
      %v564 = vpack.c.b16 %v512, %v511
      %v565 = vpack.c.b16 %v514, %v513
      %v566 = vpack.c.b16 %v516, %v515
      %v567 = vpack.c.b16 %v518, %v517
      %v633 = vunpack.c.l.b16 %v300
      %v634 = vunpack.c.l.b16 %v301
      %v635 = vunpack.c.l.b16 %v302
      %v636 = vunpack.c.l.b16 %v303
      %v637 = vunpack.c.l.b16 %v304
      %v638 = vunpack.c.l.b16 %v305
      %v639 = vunpack.c.l.b16 %v306
      %v640 = vunpack.c.l.b16 %v307
      %v641 = vunpack.c.l.b16 %v308
      %v642 = vunpack.c.l.b16 %v309
      %v643 = vunpack.c.l.b16 %v310
      %v644 = vunpack.c.l.b16 %v311
      %v645 = vunpack.c.l.b16 %v312
      %v646 = vunpack.c.l.b16 %v313
      %v647 = vunpack.c.l.b16 %v314
      %v648 = vunpack.c.l.b16 %v315
      %v649 = vpack.c.b16 %v634, %v633
      %v650 = vpack.c.b16 %v636, %v635
      %v651 = vpack.c.b16 %v638, %v637
      %v652 = vpack.c.b16 %v640, %v639
      %v653 = vpack.c.b16 %v642, %v641
      %v654 = vpack.c.b16 %v644, %v643
      %v655 = vpack.c.b16 %v646, %v645
      %v656 = vpack.c.b16 %v648, %v647
      %665 = vmatprep.subr.bf16.mxu0 0
      %666 = vmatpush1.bf16.msra.mxu0 %v656
      %667 = vmatprep.subr.bf16.mxu0 0
      %668 = vmatpush1.bf16.msra.mxu0 %v655
      %669 = vmatprep.subr.bf16.mxu0 0
      %670 = vmatpush1.bf16.msra.mxu0 %v654
      %671 = vmatprep.subr.bf16.mxu0 0
      %672 = vmatpush1.bf16.msra.mxu0 %v653
      %673 = vmatprep.subr.bf16.mxu0 0
      %674 = vmatpush1.bf16.msra.mxu0 %v652
      %675 = vmatprep.subr.bf16.mxu0 0
      %676 = vmatpush1.bf16.msra.mxu0 %v651
      %677 = vmatprep.subr.bf16.mxu0 0
      %678 = vmatpush1.bf16.msra.mxu0 %v650
      %679 = vmatprep.subr.bf16.mxu0 0
      %680 = vmatpush1.bf16.msra.mxu0 %v649
      %681 = vmatprep.subr.bf16.mxu0 0
      %682 = vmatpush2.bf16.msra.mxu0 0
      %683 = vmatprep.subr.bf16.mxu0 0
      %684 = vmatpush2.bf16.msra.mxu0 0
      %685 = vmatprep.subr.bf16.mxu0 0
      %686 = vmatpush2.bf16.msra.mxu0 0
      %687 = vmatprep.subr.bf16.mxu0 0
      %688 = vmatpush2.bf16.msra.mxu0 0
      %689 = vmatprep.subr.bf16.mxu0 0
      %690 = vmatpush2.bf16.msra.mxu0 0
      %691 = vmatprep.subr.bf16.mxu0 0
      %692 = vmatpush2.bf16.msra.mxu0 0
      %693 = vmatprep.subr.bf16.mxu0 0
      %694 = vmatpush2.bf16.msra.mxu0 0
      %695 = vmatprep.subr.bf16.mxu0 0
      %696 = vmatpush2.bf16.msra.mxu0 0
      %697 = vmatprep.mubr.bf16.mxu0 0
      %698 = vmatmul.mubr.bf16.gmra.mxu0 %v519
      %v699 = vpop.f32.mrf.mxu0
      %v700 = vadd.f32 %v321, %v699
      %v701 = vpop.f32.mrf.mxu0
      %v702 = vpop.f32.mrf.mxu0
      %v703 = vadd.f32 %v321, %v702
      %v704 = vpop.f32.mrf.mxu0
      %705 = vmatprep.mubr.bf16.mxu0 0
      %706 = vmatmul.mubr.bf16.gmra.mxu0 %v520
      %v707 = vpop.f32.mrf.mxu0
      %v708 = vadd.f32 %v321, %v707
      %v709 = vpop.f32.mrf.mxu0
      %v710 = vpop.f32.mrf.mxu0
      %v711 = vadd.f32 %v321, %v710
      %v712 = vpop.f32.mrf.mxu0
      %713 = vmatprep.mubr.bf16.mxu0 0
      %714 = vmatmul.mubr.bf16.gmra.mxu0 %v521
      %v715 = vpop.f32.mrf.mxu0
      %v716 = vadd.f32 %v321, %v715
      %v717 = vpop.f32.mrf.mxu0
      %v718 = vpop.f32.mrf.mxu0
      %v719 = vadd.f32 %v321, %v718
      %v720 = vpop.f32.mrf.mxu0
      %721 = vmatprep.mubr.bf16.mxu0 0
      %722 = vmatmul.mubr.bf16.gmra.mxu0 %v522
      %v723 = vpop.f32.mrf.mxu0
      %v724 = vadd.f32 %v321, %v723
      %v725 = vpop.f32.mrf.mxu0
      %v726 = vpop.f32.mrf.mxu0
      %v727 = vadd.f32 %v321, %v726
      %v728 = vpop.f32.mrf.mxu0
      %729 = vmatprep.mubr.bf16.mxu0 0
      %730 = vmatmul.mubr.bf16.gmra.mxu0 %v523
      %v731 = vpop.f32.mrf.mxu0
      %v732 = vadd.f32 %v321, %v731
      %v733 = vpop.f32.mrf.mxu0
      %v734 = vpop.f32.mrf.mxu0
      %v735 = vadd.f32 %v321, %v734
      %v736 = vpop.f32.mrf.mxu0
      %737 = vmatprep.mubr.bf16.mxu0 0
      %738 = vmatmul.mubr.bf16.gmra.mxu0 %v524
      %v739 = vpop.f32.mrf.mxu0
      %v740 = vadd.f32 %v321, %v739
      %v741 = vpop.f32.mrf.mxu0
      %v742 = vpop.f32.mrf.mxu0
      %v743 = vadd.f32 %v321, %v742
      %v744 = vpop.f32.mrf.mxu0
      %745 = vmatprep.mubr.bf16.mxu0 0
      %746 = vmatmul.mubr.bf16.gmra.mxu0 %v525
      %v747 = vpop.f32.mrf.mxu0
      %v748 = vadd.f32 %v321, %v747
      %v749 = vpop.f32.mrf.mxu0
      %v750 = vpop.f32.mrf.mxu0
      %v751 = vadd.f32 %v321, %v750
      %v752 = vpop.f32.mrf.mxu0
      %753 = vmatprep.mubr.bf16.mxu0 0
      %754 = vmatmul.mubr.bf16.gmra.mxu0 %v526
      %v755 = vpop.f32.mrf.mxu0
      %v756 = vadd.f32 %v321, %v755
      %v757 = vpop.f32.mrf.mxu0
      %v758 = vpop.f32.mrf.mxu0
      %v759 = vadd.f32 %v321, %v758
      %v760 = vpop.f32.mrf.mxu0
      %761 = vmatprep.mubr.bf16.mxu0 0
      %762 = vmatmul.mubr.bf16.gmra.mxu0 %v527
      %v763 = vpop.f32.mrf.mxu0
      %v764 = vadd.f32 %v321, %v763
      %v765 = vpop.f32.mrf.mxu0
      %v766 = vpop.f32.mrf.mxu0
      %v767 = vadd.f32 %v321, %v766
      %v768 = vpop.f32.mrf.mxu0
      %769 = vmatprep.mubr.bf16.mxu0 0
      %770 = vmatmul.mubr.bf16.gmra.mxu0 %v528
      %v771 = vpop.f32.mrf.mxu0
      %v772 = vadd.f32 %v321, %v771
      %v773 = vpop.f32.mrf.mxu0
      %v774 = vpop.f32.mrf.mxu0
      %v775 = vadd.f32 %v321, %v774
      %v776 = vpop.f32.mrf.mxu0
      %777 = vmatprep.mubr.bf16.mxu0 0
      %778 = vmatmul.mubr.bf16.gmra.mxu0 %v529
      %v779 = vpop.f32.mrf.mxu0
      %v780 = vadd.f32 %v321, %v779
      %v781 = vpop.f32.mrf.mxu0
      %v782 = vpop.f32.mrf.mxu0
      %v783 = vadd.f32 %v321, %v782
      %v784 = vpop.f32.mrf.mxu0
      %785 = vmatprep.mubr.bf16.mxu0 0
      %786 = vmatmul.mubr.bf16.gmra.mxu0 %v530
      %v787 = vpop.f32.mrf.mxu0
      %v788 = vadd.f32 %v321, %v787
      %v789 = vpop.f32.mrf.mxu0
      %v790 = vpop.f32.mrf.mxu0
      %v791 = vadd.f32 %v321, %v790
      %v792 = vpop.f32.mrf.mxu0
      %793 = vmatprep.mubr.bf16.mxu0 0
      %794 = vmatmul.mubr.bf16.gmra.mxu0 %v531
      %v795 = vpop.f32.mrf.mxu0
      %v796 = vadd.f32 %v321, %v795
      %v797 = vpop.f32.mrf.mxu0
      %v798 = vpop.f32.mrf.mxu0
      %v799 = vadd.f32 %v321, %v798
      %v800 = vpop.f32.mrf.mxu0
      %801 = vmatprep.mubr.bf16.mxu0 0
      %802 = vmatmul.mubr.bf16.gmra.mxu0 %v532
      %v803 = vpop.f32.mrf.mxu0
      %v804 = vadd.f32 %v321, %v803
      %v805 = vpop.f32.mrf.mxu0
      %v806 = vpop.f32.mrf.mxu0
      %v807 = vadd.f32 %v321, %v806
      %v808 = vpop.f32.mrf.mxu0
      %809 = vmatprep.mubr.bf16.mxu0 0
      %810 = vmatmul.mubr.bf16.gmra.mxu0 %v533
      %v811 = vpop.f32.mrf.mxu0
      %v812 = vadd.f32 %v321, %v811
      %v813 = vpop.f32.mrf.mxu0
      %v814 = vpop.f32.mrf.mxu0
      %v815 = vadd.f32 %v321, %v814
      %v816 = vpop.f32.mrf.mxu0
      %817 = vmatprep.mubr.bf16.mxu0 0
      %818 = vmatmul.mubr.bf16.gmra.mxu0 %v534
      %v819 = vpop.f32.mrf.mxu0
      %v820 = vadd.f32 %v321, %v819
      %v821 = vpop.f32.mrf.mxu0
      %v822 = vpop.f32.mrf.mxu0
      %v823 = vadd.f32 %v321, %v822
      %v824 = vpop.f32.mrf.mxu0
      %825 = vmatprep.mubr.bf16.mxu0 0
      %826 = vmatmul.mubr.bf16.gmra.mxu0 %v535
      %v827 = vpop.f32.mrf.mxu0
      %v828 = vadd.f32 %v321, %v827
      %v829 = vpop.f32.mrf.mxu0
      %v830 = vpop.f32.mrf.mxu0
      %v831 = vadd.f32 %v321, %v830
      %v832 = vpop.f32.mrf.mxu0
      %833 = vmatprep.mubr.bf16.mxu0 0
      %834 = vmatmul.mubr.bf16.gmra.mxu0 %v536
      %v835 = vpop.f32.mrf.mxu0
      %v836 = vadd.f32 %v321, %v835
      %v837 = vpop.f32.mrf.mxu0
      %v838 = vpop.f32.mrf.mxu0
      %v839 = vadd.f32 %v321, %v838
      %v840 = vpop.f32.mrf.mxu0
      %841 = vmatprep.mubr.bf16.mxu0 0
      %842 = vmatmul.mubr.bf16.gmra.mxu0 %v537
      %v843 = vpop.f32.mrf.mxu0
      %v844 = vadd.f32 %v321, %v843
      %v845 = vpop.f32.mrf.mxu0
      %v846 = vpop.f32.mrf.mxu0
      %v847 = vadd.f32 %v321, %v846
      %v848 = vpop.f32.mrf.mxu0
      %849 = vmatprep.mubr.bf16.mxu0 0
      %850 = vmatmul.mubr.bf16.gmra.mxu0 %v538
      %v851 = vpop.f32.mrf.mxu0
      %v852 = vadd.f32 %v321, %v851
      %v853 = vpop.f32.mrf.mxu0
      %v854 = vpop.f32.mrf.mxu0
      %v855 = vadd.f32 %v321, %v854
      %v856 = vpop.f32.mrf.mxu0
      %857 = vmatprep.mubr.bf16.mxu0 0
      %858 = vmatmul.mubr.bf16.gmra.mxu0 %v539
      %v859 = vpop.f32.mrf.mxu0
      %v860 = vadd.f32 %v321, %v859
      %v861 = vpop.f32.mrf.mxu0
      %v862 = vpop.f32.mrf.mxu0
      %v863 = vadd.f32 %v321, %v862
      %v864 = vpop.f32.mrf.mxu0
      %865 = vmatprep.mubr.bf16.mxu0 0
      %866 = vmatmul.mubr.bf16.gmra.mxu0 %v540
      %v867 = vpop.f32.mrf.mxu0
      %v868 = vadd.f32 %v321, %v867
      %v869 = vpop.f32.mrf.mxu0
      %v870 = vpop.f32.mrf.mxu0
      %v871 = vadd.f32 %v321, %v870
      %v872 = vpop.f32.mrf.mxu0
      %873 = vmatprep.mubr.bf16.mxu0 0
      %874 = vmatmul.mubr.bf16.gmra.mxu0 %v541
      %v875 = vpop.f32.mrf.mxu0
      %v876 = vadd.f32 %v321, %v875
      %v877 = vpop.f32.mrf.mxu0
      %v878 = vpop.f32.mrf.mxu0
      %v879 = vadd.f32 %v321, %v878
      %v880 = vpop.f32.mrf.mxu0
      %881 = vmatprep.mubr.bf16.mxu0 0
      %882 = vmatmul.mubr.bf16.gmra.mxu0 %v542
      %v883 = vpop.f32.mrf.mxu0
      %v884 = vadd.f32 %v321, %v883
      %v885 = vpop.f32.mrf.mxu0
      %v886 = vpop.f32.mrf.mxu0
      %v887 = vadd.f32 %v321, %v886
      %v888 = vpop.f32.mrf.mxu0
      %889 = vmatprep.mubr.bf16.mxu0 0
      %890 = vmatmul.mubr.bf16.gmra.mxu0 %v543
      %v891 = vpop.f32.mrf.mxu0
      %v892 = vadd.f32 %v321, %v891
      %v893 = vpop.f32.mrf.mxu0
      %v894 = vpop.f32.mrf.mxu0
      %v895 = vadd.f32 %v321, %v894
      %v896 = vpop.f32.mrf.mxu0
      %897 = vmatprep.mubr.bf16.mxu0 0
      %898 = vmatmul.mubr.bf16.gmra.mxu0 %v544
      %v899 = vpop.f32.mrf.mxu0
      %v900 = vadd.f32 %v321, %v899
      %v901 = vpop.f32.mrf.mxu0
      %v902 = vpop.f32.mrf.mxu0
      %v903 = vadd.f32 %v321, %v902
      %v904 = vpop.f32.mrf.mxu0
      %905 = vmatprep.mubr.bf16.mxu0 0
      %906 = vmatmul.mubr.bf16.gmra.mxu0 %v545
      %v907 = vpop.f32.mrf.mxu0
      %v908 = vadd.f32 %v321, %v907
      %v909 = vpop.f32.mrf.mxu0
      %v910 = vpop.f32.mrf.mxu0
      %v911 = vadd.f32 %v321, %v910
      %v912 = vpop.f32.mrf.mxu0
      %913 = vmatprep.mubr.bf16.mxu0 0
      %914 = vmatmul.mubr.bf16.gmra.mxu0 %v546
      %v915 = vpop.f32.mrf.mxu0
      %v916 = vadd.f32 %v321, %v915
      %v917 = vpop.f32.mrf.mxu0
      %v918 = vpop.f32.mrf.mxu0
      %v919 = vadd.f32 %v321, %v918
      %v920 = vpop.f32.mrf.mxu0
      %921 = vmatprep.mubr.bf16.mxu0 0
      %922 = vmatmul.mubr.bf16.gmra.mxu0 %v547
      %v923 = vpop.f32.mrf.mxu0
      %v924 = vadd.f32 %v321, %v923
      %v925 = vpop.f32.mrf.mxu0
      %v926 = vpop.f32.mrf.mxu0
      %v927 = vadd.f32 %v321, %v926
      %v928 = vpop.f32.mrf.mxu0
      %929 = vmatprep.mubr.bf16.mxu0 0
      %930 = vmatmul.mubr.bf16.gmra.mxu0 %v548
      %v931 = vpop.f32.mrf.mxu0
      %v932 = vadd.f32 %v321, %v931
      %v933 = vpop.f32.mrf.mxu0
      %v934 = vpop.f32.mrf.mxu0
      %v935 = vadd.f32 %v321, %v934
      %v936 = vpop.f32.mrf.mxu0
      %937 = vmatprep.mubr.bf16.mxu0 0
      %938 = vmatmul.mubr.bf16.gmra.mxu0 %v549
      %v939 = vpop.f32.mrf.mxu0
      %v940 = vadd.f32 %v321, %v939
      %v941 = vpop.f32.mrf.mxu0
      %v942 = vpop.f32.mrf.mxu0
      %v943 = vadd.f32 %v321, %v942
      %v944 = vpop.f32.mrf.mxu0
      %945 = vmatprep.mubr.bf16.mxu0 0
      %946 = vmatmul.mubr.bf16.gmra.mxu0 %v550
      %v947 = vpop.f32.mrf.mxu0
      %v948 = vadd.f32 %v321, %v947
      %v949 = vpop.f32.mrf.mxu0
      %v950 = vpop.f32.mrf.mxu0
      %v951 = vadd.f32 %v321, %v950
      %v952 = vpop.f32.mrf.mxu0
      %953 = vmatprep.mubr.bf16.mxu0 0
      %954 = vmatmul.mubr.bf16.gmra.mxu0 %v551
      %v955 = vpop.f32.mrf.mxu0
      %v956 = vadd.f32 %v321, %v955
      %v957 = vpop.f32.mrf.mxu0
      %v958 = vpop.f32.mrf.mxu0
      %v959 = vadd.f32 %v321, %v958
      %v960 = vpop.f32.mrf.mxu0
      %961 = vmatprep.mubr.bf16.mxu0 0
      %962 = vmatmul.mubr.bf16.gmra.mxu0 %v552
      %v963 = vpop.f32.mrf.mxu0
      %v964 = vadd.f32 %v321, %v963
      %v965 = vpop.f32.mrf.mxu0
      %v966 = vpop.f32.mrf.mxu0
      %v967 = vadd.f32 %v321, %v966
      %v968 = vpop.f32.mrf.mxu0
      %969 = vmatprep.mubr.bf16.mxu0 0
      %970 = vmatmul.mubr.bf16.gmra.mxu0 %v553
      %v971 = vpop.f32.mrf.mxu0
      %v972 = vadd.f32 %v321, %v971
      %v973 = vpop.f32.mrf.mxu0
      %v974 = vpop.f32.mrf.mxu0
      %v975 = vadd.f32 %v321, %v974
      %v976 = vpop.f32.mrf.mxu0
      %977 = vmatprep.mubr.bf16.mxu0 0
      %978 = vmatmul.mubr.bf16.gmra.mxu0 %v554
      %v979 = vpop.f32.mrf.mxu0
      %v980 = vadd.f32 %v321, %v979
      %v981 = vpop.f32.mrf.mxu0
      %v982 = vpop.f32.mrf.mxu0
      %v983 = vadd.f32 %v321, %v982
      %v984 = vpop.f32.mrf.mxu0
      %985 = vmatprep.mubr.bf16.mxu0 0
      %986 = vmatmul.mubr.bf16.gmra.mxu0 %v555
      %v987 = vpop.f32.mrf.mxu0
      %v988 = vadd.f32 %v321, %v987
      %v989 = vpop.f32.mrf.mxu0
      %v990 = vpop.f32.mrf.mxu0
      %v991 = vadd.f32 %v321, %v990
      %v992 = vpop.f32.mrf.mxu0
      %993 = vmatprep.mubr.bf16.mxu0 0
      %994 = vmatmul.mubr.bf16.gmra.mxu0 %v556
      %v995 = vpop.f32.mrf.mxu0
      %v996 = vadd.f32 %v321, %v995
      %v997 = vpop.f32.mrf.mxu0
      %v998 = vpop.f32.mrf.mxu0
      %v999 = vadd.f32 %v321, %v998
      %v1000 = vpop.f32.mrf.mxu0
      %1001 = vmatprep.mubr.bf16.mxu0 0
      %1002 = vmatmul.mubr.bf16.gmra.mxu0 %v557
      %v1003 = vpop.f32.mrf.mxu0
      %v1004 = vadd.f32 %v321, %v1003
      %v1005 = vpop.f32.mrf.mxu0
      %v1006 = vpop.f32.mrf.mxu0
      %v1007 = vadd.f32 %v321, %v1006
      %v1008 = vpop.f32.mrf.mxu0
      %1009 = vmatprep.mubr.bf16.mxu0 0
      %1010 = vmatmul.mubr.bf16.gmra.mxu0 %v558
      %v1011 = vpop.f32.mrf.mxu0
      %v1012 = vadd.f32 %v321, %v1011
      %v1013 = vpop.f32.mrf.mxu0
      %v1014 = vpop.f32.mrf.mxu0
      %v1015 = vadd.f32 %v321, %v1014
      %v1016 = vpop.f32.mrf.mxu0
      %1017 = vmatprep.mubr.bf16.mxu0 0
      %1018 = vmatmul.mubr.bf16.gmra.mxu0 %v559
      %v1019 = vpop.f32.mrf.mxu0
      %v1020 = vadd.f32 %v321, %v1019
      %v1021 = vpop.f32.mrf.mxu0
      %v1022 = vpop.f32.mrf.mxu0
      %v1023 = vadd.f32 %v321, %v1022
      %v1024 = vpop.f32.mrf.mxu0
      %1025 = vmatprep.mubr.bf16.mxu0 0
      %1026 = vmatmul.mubr.bf16.gmra.mxu0 %v560
      %v1027 = vpop.f32.mrf.mxu0
      %v1028 = vadd.f32 %v321, %v1027
      %v1029 = vpop.f32.mrf.mxu0
      %v1030 = vpop.f32.mrf.mxu0
      %v1031 = vadd.f32 %v321, %v1030
      %v1032 = vpop.f32.mrf.mxu0
      %1033 = vmatprep.mubr.bf16.mxu0 0
      %1034 = vmatmul.mubr.bf16.gmra.mxu0 %v561
      %v1035 = vpop.f32.mrf.mxu0
      %v1036 = vadd.f32 %v321, %v1035
      %v1037 = vpop.f32.mrf.mxu0
      %v1038 = vpop.f32.mrf.mxu0
      %v1039 = vadd.f32 %v321, %v1038
      %v1040 = vpop.f32.mrf.mxu0
      %1041 = vmatprep.mubr.bf16.mxu0 0
      %1042 = vmatmul.mubr.bf16.gmra.mxu0 %v562
      %v1043 = vpop.f32.mrf.mxu0
      %v1044 = vadd.f32 %v321, %v1043
      %v1045 = vpop.f32.mrf.mxu0
      %v1046 = vpop.f32.mrf.mxu0
      %v1047 = vadd.f32 %v321, %v1046
      %v1048 = vpop.f32.mrf.mxu0
      %1049 = vmatprep.mubr.bf16.mxu0 0
      %1050 = vmatmul.mubr.bf16.gmra.mxu0 %v563
      %v1051 = vpop.f32.mrf.mxu0
      %v1052 = vadd.f32 %v321, %v1051
      %v1053 = vpop.f32.mrf.mxu0
      %v1054 = vpop.f32.mrf.mxu0
      %v1055 = vadd.f32 %v321, %v1054
      %v1056 = vpop.f32.mrf.mxu0
      %1057 = vmatprep.mubr.bf16.mxu0 0
      %1058 = vmatmul.mubr.bf16.gmra.mxu0 %v564
      %v1059 = vpop.f32.mrf.mxu0
      %v1060 = vadd.f32 %v321, %v1059
      %v1061 = vpop.f32.mrf.mxu0
      %v1062 = vpop.f32.mrf.mxu0
      %v1063 = vadd.f32 %v321, %v1062
      %v1064 = vpop.f32.mrf.mxu0
      %1065 = vmatprep.mubr.bf16.mxu0 0
      %1066 = vmatmul.mubr.bf16.gmra.mxu0 %v565
      %v1067 = vpop.f32.mrf.mxu0
      %v1068 = vadd.f32 %v321, %v1067
      %v1069 = vpop.f32.mrf.mxu0
      %v1070 = vpop.f32.mrf.mxu0
      %v1071 = vadd.f32 %v321, %v1070
      %v1072 = vpop.f32.mrf.mxu0
      %1073 = vmatprep.mubr.bf16.mxu0 0
      %1074 = vmatmul.mubr.bf16.gmra.mxu0 %v566
      %v1075 = vpop.f32.mrf.mxu0
      %v1076 = vadd.f32 %v321, %v1075
      %v1077 = vpop.f32.mrf.mxu0
      %v1078 = vpop.f32.mrf.mxu0
      %v1079 = vadd.f32 %v321, %v1078
      %v1080 = vpop.f32.mrf.mxu0
      %1081 = vmatprep.mubr.bf16.mxu0 0
      %1082 = vmatmul.mubr.bf16.gmra.mxu0 %v567
      %v1083 = vpop.f32.mrf.mxu0
      %v1084 = vadd.f32 %v321, %v1083
      %v1085 = vpop.f32.mrf.mxu0
      %v1086 = vpop.f32.mrf.mxu0
      %v1087 = vadd.f32 %v321, %v1086
      %v1088 = vpop.f32.mrf.mxu0
      %1089 = vdwg.mxu0
      %v1090 = vtanh.pop %v700
      %v1091 = vtanh.pop %v703
      %v1092 = vtanh.pop %v708
      %v1093 = vtanh.pop %v711
      %v1094 = vtanh.pop %v716
      %v1095 = vtanh.pop %v719
      %v1096 = vtanh.pop %v724
      %v1097 = vtanh.pop %v727
      %v1098 = vtanh.pop %v732
      %v1099 = vtanh.pop %v735
      %v1100 = vtanh.pop %v740
      %v1101 = vtanh.pop %v743
      %v1102 = vtanh.pop %v748
      %v1103 = vtanh.pop %v751
      %v1104 = vtanh.pop %v756
      %v1105 = vtanh.pop %v759
      %v1106 = vtanh.pop %v764
      %v1107 = vtanh.pop %v767
      %v1108 = vtanh.pop %v772
      %v1109 = vtanh.pop %v775
      %v1110 = vtanh.pop %v780
      %v1111 = vtanh.pop %v783
      %v1112 = vtanh.pop %v788
      %v1113 = vtanh.pop %v791
      %v1114 = vtanh.pop %v796
      %v1115 = vtanh.pop %v799
      %v1116 = vtanh.pop %v804
      %v1117 = vtanh.pop %v807
      %v1118 = vtanh.pop %v812
      %v1119 = vtanh.pop %v815
      %v1120 = vtanh.pop %v820
      %v1121 = vtanh.pop %v823
      %v1122 = vtanh.pop %v828
      %v1123 = vtanh.pop %v831
      %v1124 = vtanh.pop %v836
      %v1125 = vtanh.pop %v839
      %v1126 = vtanh.pop %v844
      %v1127 = vtanh.pop %v847
      %v1128 = vtanh.pop %v852
      %v1129 = vtanh.pop %v855
      %v1130 = vtanh.pop %v860
      %v1131 = vtanh.pop %v863
      %v1132 = vtanh.pop %v868
      %v1133 = vtanh.pop %v871
      %v1134 = vtanh.pop %v876
      %v1135 = vtanh.pop %v879
      %v1136 = vtanh.pop %v884
      %v1137 = vtanh.pop %v887
      %v1138 = vtanh.pop %v892
      %v1139 = vtanh.pop %v895
      %v1140 = vtanh.pop %v900
      %v1141 = vtanh.pop %v903
      %v1142 = vtanh.pop %v908
      %v1143 = vtanh.pop %v911
      %v1144 = vtanh.pop %v916
      %v1145 = vtanh.pop %v919
      %v1146 = vtanh.pop %v924
      %v1147 = vtanh.pop %v927
      %v1148 = vtanh.pop %v932
      %v1149 = vtanh.pop %v935
      %v1150 = vtanh.pop %v940
      %v1151 = vtanh.pop %v943
      %v1152 = vtanh.pop %v948
      %v1153 = vtanh.pop %v951
      %v1154 = vtanh.pop %v956
      %v1155 = vtanh.pop %v959
      %v1156 = vtanh.pop %v964
      %v1157 = vtanh.pop %v967
      %v1158 = vtanh.pop %v972
      %v1159 = vtanh.pop %v975
      %v1160 = vtanh.pop %v980
      %v1161 = vtanh.pop %v983
      %v1162 = vtanh.pop %v988
      %v1163 = vtanh.pop %v991
      %v1164 = vtanh.pop %v996
      %v1165 = vtanh.pop %v999
      %v1166 = vtanh.pop %v1004
      %v1167 = vtanh.pop %v1007
      %v1168 = vtanh.pop %v1012
      %v1169 = vtanh.pop %v1015
      %v1170 = vtanh.pop %v1020
      %v1171 = vtanh.pop %v1023
      %v1172 = vtanh.pop %v1028
      %v1173 = vtanh.pop %v1031
      %v1174 = vtanh.pop %v1036
      %v1175 = vtanh.pop %v1039
      %v1176 = vtanh.pop %v1044
      %v1177 = vtanh.pop %v1047
      %v1178 = vtanh.pop %v1052
      %v1179 = vtanh.pop %v1055
      %v1180 = vtanh.pop %v1060
      %v1181 = vtanh.pop %v1063
      %v1182 = vtanh.pop %v1068
      %v1183 = vtanh.pop %v1071
      %v1184 = vtanh.pop %v1076
      %v1185 = vtanh.pop %v1079
      %v1186 = vtanh.pop %v1084
      %v1187 = vtanh.pop %v1087
      %v1188 = vld [vmem:[%s3] sm:$0xff]
      %v1189 = vld [vmem:[%s3 + $0x8] sm:$0xff]
      %v1190 = vld [vmem:[%s3 + $0x10] sm:$0xff]
      %v1191 = vld [vmem:[%s3 + $0x18] sm:$0xff]
      %v1192 = vld [vmem:[%s3 + $0x20] sm:$0xff]
      %v1193 = vld [vmem:[%s3 + $0x28] sm:$0xff]
      %v1194 = vld [vmem:[%s3 + $0x30] sm:$0xff]
      %v1195 = vld [vmem:[%s3 + $0x38] sm:$0xff]
      %v1196 = vld [vmem:[%s3 + $0x40] sm:$0xff]
      %v1197 = vld [vmem:[%s3 + $0x48] sm:$0xff]
      %v1198 = vld [vmem:[%s3 + $0x50] sm:$0xff]
      %v1199 = vld [vmem:[%s3 + $0x58] sm:$0xff]
      %v1200 = vld [vmem:[%s3 + $0x60] sm:$0xff]
      %v1201 = vld [vmem:[%s3 + $0x68] sm:$0xff]
      %v1202 = vld [vmem:[%s3 + $0x70] sm:$0xff]
      %v1203 = vld [vmem:[%s3 + $0x78] sm:$0xff]
      %v1204 = vld [vmem:[%s3 + $0x80] sm:$0xff]
      %v1205 = vld [vmem:[%s3 + $0x88] sm:$0xff]
      %v1206 = vld [vmem:[%s3 + $0x90] sm:$0xff]
      %v1207 = vld [vmem:[%s3 + $0x98] sm:$0xff]
      %v1208 = vld [vmem:[%s3 + $0xa0] sm:$0xff]
      %v1209 = vld [vmem:[%s3 + $0xa8] sm:$0xff]
      %v1210 = vld [vmem:[%s3 + $0xb0] sm:$0xff]
      %v1211 = vld [vmem:[%s3 + $0xb8] sm:$0xff]
      %v1212 = vld [vmem:[%s3 + $0xc0] sm:$0xff]
      %v1213 = vld [vmem:[%s3 + $0xc8] sm:$0xff]
      %v1214 = vld [vmem:[%s3 + $0xd0] sm:$0xff]
      %v1215 = vld [vmem:[%s3 + $0xd8] sm:$0xff]
      %v1216 = vld [vmem:[%s3 + $0xe0] sm:$0xff]
      %v1217 = vld [vmem:[%s3 + $0xe8] sm:$0xff]
      %v1218 = vld [vmem:[%s3 + $0xf0] sm:$0xff]
      %v1219 = vld [vmem:[%s3 + $0xf8] sm:$0xff]
      %v1220 = vld [vmem:[%s3 + $0x100] sm:$0xff]
      %v1221 = vld [vmem:[%s3 + $0x108] sm:$0xff]
      %v1222 = vld [vmem:[%s3 + $0x110] sm:$0xff]
      %v1223 = vld [vmem:[%s3 + $0x118] sm:$0xff]
      %v1224 = vld [vmem:[%s3 + $0x120] sm:$0xff]
      %v1225 = vld [vmem:[%s3 + $0x128] sm:$0xff]
      %v1226 = vld [vmem:[%s3 + $0x130] sm:$0xff]
      %v1227 = vld [vmem:[%s3 + $0x138] sm:$0xff]
      %v1228 = vld [vmem:[%s3 + $0x140] sm:$0xff]
      %v1229 = vld [vmem:[%s3 + $0x148] sm:$0xff]
      %v1230 = vld [vmem:[%s3 + $0x150] sm:$0xff]
      %v1231 = vld [vmem:[%s3 + $0x158] sm:$0xff]
      %v1232 = vld [vmem:[%s3 + $0x160] sm:$0xff]
      %v1233 = vld [vmem:[%s3 + $0x168] sm:$0xff]
      %v1234 = vld [vmem:[%s3 + $0x170] sm:$0xff]
      %v1235 = vld [vmem:[%s3 + $0x178] sm:$0xff]
      %v1236 = vld [vmem:[%s3 + $0x180] sm:$0xff]
      %v1237 = vld [vmem:[%s3 + $0x188] sm:$0xff]
      %v1238 = vld [vmem:[%s3 + $0x190] sm:$0xff]
      %v1239 = vld [vmem:[%s3 + $0x198] sm:$0xff]
      %v1240 = vld [vmem:[%s3 + $0x1a0] sm:$0xff]
      %v1241 = vld [vmem:[%s3 + $0x1a8] sm:$0xff]
      %v1242 = vld [vmem:[%s3 + $0x1b0] sm:$0xff]
      %v1243 = vld [vmem:[%s3 + $0x1b8] sm:$0xff]
      %v1244 = vld [vmem:[%s3 + $0x1c0] sm:$0xff]
      %v1245 = vld [vmem:[%s3 + $0x1c8] sm:$0xff]
      %v1246 = vld [vmem:[%s3 + $0x1d0] sm:$0xff]
      %v1247 = vld [vmem:[%s3 + $0x1d8] sm:$0xff]
      %v1248 = vld [vmem:[%s3 + $0x1e0] sm:$0xff]
      %v1249 = vld [vmem:[%s3 + $0x1e8] sm:$0xff]
      %v1250 = vld [vmem:[%s3 + $0x1f0] sm:$0xff]
      %v1251 = vld [vmem:[%s3 + $0x1f8] sm:$0xff]
      %v1252 = vld [vmem:[%s3 + $0x200] sm:$0xff]
      %v1253 = vld [vmem:[%s3 + $0x208] sm:$0xff]
      %v1254 = vld [vmem:[%s3 + $0x210] sm:$0xff]
      %v1255 = vld [vmem:[%s3 + $0x218] sm:$0xff]
      %v1256 = vld [vmem:[%s3 + $0x220] sm:$0xff]
      %v1257 = vld [vmem:[%s3 + $0x228] sm:$0xff]
      %v1258 = vld [vmem:[%s3 + $0x230] sm:$0xff]
      %v1259 = vld [vmem:[%s3 + $0x238] sm:$0xff]
      %v1260 = vld [vmem:[%s3 + $0x240] sm:$0xff]
      %v1261 = vld [vmem:[%s3 + $0x248] sm:$0xff]
      %v1262 = vld [vmem:[%s3 + $0x250] sm:$0xff]
      %v1263 = vld [vmem:[%s3 + $0x258] sm:$0xff]
      %v1264 = vld [vmem:[%s3 + $0x260] sm:$0xff]
      %v1265 = vld [vmem:[%s3 + $0x268] sm:$0xff]
      %v1266 = vld [vmem:[%s3 + $0x270] sm:$0xff]
      %v1267 = vld [vmem:[%s3 + $0x278] sm:$0xff]
      %v1268 = vld [vmem:[%s3 + $0x280] sm:$0xff]
      %v1269 = vld [vmem:[%s3 + $0x288] sm:$0xff]
      %v1270 = vld [vmem:[%s3 + $0x290] sm:$0xff]
      %v1271 = vld [vmem:[%s3 + $0x298] sm:$0xff]
      %v1272 = vld [vmem:[%s3 + $0x2a0] sm:$0xff]
      %v1273 = vld [vmem:[%s3 + $0x2a8] sm:$0xff]
      %v1274 = vld [vmem:[%s3 + $0x2b0] sm:$0xff]
      %v1275 = vld [vmem:[%s3 + $0x2b8] sm:$0xff]
      %v1276 = vld [vmem:[%s3 + $0x2c0] sm:$0xff]
      %v1277 = vld [vmem:[%s3 + $0x2c8] sm:$0xff]
      %v1278 = vld [vmem:[%s3 + $0x2d0] sm:$0xff]
      %v1279 = vld [vmem:[%s3 + $0x2d8] sm:$0xff]
      %v1280 = vld [vmem:[%s3 + $0x2e0] sm:$0xff]
      %v1281 = vld [vmem:[%s3 + $0x2e8] sm:$0xff]
      %v1282 = vld [vmem:[%s3 + $0x2f0] sm:$0xff]
      %v1283 = vld [vmem:[%s3 + $0x2f8] sm:$0xff]
      %v1284 = vld [vmem:[%s3 + $0x300] sm:$0xff]
      %v1285 = vld [vmem:[%s3 + $0x308] sm:$0xff]
      %v1286 = vld [vmem:[%s3 + $0x310] sm:$0xff]
      %v1287 = vld [vmem:[%s3 + $0x318] sm:$0xff]
      %v1288 = vld [vmem:[%s3 + $0x320] sm:$0xff]
      %v1289 = vld [vmem:[%s3 + $0x328] sm:$0xff]
      %v1290 = vld [vmem:[%s3 + $0x330] sm:$0xff]
      %v1291 = vld [vmem:[%s3 + $0x338] sm:$0xff]
      %v1292 = vld [vmem:[%s3 + $0x340] sm:$0xff]
      %v1293 = vld [vmem:[%s3 + $0x348] sm:$0xff]
      %v1294 = vld [vmem:[%s3 + $0x350] sm:$0xff]
      %v1295 = vld [vmem:[%s3 + $0x358] sm:$0xff]
      %v1296 = vld [vmem:[%s3 + $0x360] sm:$0xff]
      %v1297 = vld [vmem:[%s3 + $0x368] sm:$0xff]
      %v1298 = vld [vmem:[%s3 + $0x370] sm:$0xff]
      %v1299 = vld [vmem:[%s3 + $0x378] sm:$0xff]
      %v1300 = vld [vmem:[%s3 + $0x380] sm:$0xff]
      %v1301 = vld [vmem:[%s3 + $0x388] sm:$0xff]
      %v1302 = vld [vmem:[%s3 + $0x390] sm:$0xff]
      %v1303 = vld [vmem:[%s3 + $0x398] sm:$0xff]
      %v1304 = vld [vmem:[%s3 + $0x3a0] sm:$0xff]
      %v1305 = vld [vmem:[%s3 + $0x3a8] sm:$0xff]
      %v1306 = vld [vmem:[%s3 + $0x3b0] sm:$0xff]
      %v1307 = vld [vmem:[%s3 + $0x3b8] sm:$0xff]
      %v1308 = vld [vmem:[%s3 + $0x3c0] sm:$0xff]
      %v1309 = vld [vmem:[%s3 + $0x3c8] sm:$0xff]
      %v1310 = vld [vmem:[%s3 + $0x3d0] sm:$0xff]
      %v1311 = vld [vmem:[%s3 + $0x3d8] sm:$0xff]
      %v1312 = vld [vmem:[%s3 + $0x3e0] sm:$0xff]
      %v1313 = vld [vmem:[%s3 + $0x3e8] sm:$0xff]
      %v1314 = vld [vmem:[%s3 + $0x3f0] sm:$0xff]
      %v1315 = vld [vmem:[%s3 + $0x3f8] sm:$0xff]
      %v1316 = vld [vmem:[%s3 + $0x400] sm:$0xff]
      %v1317 = vld [vmem:[%s3 + $0x408] sm:$0xff]
      %v1318 = vld [vmem:[%s3 + $0x410] sm:$0xff]
      %v1319 = vld [vmem:[%s3 + $0x418] sm:$0xff]
      %v1320 = vld [vmem:[%s3 + $0x420] sm:$0xff]
      %v1321 = vld [vmem:[%s3 + $0x428] sm:$0xff]
      %v1322 = vld [vmem:[%s3 + $0x430] sm:$0xff]
      %v1323 = vld [vmem:[%s3 + $0x438] sm:$0xff]
      %v1324 = vld [vmem:[%s3 + $0x440] sm:$0xff]
      %v1325 = vld [vmem:[%s3 + $0x448] sm:$0xff]
      %v1326 = vld [vmem:[%s3 + $0x450] sm:$0xff]
      %v1327 = vld [vmem:[%s3 + $0x458] sm:$0xff]
      %v1328 = vld [vmem:[%s3 + $0x460] sm:$0xff]
      %v1329 = vld [vmem:[%s3 + $0x468] sm:$0xff]
      %v1330 = vld [vmem:[%s3 + $0x470] sm:$0xff]
      %v1331 = vld [vmem:[%s3 + $0x478] sm:$0xff]
      %v1332 = vld [vmem:[%s3 + $0x480] sm:$0xff]
      %v1333 = vld [vmem:[%s3 + $0x488] sm:$0xff]
      %v1334 = vld [vmem:[%s3 + $0x490] sm:$0xff]
      %v1335 = vld [vmem:[%s3 + $0x498] sm:$0xff]
      %v1336 = vld [vmem:[%s3 + $0x4a0] sm:$0xff]
      %v1337 = vld [vmem:[%s3 + $0x4a8] sm:$0xff]
      %v1338 = vld [vmem:[%s3 + $0x4b0] sm:$0xff]
      %v1339 = vld [vmem:[%s3 + $0x4b8] sm:$0xff]
      %v1340 = vld [vmem:[%s3 + $0x4c0] sm:$0xff]
      %v1341 = vld [vmem:[%s3 + $0x4c8] sm:$0xff]
      %v1342 = vld [vmem:[%s3 + $0x4d0] sm:$0xff]
      %v1343 = vld [vmem:[%s3 + $0x4d8] sm:$0xff]
      %v1344 = vld [vmem:[%s3 + $0x4e0] sm:$0xff]
      %v1345 = vld [vmem:[%s3 + $0x4e8] sm:$0xff]
      %v1346 = vld [vmem:[%s3 + $0x4f0] sm:$0xff]
      %v1347 = vld [vmem:[%s3 + $0x4f8] sm:$0xff]
      %v1348 = vld [vmem:[%s3 + $0x500] sm:$0xff]
      %v1349 = vld [vmem:[%s3 + $0x508] sm:$0xff]
      %v1350 = vld [vmem:[%s3 + $0x510] sm:$0xff]
      %v1351 = vld [vmem:[%s3 + $0x518] sm:$0xff]
      %v1352 = vld [vmem:[%s3 + $0x520] sm:$0xff]
      %v1353 = vld [vmem:[%s3 + $0x528] sm:$0xff]
      %v1354 = vld [vmem:[%s3 + $0x530] sm:$0xff]
      %v1355 = vld [vmem:[%s3 + $0x538] sm:$0xff]
      %v1356 = vld [vmem:[%s3 + $0x540] sm:$0xff]
      %v1357 = vld [vmem:[%s3 + $0x548] sm:$0xff]
      %v1358 = vld [vmem:[%s3 + $0x550] sm:$0xff]
      %v1359 = vld [vmem:[%s3 + $0x558] sm:$0xff]
      %v1360 = vld [vmem:[%s3 + $0x560] sm:$0xff]
      %v1361 = vld [vmem:[%s3 + $0x568] sm:$0xff]
      %v1362 = vld [vmem:[%s3 + $0x570] sm:$0xff]
      %vm1363 = vcmask 130048
      %v1365 = vsel %vm1363, %v1194, 0
      %v1368 = vsel %vm1363, %v1201, 0
      %v1371 = vsel %vm1363, %v1208, 0
      %v1374 = vsel %vm1363, %v1215, 0
      %v1377 = vsel %vm1363, %v1222, 0
      %v1380 = vsel %vm1363, %v1229, 0
      %v1383 = vsel %vm1363, %v1236, 0
      %v1386 = vsel %vm1363, %v1243, 0
      %v1389 = vsel %vm1363, %v1250, 0
      %v1392 = vsel %vm1363, %v1257, 0
      %v1395 = vsel %vm1363, %v1264, 0
      %v1398 = vsel %vm1363, %v1271, 0
      %v1401 = vsel %vm1363, %v1278, 0
      %v1404 = vsel %vm1363, %v1285, 0
      %v1407 = vsel %vm1363, %v1292, 0
      %v1410 = vsel %vm1363, %v1299, 0
      %v1413 = vsel %vm1363, %v1306, 0
      %v1416 = vsel %vm1363, %v1313, 0
      %v1419 = vsel %vm1363, %v1320, 0
      %v1422 = vsel %vm1363, %v1327, 0
      %v1425 = vsel %vm1363, %v1334, 0
      %v1428 = vsel %vm1363, %v1341, 0
      %v1431 = vsel %vm1363, %v1348, 0
      %v1434 = vsel %vm1363, %v1355, 0
      %v1437 = vsel %vm1363, %v1362, 0
      %1439 = vmatprep.subr.mxu0 0.0
      %1440 = vmatpush1.msra.mxu0 %v1105
      %1441 = vmatprep.subr.mxu0 0.0
      %1442 = vmatpush1.msra.mxu0 %v1104
      %1443 = vmatprep.subr.mxu0 0.0
      %1444 = vmatpush1.msra.mxu0 %v1103
      %1445 = vmatprep.subr.mxu0 0.0
      %1446 = vmatpush1.msra.mxu0 %v1102
      %1447 = vmatprep.subr.mxu0 0.0
      %1448 = vmatpush1.msra.mxu0 %v1101
      %1449 = vmatprep.subr.mxu0 0.0
      %1450 = vmatpush1.msra.mxu0 %v1100
      %1451 = vmatprep.subr.mxu0 0.0
      %1452 = vmatpush1.msra.mxu0 %v1099
      %1453 = vmatprep.subr.mxu0 0.0
      %1454 = vmatpush1.msra.mxu0 %v1098
      %1455 = vmatprep.subr.mxu0 0.0
      %1456 = vmatpush1.msra.mxu0 %v1097
      %1457 = vmatprep.subr.mxu0 0.0
      %1458 = vmatpush1.msra.mxu0 %v1096
      %1459 = vmatprep.subr.mxu0 0.0
      %1460 = vmatpush1.msra.mxu0 %v1095
      %1461 = vmatprep.subr.mxu0 0.0
      %1462 = vmatpush1.msra.mxu0 %v1094
      %1463 = vmatprep.subr.mxu0 0.0
      %1464 = vmatpush1.msra.mxu0 %v1093
      %1465 = vmatprep.subr.mxu0 0.0
      %1466 = vmatpush1.msra.mxu0 %v1092
      %1467 = vmatprep.subr.mxu0 0.0
      %1468 = vmatpush1.msra.mxu0 %v1091
      %1469 = vmatprep.subr.mxu0 0.0
      %1470 = vmatpush1.msra.mxu0 %v1090
      %1471 = vmatprep.subr.mxu0 0.0
      %1472 = vmatpush2.msra.mxu0 %v1121
      %1473 = vmatprep.subr.mxu0 0.0
      %1474 = vmatpush2.msra.mxu0 %v1120
      %1475 = vmatprep.subr.mxu0 0.0
      %1476 = vmatpush2.msra.mxu0 %v1119
      %1477 = vmatprep.subr.mxu0 0.0
      %1478 = vmatpush2.msra.mxu0 %v1118
      %1479 = vmatprep.subr.mxu0 0.0
      %1480 = vmatpush2.msra.mxu0 %v1117
      %1481 = vmatprep.subr.mxu0 0.0
      %1482 = vmatpush2.msra.mxu0 %v1116
      %1483 = vmatprep.subr.mxu0 0.0
      %1484 = vmatpush2.msra.mxu0 %v1115
      %1485 = vmatprep.subr.mxu0 0.0
      %1486 = vmatpush2.msra.mxu0 %v1114
      %1487 = vmatprep.subr.mxu0 0.0
      %1488 = vmatpush2.msra.mxu0 %v1113
      %1489 = vmatprep.subr.mxu0 0.0
      %1490 = vmatpush2.msra.mxu0 %v1112
      %1491 = vmatprep.subr.mxu0 0.0
      %1492 = vmatpush2.msra.mxu0 %v1111
      %1493 = vmatprep.subr.mxu0 0.0
      %1494 = vmatpush2.msra.mxu0 %v1110
      %1495 = vmatprep.subr.mxu0 0.0
      %1496 = vmatpush2.msra.mxu0 %v1109
      %1497 = vmatprep.subr.mxu0 0.0
      %1498 = vmatpush2.msra.mxu0 %v1108
      %1499 = vmatprep.subr.mxu0 0.0
      %1500 = vmatpush2.msra.mxu0 %v1107
      %1501 = vmatprep.subr.mxu0 0.0
      %1502 = vmatpush2.msra.mxu0 %v1106
      %1503 = vmatprep.mubr.f32.mxu0 %v1189
      %1504 = vmatmul.mubr.f32.gmra.mxu0 %v1188
      %v1505 = vpop.f32.mrf.mxu0
      %v1506 = vadd.f32 0.0, %v1505
      %v1507 = vpop.f32.mrf.mxu0
      %1508 = vmatprep.mubr.f32.mxu0 %v1196
      %1509 = vmatmul.mubr.f32.gmra.mxu0 %v1195
      %v1510 = vpop.f32.mrf.mxu0
      %v1511 = vadd.f32 0.0, %v1510
      %v1512 = vpop.f32.mrf.mxu0
      %1513 = vmatprep.mubr.f32.mxu0 %v1203
      %1514 = vmatmul.mubr.f32.gmra.mxu0 %v1202
      %v1515 = vpop.f32.mrf.mxu0
      %v1516 = vadd.f32 0.0, %v1515
      %v1517 = vpop.f32.mrf.mxu0
      %1518 = vmatprep.mubr.f32.mxu0 %v1210
      %1519 = vmatmul.mubr.f32.gmra.mxu0 %v1209
      %v1520 = vpop.f32.mrf.mxu0
      %v1521 = vadd.f32 0.0, %v1520
      %v1522 = vpop.f32.mrf.mxu0
      %1523 = vmatprep.mubr.f32.mxu0 %v1217
      %1524 = vmatmul.mubr.f32.gmra.mxu0 %v1216
      %v1525 = vpop.f32.mrf.mxu0
      %v1526 = vadd.f32 0.0, %v1525
      %v1527 = vpop.f32.mrf.mxu0
      %1528 = vmatprep.mubr.f32.mxu0 %v1224
      %1529 = vmatmul.mubr.f32.gmra.mxu0 %v1223
      %v1530 = vpop.f32.mrf.mxu0
      %v1531 = vadd.f32 0.0, %v1530
      %v1532 = vpop.f32.mrf.mxu0
      %1533 = vmatprep.mubr.f32.mxu0 %v1231
      %1534 = vmatmul.mubr.f32.gmra.mxu0 %v1230
      %v1535 = vpop.f32.mrf.mxu0
      %v1536 = vadd.f32 0.0, %v1535
      %v1537 = vpop.f32.mrf.mxu0
      %1538 = vmatprep.mubr.f32.mxu0 %v1238
      %1539 = vmatmul.mubr.f32.gmra.mxu0 %v1237
      %v1540 = vpop.f32.mrf.mxu0
      %v1541 = vadd.f32 0.0, %v1540
      %v1542 = vpop.f32.mrf.mxu0
      %1543 = vmatprep.mubr.f32.mxu0 %v1245
      %1544 = vmatmul.mubr.f32.gmra.mxu0 %v1244
      %v1545 = vpop.f32.mrf.mxu0
      %v1546 = vadd.f32 0.0, %v1545
      %v1547 = vpop.f32.mrf.mxu0
      %1548 = vmatprep.mubr.f32.mxu0 %v1252
      %1549 = vmatmul.mubr.f32.gmra.mxu0 %v1251
      %v1550 = vpop.f32.mrf.mxu0
      %v1551 = vadd.f32 0.0, %v1550
      %v1552 = vpop.f32.mrf.mxu0
      %1553 = vmatprep.mubr.f32.mxu0 %v1259
      %1554 = vmatmul.mubr.f32.gmra.mxu0 %v1258
      %v1555 = vpop.f32.mrf.mxu0
      %v1556 = vadd.f32 0.0, %v1555
      %v1557 = vpop.f32.mrf.mxu0
      %1558 = vmatprep.mubr.f32.mxu0 %v1266
      %1559 = vmatmul.mubr.f32.gmra.mxu0 %v1265
      %v1560 = vpop.f32.mrf.mxu0
      %v1561 = vadd.f32 0.0, %v1560
      %v1562 = vpop.f32.mrf.mxu0
      %1563 = vmatprep.mubr.f32.mxu0 %v1273
      %1564 = vmatmul.mubr.f32.gmra.mxu0 %v1272
      %v1565 = vpop.f32.mrf.mxu0
      %v1566 = vadd.f32 0.0, %v1565
      %v1567 = vpop.f32.mrf.mxu0
      %1568 = vmatprep.mubr.f32.mxu0 %v1280
      %1569 = vmatmul.mubr.f32.gmra.mxu0 %v1279
      %v1570 = vpop.f32.mrf.mxu0
      %v1571 = vadd.f32 0.0, %v1570
      %v1572 = vpop.f32.mrf.mxu0
      %1573 = vmatprep.mubr.f32.mxu0 %v1287
      %1574 = vmatmul.mubr.f32.gmra.mxu0 %v1286
      %v1575 = vpop.f32.mrf.mxu0
      %v1576 = vadd.f32 0.0, %v1575
      %v1577 = vpop.f32.mrf.mxu0
      %1578 = vmatprep.mubr.f32.mxu0 %v1294
      %1579 = vmatmul.mubr.f32.gmra.mxu0 %v1293
      %v1580 = vpop.f32.mrf.mxu0
      %v1581 = vadd.f32 0.0, %v1580
      %v1582 = vpop.f32.mrf.mxu0
      %1583 = vmatprep.mubr.f32.mxu0 %v1301
      %1584 = vmatmul.mubr.f32.gmra.mxu0 %v1300
      %v1585 = vpop.f32.mrf.mxu0
      %v1586 = vadd.f32 0.0, %v1585
      %v1587 = vpop.f32.mrf.mxu0
      %1588 = vmatprep.mubr.f32.mxu0 %v1308
      %1589 = vmatmul.mubr.f32.gmra.mxu0 %v1307
      %v1590 = vpop.f32.mrf.mxu0
      %v1591 = vadd.f32 0.0, %v1590
      %v1592 = vpop.f32.mrf.mxu0
      %1593 = vmatprep.mubr.f32.mxu0 %v1315
      %1594 = vmatmul.mubr.f32.gmra.mxu0 %v1314
      %v1595 = vpop.f32.mrf.mxu0
      %v1596 = vadd.f32 0.0, %v1595
      %v1597 = vpop.f32.mrf.mxu0
      %1598 = vmatprep.mubr.f32.mxu0 %v1322
      %1599 = vmatmul.mubr.f32.gmra.mxu0 %v1321
      %v1600 = vpop.f32.mrf.mxu0
      %v1601 = vadd.f32 0.0, %v1600
      %v1602 = vpop.f32.mrf.mxu0
      %1603 = vmatprep.mubr.f32.mxu0 %v1329
      %1604 = vmatmul.mubr.f32.gmra.mxu0 %v1328
      %v1605 = vpop.f32.mrf.mxu0
      %v1606 = vadd.f32 0.0, %v1605
      %v1607 = vpop.f32.mrf.mxu0
      %1608 = vmatprep.mubr.f32.mxu0 %v1336
      %1609 = vmatmul.mubr.f32.gmra.mxu0 %v1335
      %v1610 = vpop.f32.mrf.mxu0
      %v1611 = vadd.f32 0.0, %v1610
      %v1612 = vpop.f32.mrf.mxu0
      %1613 = vmatprep.mubr.f32.mxu0 %v1343
      %1614 = vmatmul.mubr.f32.gmra.mxu0 %v1342
      %v1615 = vpop.f32.mrf.mxu0
      %v1616 = vadd.f32 0.0, %v1615
      %v1617 = vpop.f32.mrf.mxu0
      %1618 = vmatprep.mubr.f32.mxu0 %v1350
      %1619 = vmatmul.mubr.f32.gmra.mxu0 %v1349
      %v1620 = vpop.f32.mrf.mxu0
      %v1621 = vadd.f32 0.0, %v1620
      %v1622 = vpop.f32.mrf.mxu0
      %1623 = vmatprep.mubr.f32.mxu0 %v1357
      %1624 = vmatmul.mubr.f32.gmra.mxu0 %v1356
      %v1625 = vpop.f32.mrf.mxu0
      %v1626 = vadd.f32 0.0, %v1625
      %v1627 = vpop.f32.mrf.mxu0
      %1628 = vdwg.mxu0
      %1629 = vmatprep.subr.mxu0 0.0
      %1630 = vmatpush1.msra.mxu0 %v1137
      %1631 = vmatprep.subr.mxu0 0.0
      %1632 = vmatpush1.msra.mxu0 %v1136
      %1633 = vmatprep.subr.mxu0 0.0
      %1634 = vmatpush1.msra.mxu0 %v1135
      %1635 = vmatprep.subr.mxu0 0.0
      %1636 = vmatpush1.msra.mxu0 %v1134
      %1637 = vmatprep.subr.mxu0 0.0
      %1638 = vmatpush1.msra.mxu0 %v1133
      %1639 = vmatprep.subr.mxu0 0.0
      %1640 = vmatpush1.msra.mxu0 %v1132
      %1641 = vmatprep.subr.mxu0 0.0
      %1642 = vmatpush1.msra.mxu0 %v1131
      %1643 = vmatprep.subr.mxu0 0.0
      %1644 = vmatpush1.msra.mxu0 %v1130
      %1645 = vmatprep.subr.mxu0 0.0
      %1646 = vmatpush1.msra.mxu0 %v1129
      %1647 = vmatprep.subr.mxu0 0.0
      %1648 = vmatpush1.msra.mxu0 %v1128
      %1649 = vmatprep.subr.mxu0 0.0
      %1650 = vmatpush1.msra.mxu0 %v1127
      %1651 = vmatprep.subr.mxu0 0.0
      %1652 = vmatpush1.msra.mxu0 %v1126
      %1653 = vmatprep.subr.mxu0 0.0
      %1654 = vmatpush1.msra.mxu0 %v1125
      %1655 = vmatprep.subr.mxu0 0.0
      %1656 = vmatpush1.msra.mxu0 %v1124
      %1657 = vmatprep.subr.mxu0 0.0
      %1658 = vmatpush1.msra.mxu0 %v1123
      %1659 = vmatprep.subr.mxu0 0.0
      %1660 = vmatpush1.msra.mxu0 %v1122
      %1661 = vmatprep.subr.mxu0 0.0
      %1662 = vmatpush2.msra.mxu0 %v1153
      %1663 = vmatprep.subr.mxu0 0.0
      %1664 = vmatpush2.msra.mxu0 %v1152
      %1665 = vmatprep.subr.mxu0 0.0
      %1666 = vmatpush2.msra.mxu0 %v1151
      %1667 = vmatprep.subr.mxu0 0.0
      %1668 = vmatpush2.msra.mxu0 %v1150
      %1669 = vmatprep.subr.mxu0 0.0
      %1670 = vmatpush2.msra.mxu0 %v1149
      %1671 = vmatprep.subr.mxu0 0.0
      %1672 = vmatpush2.msra.mxu0 %v1148
      %1673 = vmatprep.subr.mxu0 0.0
      %1674 = vmatpush2.msra.mxu0 %v1147
      %1675 = vmatprep.subr.mxu0 0.0
      %1676 = vmatpush2.msra.mxu0 %v1146
      %1677 = vmatprep.subr.mxu0 0.0
      %1678 = vmatpush2.msra.mxu0 %v1145
      %1679 = vmatprep.subr.mxu0 0.0
      %1680 = vmatpush2.msra.mxu0 %v1144
      %1681 = vmatprep.subr.mxu0 0.0
      %1682 = vmatpush2.msra.mxu0 %v1143
      %1683 = vmatprep.subr.mxu0 0.0
      %1684 = vmatpush2.msra.mxu0 %v1142
      %1685 = vmatprep.subr.mxu0 0.0
      %1686 = vmatpush2.msra.mxu0 %v1141
      %1687 = vmatprep.subr.mxu0 0.0
      %1688 = vmatpush2.msra.mxu0 %v1140
      %1689 = vmatprep.subr.mxu0 0.0
      %1690 = vmatpush2.msra.mxu0 %v1139
      %1691 = vmatprep.subr.mxu0 0.0
      %1692 = vmatpush2.msra.mxu0 %v1138
      %1693 = vmatprep.mubr.f32.mxu0 %v1191
      %1694 = vmatmul.mubr.f32.gmra.mxu0 %v1190
      %v1695 = vpop.f32.mrf.mxu0
      %v1696 = vadd.f32 %v1506, %v1695
      %v1697 = vpop.f32.mrf.mxu0
      %1698 = vmatprep.mubr.f32.mxu0 %v1198
      %1699 = vmatmul.mubr.f32.gmra.mxu0 %v1197
      %v1700 = vpop.f32.mrf.mxu0
      %v1701 = vadd.f32 %v1511, %v1700
      %v1702 = vpop.f32.mrf.mxu0
      %1703 = vmatprep.mubr.f32.mxu0 %v1205
      %1704 = vmatmul.mubr.f32.gmra.mxu0 %v1204
      %v1705 = vpop.f32.mrf.mxu0
      %v1706 = vadd.f32 %v1516, %v1705
      %v1707 = vpop.f32.mrf.mxu0
      %1708 = vmatprep.mubr.f32.mxu0 %v1212
      %1709 = vmatmul.mubr.f32.gmra.mxu0 %v1211
      %v1710 = vpop.f32.mrf.mxu0
      %v1711 = vadd.f32 %v1521, %v1710
      %v1712 = vpop.f32.mrf.mxu0
      %1713 = vmatprep.mubr.f32.mxu0 %v1219
      %1714 = vmatmul.mubr.f32.gmra.mxu0 %v1218
      %v1715 = vpop.f32.mrf.mxu0
      %v1716 = vadd.f32 %v1526, %v1715
      %v1717 = vpop.f32.mrf.mxu0
      %1718 = vmatprep.mubr.f32.mxu0 %v1226
      %1719 = vmatmul.mubr.f32.gmra.mxu0 %v1225
      %v1720 = vpop.f32.mrf.mxu0
      %v1721 = vadd.f32 %v1531, %v1720
      %v1722 = vpop.f32.mrf.mxu0
      %1723 = vmatprep.mubr.f32.mxu0 %v1233
      %1724 = vmatmul.mubr.f32.gmra.mxu0 %v1232
      %v1725 = vpop.f32.mrf.mxu0
      %v1726 = vadd.f32 %v1536, %v1725
      %v1727 = vpop.f32.mrf.mxu0
      %1728 = vmatprep.mubr.f32.mxu0 %v1240
      %1729 = vmatmul.mubr.f32.gmra.mxu0 %v1239
      %v1730 = vpop.f32.mrf.mxu0
      %v1731 = vadd.f32 %v1541, %v1730
      %v1732 = vpop.f32.mrf.mxu0
      %1733 = vmatprep.mubr.f32.mxu0 %v1247
      %1734 = vmatmul.mubr.f32.gmra.mxu0 %v1246
      %v1735 = vpop.f32.mrf.mxu0
      %v1736 = vadd.f32 %v1546, %v1735
      %v1737 = vpop.f32.mrf.mxu0
      %1738 = vmatprep.mubr.f32.mxu0 %v1254
      %1739 = vmatmul.mubr.f32.gmra.mxu0 %v1253
      %v1740 = vpop.f32.mrf.mxu0
      %v1741 = vadd.f32 %v1551, %v1740
      %v1742 = vpop.f32.mrf.mxu0
      %1743 = vmatprep.mubr.f32.mxu0 %v1261
      %1744 = vmatmul.mubr.f32.gmra.mxu0 %v1260
      %v1745 = vpop.f32.mrf.mxu0
      %v1746 = vadd.f32 %v1556, %v1745
      %v1747 = vpop.f32.mrf.mxu0
      %1748 = vmatprep.mubr.f32.mxu0 %v1268
      %1749 = vmatmul.mubr.f32.gmra.mxu0 %v1267
      %v1750 = vpop.f32.mrf.mxu0
      %v1751 = vadd.f32 %v1561, %v1750
      %v1752 = vpop.f32.mrf.mxu0
      %1753 = vmatprep.mubr.f32.mxu0 %v1275
      %1754 = vmatmul.mubr.f32.gmra.mxu0 %v1274
      %v1755 = vpop.f32.mrf.mxu0
      %v1756 = vadd.f32 %v1566, %v1755
      %v1757 = vpop.f32.mrf.mxu0
      %1758 = vmatprep.mubr.f32.mxu0 %v1282
      %1759 = vmatmul.mubr.f32.gmra.mxu0 %v1281
      %v1760 = vpop.f32.mrf.mxu0
      %v1761 = vadd.f32 %v1571, %v1760
      %v1762 = vpop.f32.mrf.mxu0
      %1763 = vmatprep.mubr.f32.mxu0 %v1289
      %1764 = vmatmul.mubr.f32.gmra.mxu0 %v1288
      %v1765 = vpop.f32.mrf.mxu0
      %v1766 = vadd.f32 %v1576, %v1765
      %v1767 = vpop.f32.mrf.mxu0
      %1768 = vmatprep.mubr.f32.mxu0 %v1296
      %1769 = vmatmul.mubr.f32.gmra.mxu0 %v1295
      %v1770 = vpop.f32.mrf.mxu0
      %v1771 = vadd.f32 %v1581, %v1770
      %v1772 = vpop.f32.mrf.mxu0
      %1773 = vmatprep.mubr.f32.mxu0 %v1303
      %1774 = vmatmul.mubr.f32.gmra.mxu0 %v1302
      %v1775 = vpop.f32.mrf.mxu0
      %v1776 = vadd.f32 %v1586, %v1775
      %v1777 = vpop.f32.mrf.mxu0
      %1778 = vmatprep.mubr.f32.mxu0 %v1310
      %1779 = vmatmul.mubr.f32.gmra.mxu0 %v1309
      %v1780 = vpop.f32.mrf.mxu0
      %v1781 = vadd.f32 %v1591, %v1780
      %v1782 = vpop.f32.mrf.mxu0
      %1783 = vmatprep.mubr.f32.mxu0 %v1317
      %1784 = vmatmul.mubr.f32.gmra.mxu0 %v1316
      %v1785 = vpop.f32.mrf.mxu0
      %v1786 = vadd.f32 %v1596, %v1785
      %v1787 = vpop.f32.mrf.mxu0
      %1788 = vmatprep.mubr.f32.mxu0 %v1324
      %1789 = vmatmul.mubr.f32.gmra.mxu0 %v1323
      %v1790 = vpop.f32.mrf.mxu0
      %v1791 = vadd.f32 %v1601, %v1790
      %v1792 = vpop.f32.mrf.mxu0
      %1793 = vmatprep.mubr.f32.mxu0 %v1331
      %1794 = vmatmul.mubr.f32.gmra.mxu0 %v1330
      %v1795 = vpop.f32.mrf.mxu0
      %v1796 = vadd.f32 %v1606, %v1795
      %v1797 = vpop.f32.mrf.mxu0
      %1798 = vmatprep.mubr.f32.mxu0 %v1338
      %1799 = vmatmul.mubr.f32.gmra.mxu0 %v1337
      %v1800 = vpop.f32.mrf.mxu0
      %v1801 = vadd.f32 %v1611, %v1800
      %v1802 = vpop.f32.mrf.mxu0
      %1803 = vmatprep.mubr.f32.mxu0 %v1345
      %1804 = vmatmul.mubr.f32.gmra.mxu0 %v1344
      %v1805 = vpop.f32.mrf.mxu0
      %v1806 = vadd.f32 %v1616, %v1805
      %v1807 = vpop.f32.mrf.mxu0
      %1808 = vmatprep.mubr.f32.mxu0 %v1352
      %1809 = vmatmul.mubr.f32.gmra.mxu0 %v1351
      %v1810 = vpop.f32.mrf.mxu0
      %v1811 = vadd.f32 %v1621, %v1810
      %v1812 = vpop.f32.mrf.mxu0
      %1813 = vmatprep.mubr.f32.mxu0 %v1359
      %1814 = vmatmul.mubr.f32.gmra.mxu0 %v1358
      %v1815 = vpop.f32.mrf.mxu0
      %v1816 = vadd.f32 %v1626, %v1815
      %v1817 = vpop.f32.mrf.mxu0
      %1818 = vdwg.mxu0
      %1819 = vmatprep.subr.mxu0 0.0
      %1820 = vmatpush1.msra.mxu0 %v1169
      %1821 = vmatprep.subr.mxu0 0.0
      %1822 = vmatpush1.msra.mxu0 %v1168
      %1823 = vmatprep.subr.mxu0 0.0
      %1824 = vmatpush1.msra.mxu0 %v1167
      %1825 = vmatprep.subr.mxu0 0.0
      %1826 = vmatpush1.msra.mxu0 %v1166
      %1827 = vmatprep.subr.mxu0 0.0
      %1828 = vmatpush1.msra.mxu0 %v1165
      %1829 = vmatprep.subr.mxu0 0.0
      %1830 = vmatpush1.msra.mxu0 %v1164
      %1831 = vmatprep.subr.mxu0 0.0
      %1832 = vmatpush1.msra.mxu0 %v1163
      %1833 = vmatprep.subr.mxu0 0.0
      %1834 = vmatpush1.msra.mxu0 %v1162
      %1835 = vmatprep.subr.mxu0 0.0
      %1836 = vmatpush1.msra.mxu0 %v1161
      %1837 = vmatprep.subr.mxu0 0.0
      %1838 = vmatpush1.msra.mxu0 %v1160
      %1839 = vmatprep.subr.mxu0 0.0
      %1840 = vmatpush1.msra.mxu0 %v1159
      %1841 = vmatprep.subr.mxu0 0.0
      %1842 = vmatpush1.msra.mxu0 %v1158
      %1843 = vmatprep.subr.mxu0 0.0
      %1844 = vmatpush1.msra.mxu0 %v1157
      %1845 = vmatprep.subr.mxu0 0.0
      %1846 = vmatpush1.msra.mxu0 %v1156
      %1847 = vmatprep.subr.mxu0 0.0
      %1848 = vmatpush1.msra.mxu0 %v1155
      %1849 = vmatprep.subr.mxu0 0.0
      %1850 = vmatpush1.msra.mxu0 %v1154
      %1851 = vmatprep.subr.mxu0 0.0
      %1852 = vmatpush2.msra.mxu0 %v1185
      %1853 = vmatprep.subr.mxu0 0.0
      %1854 = vmatpush2.msra.mxu0 %v1184
      %1855 = vmatprep.subr.mxu0 0.0
      %1856 = vmatpush2.msra.mxu0 %v1183
      %1857 = vmatprep.subr.mxu0 0.0
      %1858 = vmatpush2.msra.mxu0 %v1182
      %1859 = vmatprep.subr.mxu0 0.0
      %1860 = vmatpush2.msra.mxu0 %v1181
      %1861 = vmatprep.subr.mxu0 0.0
      %1862 = vmatpush2.msra.mxu0 %v1180
      %1863 = vmatprep.subr.mxu0 0.0
      %1864 = vmatpush2.msra.mxu0 %v1179
      %1865 = vmatprep.subr.mxu0 0.0
      %1866 = vmatpush2.msra.mxu0 %v1178
      %1867 = vmatprep.subr.mxu0 0.0
      %1868 = vmatpush2.msra.mxu0 %v1177
      %1869 = vmatprep.subr.mxu0 0.0
      %1870 = vmatpush2.msra.mxu0 %v1176
      %1871 = vmatprep.subr.mxu0 0.0
      %1872 = vmatpush2.msra.mxu0 %v1175
      %1873 = vmatprep.subr.mxu0 0.0
      %1874 = vmatpush2.msra.mxu0 %v1174
      %1875 = vmatprep.subr.mxu0 0.0
      %1876 = vmatpush2.msra.mxu0 %v1173
      %1877 = vmatprep.subr.mxu0 0.0
      %1878 = vmatpush2.msra.mxu0 %v1172
      %1879 = vmatprep.subr.mxu0 0.0
      %1880 = vmatpush2.msra.mxu0 %v1171
      %1881 = vmatprep.subr.mxu0 0.0
      %1882 = vmatpush2.msra.mxu0 %v1170
      %1883 = vmatprep.mubr.f32.mxu0 %v1193
      %1884 = vmatmul.mubr.f32.gmra.mxu0 %v1192
      %v1885 = vpop.f32.mrf.mxu0
      %v1886 = vadd.f32 %v1696, %v1885
      %v1887 = vpop.f32.mrf.mxu0
      %1888 = vmatprep.mubr.f32.mxu0 %v1200
      %1889 = vmatmul.mubr.f32.gmra.mxu0 %v1199
      %v1890 = vpop.f32.mrf.mxu0
      %v1891 = vadd.f32 %v1701, %v1890
      %v1892 = vpop.f32.mrf.mxu0
      %1893 = vmatprep.mubr.f32.mxu0 %v1207
      %1894 = vmatmul.mubr.f32.gmra.mxu0 %v1206
      %v1895 = vpop.f32.mrf.mxu0
      %v1896 = vadd.f32 %v1706, %v1895
      %v1897 = vpop.f32.mrf.mxu0
      %1898 = vmatprep.mubr.f32.mxu0 %v1214
      %1899 = vmatmul.mubr.f32.gmra.mxu0 %v1213
      %v1900 = vpop.f32.mrf.mxu0
      %v1901 = vadd.f32 %v1711, %v1900
      %v1902 = vpop.f32.mrf.mxu0
      %1903 = vmatprep.mubr.f32.mxu0 %v1221
      %1904 = vmatmul.mubr.f32.gmra.mxu0 %v1220
      %v1905 = vpop.f32.mrf.mxu0
      %v1906 = vadd.f32 %v1716, %v1905
      %v1907 = vpop.f32.mrf.mxu0
      %1908 = vmatprep.mubr.f32.mxu0 %v1228
      %1909 = vmatmul.mubr.f32.gmra.mxu0 %v1227
      %v1910 = vpop.f32.mrf.mxu0
      %v1911 = vadd.f32 %v1721, %v1910
      %v1912 = vpop.f32.mrf.mxu0
      %1913 = vmatprep.mubr.f32.mxu0 %v1235
      %1914 = vmatmul.mubr.f32.gmra.mxu0 %v1234
      %v1915 = vpop.f32.mrf.mxu0
      %v1916 = vadd.f32 %v1726, %v1915
      %v1917 = vpop.f32.mrf.mxu0
      %1918 = vmatprep.mubr.f32.mxu0 %v1242
      %1919 = vmatmul.mubr.f32.gmra.mxu0 %v1241
      %v1920 = vpop.f32.mrf.mxu0
      %v1921 = vadd.f32 %v1731, %v1920
      %v1922 = vpop.f32.mrf.mxu0
      %1923 = vmatprep.mubr.f32.mxu0 %v1249
      %1924 = vmatmul.mubr.f32.gmra.mxu0 %v1248
      %v1925 = vpop.f32.mrf.mxu0
      %v1926 = vadd.f32 %v1736, %v1925
      %v1927 = vpop.f32.mrf.mxu0
      %1928 = vmatprep.mubr.f32.mxu0 %v1256
      %1929 = vmatmul.mubr.f32.gmra.mxu0 %v1255
      %v1930 = vpop.f32.mrf.mxu0
      %v1931 = vadd.f32 %v1741, %v1930
      %v1932 = vpop.f32.mrf.mxu0
      %1933 = vmatprep.mubr.f32.mxu0 %v1263
      %1934 = vmatmul.mubr.f32.gmra.mxu0 %v1262
      %v1935 = vpop.f32.mrf.mxu0
      %v1936 = vadd.f32 %v1746, %v1935
      %v1937 = vpop.f32.mrf.mxu0
      %1938 = vmatprep.mubr.f32.mxu0 %v1270
      %1939 = vmatmul.mubr.f32.gmra.mxu0 %v1269
      %v1940 = vpop.f32.mrf.mxu0
      %v1941 = vadd.f32 %v1751, %v1940
      %v1942 = vpop.f32.mrf.mxu0
      %1943 = vmatprep.mubr.f32.mxu0 %v1277
      %1944 = vmatmul.mubr.f32.gmra.mxu0 %v1276
      %v1945 = vpop.f32.mrf.mxu0
      %v1946 = vadd.f32 %v1756, %v1945
      %v1947 = vpop.f32.mrf.mxu0
      %1948 = vmatprep.mubr.f32.mxu0 %v1284
      %1949 = vmatmul.mubr.f32.gmra.mxu0 %v1283
      %v1950 = vpop.f32.mrf.mxu0
      %v1951 = vadd.f32 %v1761, %v1950
      %v1952 = vpop.f32.mrf.mxu0
      %1953 = vmatprep.mubr.f32.mxu0 %v1291
      %1954 = vmatmul.mubr.f32.gmra.mxu0 %v1290
      %v1955 = vpop.f32.mrf.mxu0
      %v1956 = vadd.f32 %v1766, %v1955
      %v1957 = vpop.f32.mrf.mxu0
      %1958 = vmatprep.mubr.f32.mxu0 %v1298
      %1959 = vmatmul.mubr.f32.gmra.mxu0 %v1297
      %v1960 = vpop.f32.mrf.mxu0
      %v1961 = vadd.f32 %v1771, %v1960
      %v1962 = vpop.f32.mrf.mxu0
      %1963 = vmatprep.mubr.f32.mxu0 %v1305
      %1964 = vmatmul.mubr.f32.gmra.mxu0 %v1304
      %v1965 = vpop.f32.mrf.mxu0
      %v1966 = vadd.f32 %v1776, %v1965
      %v1967 = vpop.f32.mrf.mxu0
      %1968 = vmatprep.mubr.f32.mxu0 %v1312
      %1969 = vmatmul.mubr.f32.gmra.mxu0 %v1311
      %v1970 = vpop.f32.mrf.mxu0
      %v1971 = vadd.f32 %v1781, %v1970
      %v1972 = vpop.f32.mrf.mxu0
      %1973 = vmatprep.mubr.f32.mxu0 %v1319
      %1974 = vmatmul.mubr.f32.gmra.mxu0 %v1318
      %v1975 = vpop.f32.mrf.mxu0
      %v1976 = vadd.f32 %v1786, %v1975
      %v1977 = vpop.f32.mrf.mxu0
      %1978 = vmatprep.mubr.f32.mxu0 %v1326
      %1979 = vmatmul.mubr.f32.gmra.mxu0 %v1325
      %v1980 = vpop.f32.mrf.mxu0
      %v1981 = vadd.f32 %v1791, %v1980
      %v1982 = vpop.f32.mrf.mxu0
      %1983 = vmatprep.mubr.f32.mxu0 %v1333
      %1984 = vmatmul.mubr.f32.gmra.mxu0 %v1332
      %v1985 = vpop.f32.mrf.mxu0
      %v1986 = vadd.f32 %v1796, %v1985
      %v1987 = vpop.f32.mrf.mxu0
      %1988 = vmatprep.mubr.f32.mxu0 %v1340
      %1989 = vmatmul.mubr.f32.gmra.mxu0 %v1339
      %v1990 = vpop.f32.mrf.mxu0
      %v1991 = vadd.f32 %v1801, %v1990
      %v1992 = vpop.f32.mrf.mxu0
      %1993 = vmatprep.mubr.f32.mxu0 %v1347
      %1994 = vmatmul.mubr.f32.gmra.mxu0 %v1346
      %v1995 = vpop.f32.mrf.mxu0
      %v1996 = vadd.f32 %v1806, %v1995
      %v1997 = vpop.f32.mrf.mxu0
      %1998 = vmatprep.mubr.f32.mxu0 %v1354
      %1999 = vmatmul.mubr.f32.gmra.mxu0 %v1353
      %v2000 = vpop.f32.mrf.mxu0
      %v2001 = vadd.f32 %v1811, %v2000
      %v2002 = vpop.f32.mrf.mxu0
      %2003 = vmatprep.mubr.f32.mxu0 %v1361
      %2004 = vmatmul.mubr.f32.gmra.mxu0 %v1360
      %v2005 = vpop.f32.mrf.mxu0
      %v2006 = vadd.f32 %v1816, %v2005
      %v2007 = vpop.f32.mrf.mxu0
      %2008 = vdwg.mxu0
      %2009 = vmatprep.subr.mxu0 0.0
      %2010 = vmatpush1.msra.mxu0 0.0
      %2011 = vmatprep.subr.mxu0 0.0
      %2012 = vmatpush1.msra.mxu0 0.0
      %2013 = vmatprep.subr.mxu0 0.0
      %2014 = vmatpush1.msra.mxu0 0.0
      %2015 = vmatprep.subr.mxu0 0.0
      %2016 = vmatpush1.msra.mxu0 0.0
      %2017 = vmatprep.subr.mxu0 0.0
      %2018 = vmatpush1.msra.mxu0 0.0
      %2019 = vmatprep.subr.mxu0 0.0
      %2020 = vmatpush1.msra.mxu0 0.0
      %2021 = vmatprep.subr.mxu0 0.0
      %2022 = vmatpush1.msra.mxu0 0.0
      %2023 = vmatprep.subr.mxu0 0.0
      %2024 = vmatpush1.msra.mxu0 0.0
      %2025 = vmatprep.subr.mxu0 0.0
      %2026 = vmatpush1.msra.mxu0 0.0
      %2027 = vmatprep.subr.mxu0 0.0
      %2028 = vmatpush1.msra.mxu0 0.0
      %2029 = vmatprep.subr.mxu0 0.0
      %2030 = vmatpush1.msra.mxu0 0.0
      %2031 = vmatprep.subr.mxu0 0.0
      %2032 = vmatpush1.msra.mxu0 0.0
      %2033 = vmatprep.subr.mxu0 0.0
      %2034 = vmatpush1.msra.mxu0 0.0
      %2035 = vmatprep.subr.mxu0 0.0
      %2036 = vmatpush1.msra.mxu0 0.0
      %2037 = vmatprep.subr.mxu0 0.0
      %2038 = vmatpush1.msra.mxu0 %v1187
      %2039 = vmatprep.subr.mxu0 0.0
      %2040 = vmatpush1.msra.mxu0 %v1186
      %2041 = vmatprep.subr.mxu0 0.0
      %2042 = vmatpush2.msra.mxu0 0.0
      %2043 = vmatprep.subr.mxu0 0.0
      %2044 = vmatpush2.msra.mxu0 0.0
      %2045 = vmatprep.subr.mxu0 0.0
      %2046 = vmatpush2.msra.mxu0 0.0
      %2047 = vmatprep.subr.mxu0 0.0
      %2048 = vmatpush2.msra.mxu0 0.0
      %2049 = vmatprep.subr.mxu0 0.0
      %2050 = vmatpush2.msra.mxu0 0.0
      %2051 = vmatprep.subr.mxu0 0.0
      %2052 = vmatpush2.msra.mxu0 0.0
      %2053 = vmatprep.subr.mxu0 0.0
      %2054 = vmatpush2.msra.mxu0 0.0
      %2055 = vmatprep.subr.mxu0 0.0
      %2056 = vmatpush2.msra.mxu0 0.0
      %2057 = vmatprep.subr.mxu0 0.0
      %2058 = vmatpush2.msra.mxu0 0.0
      %2059 = vmatprep.subr.mxu0 0.0
      %2060 = vmatpush2.msra.mxu0 0.0
      %2061 = vmatprep.subr.mxu0 0.0
      %2062 = vmatpush2.msra.mxu0 0.0
      %2063 = vmatprep.subr.mxu0 0.0
      %2064 = vmatpush2.msra.mxu0 0.0
      %2065 = vmatprep.subr.mxu0 0.0
      %2066 = vmatpush2.msra.mxu0 0.0
      %2067 = vmatprep.subr.mxu0 0.0
      %2068 = vmatpush2.msra.mxu0 0.0
      %2069 = vmatprep.subr.mxu0 0.0
      %2070 = vmatpush2.msra.mxu0 0.0
      %2071 = vmatprep.subr.mxu0 0.0
      %2072 = vmatpush2.msra.mxu0 0.0
      %2073 = vmatprep.mubr.f32.mxu0 0.0
      %2074 = vmatmul.mubr.f32.gmra.mxu0 %v1365
      %v2075 = vpop.f32.mrf.mxu0
      %v2076 = vadd.f32 %v1886, %v2075
      %v2077 = vpop.f32.mrf.mxu0
      %2078 = vmatprep.mubr.f32.mxu0 0.0
      %2079 = vmatmul.mubr.f32.gmra.mxu0 %v1368
      %v2080 = vpop.f32.mrf.mxu0
      %v2081 = vadd.f32 %v1891, %v2080
      %v2082 = vpop.f32.mrf.mxu0
      %2083 = vmatprep.mubr.f32.mxu0 0.0
      %2084 = vmatmul.mubr.f32.gmra.mxu0 %v1371
      %v2085 = vpop.f32.mrf.mxu0
      %v2086 = vadd.f32 %v1896, %v2085
      %v2087 = vpop.f32.mrf.mxu0
      %2088 = vmatprep.mubr.f32.mxu0 0.0
      %2089 = vmatmul.mubr.f32.gmra.mxu0 %v1374
      %v2090 = vpop.f32.mrf.mxu0
      %v2091 = vadd.f32 %v1901, %v2090
      %v2092 = vpop.f32.mrf.mxu0
      %2093 = vmatprep.mubr.f32.mxu0 0.0
      %2094 = vmatmul.mubr.f32.gmra.mxu0 %v1377
      %v2095 = vpop.f32.mrf.mxu0
      %v2096 = vadd.f32 %v1906, %v2095
      %v2097 = vpop.f32.mrf.mxu0
      %2098 = vmatprep.mubr.f32.mxu0 0.0
      %2099 = vmatmul.mubr.f32.gmra.mxu0 %v1380
      %v2100 = vpop.f32.mrf.mxu0
      %v2101 = vadd.f32 %v1911, %v2100
      %v2102 = vpop.f32.mrf.mxu0
      %2103 = vmatprep.mubr.f32.mxu0 0.0
      %2104 = vmatmul.mubr.f32.gmra.mxu0 %v1383
      %v2105 = vpop.f32.mrf.mxu0
      %v2106 = vadd.f32 %v1916, %v2105
      %v2107 = vpop.f32.mrf.mxu0
      %2108 = vmatprep.mubr.f32.mxu0 0.0
      %2109 = vmatmul.mubr.f32.gmra.mxu0 %v1386
      %v2110 = vpop.f32.mrf.mxu0
      %v2111 = vadd.f32 %v1921, %v2110
      %v2112 = vpop.f32.mrf.mxu0
      %2113 = vmatprep.mubr.f32.mxu0 0.0
      %2114 = vmatmul.mubr.f32.gmra.mxu0 %v1389
      %v2115 = vpop.f32.mrf.mxu0
      %v2116 = vadd.f32 %v1926, %v2115
      %v2117 = vpop.f32.mrf.mxu0
      %2118 = vmatprep.mubr.f32.mxu0 0.0
      %2119 = vmatmul.mubr.f32.gmra.mxu0 %v1392
      %v2120 = vpop.f32.mrf.mxu0
      %v2121 = vadd.f32 %v1931, %v2120
      %v2122 = vpop.f32.mrf.mxu0
      %2123 = vmatprep.mubr.f32.mxu0 0.0
      %2124 = vmatmul.mubr.f32.gmra.mxu0 %v1395
      %v2125 = vpop.f32.mrf.mxu0
      %v2126 = vadd.f32 %v1936, %v2125
      %v2127 = vpop.f32.mrf.mxu0
      %2128 = vmatprep.mubr.f32.mxu0 0.0
      %2129 = vmatmul.mubr.f32.gmra.mxu0 %v1398
      %v2130 = vpop.f32.mrf.mxu0
      %v2131 = vadd.f32 %v1941, %v2130
      %v2132 = vpop.f32.mrf.mxu0
      %2133 = vmatprep.mubr.f32.mxu0 0.0
      %2134 = vmatmul.mubr.f32.gmra.mxu0 %v1401
      %v2135 = vpop.f32.mrf.mxu0
      %v2136 = vadd.f32 %v1946, %v2135
      %v2137 = vpop.f32.mrf.mxu0
      %2138 = vmatprep.mubr.f32.mxu0 0.0
      %2139 = vmatmul.mubr.f32.gmra.mxu0 %v1404
      %v2140 = vpop.f32.mrf.mxu0
      %v2141 = vadd.f32 %v1951, %v2140
      %v2142 = vpop.f32.mrf.mxu0
      %2143 = vmatprep.mubr.f32.mxu0 0.0
      %2144 = vmatmul.mubr.f32.gmra.mxu0 %v1407
      %v2145 = vpop.f32.mrf.mxu0
      %v2146 = vadd.f32 %v1956, %v2145
      %v2147 = vpop.f32.mrf.mxu0
      %2148 = vmatprep.mubr.f32.mxu0 0.0
      %2149 = vmatmul.mubr.f32.gmra.mxu0 %v1410
      %v2150 = vpop.f32.mrf.mxu0
      %v2151 = vadd.f32 %v1961, %v2150
      %v2152 = vpop.f32.mrf.mxu0
      %2153 = vmatprep.mubr.f32.mxu0 0.0
      %2154 = vmatmul.mubr.f32.gmra.mxu0 %v1413
      %v2155 = vpop.f32.mrf.mxu0
      %v2156 = vadd.f32 %v1966, %v2155
      %v2157 = vpop.f32.mrf.mxu0
      %2158 = vmatprep.mubr.f32.mxu0 0.0
      %2159 = vmatmul.mubr.f32.gmra.mxu0 %v1416
      %v2160 = vpop.f32.mrf.mxu0
      %v2161 = vadd.f32 %v1971, %v2160
      %v2162 = vpop.f32.mrf.mxu0
      %2163 = vmatprep.mubr.f32.mxu0 0.0
      %2164 = vmatmul.mubr.f32.gmra.mxu0 %v1419
      %v2165 = vpop.f32.mrf.mxu0
      %v2166 = vadd.f32 %v1976, %v2165
      %v2167 = vpop.f32.mrf.mxu0
      %2168 = vmatprep.mubr.f32.mxu0 0.0
      %2169 = vmatmul.mubr.f32.gmra.mxu0 %v1422
      %v2170 = vpop.f32.mrf.mxu0
      %v2171 = vadd.f32 %v1981, %v2170
      %v2172 = vpop.f32.mrf.mxu0
      %2173 = vmatprep.mubr.f32.mxu0 0.0
      %2174 = vmatmul.mubr.f32.gmra.mxu0 %v1425
      %v2175 = vpop.f32.mrf.mxu0
      %v2176 = vadd.f32 %v1986, %v2175
      %v2177 = vpop.f32.mrf.mxu0
      %2178 = vmatprep.mubr.f32.mxu0 0.0
      %2179 = vmatmul.mubr.f32.gmra.mxu0 %v1428
      %v2180 = vpop.f32.mrf.mxu0
      %v2181 = vadd.f32 %v1991, %v2180
      %v2182 = vpop.f32.mrf.mxu0
      %2183 = vmatprep.mubr.f32.mxu0 0.0
      %2184 = vmatmul.mubr.f32.gmra.mxu0 %v1431
      %v2185 = vpop.f32.mrf.mxu0
      %v2186 = vadd.f32 %v1996, %v2185
      %v2187 = vpop.f32.mrf.mxu0
      %2188 = vmatprep.mubr.f32.mxu0 0.0
      %2189 = vmatmul.mubr.f32.gmra.mxu0 %v1434
      %v2190 = vpop.f32.mrf.mxu0
      %v2191 = vadd.f32 %v2001, %v2190
      %v2192 = vpop.f32.mrf.mxu0
      %2193 = vmatprep.mubr.f32.mxu0 0.0
      %2194 = vmatmul.mubr.f32.gmra.mxu0 %v1437
      %v2195 = vpop.f32.mrf.mxu0
      %v2196 = vadd.f32 %v2006, %v2195
      %v2197 = vpop.f32.mrf.mxu0
      %2198 = vdwg.mxu0
      %2199 = vst [vmem:[%s199] sm:$0xff] %v2076
      %2200 = vst [vmem:[%s199 + $0x8] sm:$0xff] %v2081
      %2201 = vst [vmem:[%s199 + $0x10] sm:$0xff] %v2086
      %2202 = vst [vmem:[%s199 + $0x18] sm:$0xff] %v2091
      %2203 = vst [vmem:[%s199 + $0x20] sm:$0xff] %v2096
      %2204 = vst [vmem:[%s199 + $0x28] sm:$0xff] %v2101
      %2205 = vst [vmem:[%s199 + $0x30] sm:$0xff] %v2106
      %2206 = vst [vmem:[%s199 + $0x38] sm:$0xff] %v2111
      %2207 = vst [vmem:[%s199 + $0x40] sm:$0xff] %v2116
      %2208 = vst [vmem:[%s199 + $0x48] sm:$0xff] %v2121
      %2209 = vst [vmem:[%s199 + $0x50] sm:$0xff] %v2126
      %2210 = vst [vmem:[%s199 + $0x58] sm:$0xff] %v2131
      %2211 = vst [vmem:[%s199 + $0x60] sm:$0xff] %v2136
      %2212 = vst [vmem:[%s199 + $0x68] sm:$0xff] %v2141
      %2213 = vst [vmem:[%s199 + $0x70] sm:$0xff] %v2146
      %2214 = vst [vmem:[%s199 + $0x78] sm:$0xff] %v2151
      %2215 = vst [vmem:[%s199 + $0x80] sm:$0xff] %v2156
      %2216 = vst [vmem:[%s199 + $0x88] sm:$0xff] %v2161
      %2217 = vst [vmem:[%s199 + $0x90] sm:$0xff] %v2166
      %2218 = vst [vmem:[%s199 + $0x98] sm:$0xff] %v2171
      %2219 = vst [vmem:[%s199 + $0xa0] sm:$0xff] %v2176
      %2220 = vst [vmem:[%s199 + $0xa8] sm:$0xff] %v2181
      %2221 = vst [vmem:[%s199 + $0xb0] sm:$0xff] %v2186
      %2222 = vst [vmem:[%s199 + $0xb8] sm:$0xff] %v2191
      %2223 = vst [vmem:[%s199 + $0xc0] sm:$0xff] %v2196
      %s2224 = smul.u32 25, %s15
      %p2225 = scmp.lt.s32.totalorder %s2224, 49
      %s2226 = scalar_select %p2225, %s2224, 49
      %s2227 = smul.addr %s2226, 8
      %s2228 = scalar_lea.vmem %s4, %s2227
      // Predicated region
      $region37: #{lenet5_forward.3} parent=35 // pred_check
        %p2229 = pneg %p122
      $region38: #{lenet5_forward.3} parent=35 // pred_check_branch
        %2231 = sbr.rel (%p2229) target = $region40
      $region39: #{lenet5_forward.3} parent=35 // pred_region
        %s2232 = smul.u32 25, %s15
      $region40: #{lenet5_forward.3} parent=35 // pred_fallthru
        _
    $region36: #{lenet5_forward.3} parent=5 // pred_fallthru
      _
    %p2233 = scmp.le.s32.totalorder 2, %s10
    // Predicated region
    $region41: #{lenet5_forward.3} parent=5 // pred_check
      %p2234 = pneg %p2233
    $region42: #{lenet5_forward.3} parent=5 // pred_check_branch
      %2236 = sbr.rel (%p2234) target = $region44
    $region43: #{lenet5_forward.3} parent=5 // pred_region
      %s2237 = ssub.s32 %s10, 2
      // Predicated region
      $region45: #{lenet5_forward.3} parent=43 // pred_check
        %p2238 = pneg %p128
      $region46: #{lenet5_forward.3} parent=43 // pred_check_branch
        %2240 = sbr.rel (%p2238) target = $region48
      $region47: #{lenet5_forward.3} parent=43 // pred_region
        %s2241 = smul.u32 25, %s16
        %p2242 = scmp.lt.s32.totalorder %s2241, 49
        %s2243 = scalar_select %p2242, %s2241, 49
        %s2244 = smul.addr %s2243, 8
        %s2245 = scalar_lea.vmem %s4, %s2244
      $region48: #{lenet5_forward.3} parent=43 // pred_fallthru
        _
    $region44: #{lenet5_forward.3} parent=5 // pred_fallthru
      _
  $region6: #{lenet5_forward.3} parent=0 // loop_footer
    %s14 = sadd.s32 1, %s10
  $region7: #{lenet5_forward.3} parent=0 // loop_footer_branch
    %9 = sbr.rel target = $region3
  $region8: #{lenet5_forward.3} parent=0 // loop_exit
    _

// kernel: lenet5_forward.4
$region0: #{lenet5_forward.4}
  #allocation0 [shape = 'u32[]', space=smem, size = 0x4, offset = 0x4, fixed_abs, tag = 'smem constant byte address 0x4 - core index']
  #allocation1 [shape = 'u32[144,128]{1,0:T(1,128)}', space=vmem, size = 0x12000, scoped, tag = 'internal scratch']
  %s0 = inlined_call_operand.vmem [shape: bf16[256,256], index: 0, kind: input, shape index: {}]
  %s1 = inlined_call_operand.vmem [shape: bf16[256,128], index: 1, kind: input, shape index: {}]
  %s2 = inlined_call_operand.vmem [shape: f32[1,128], index: 2, kind: input, shape index: {}]
  %s3 = inlined_call_operand.vmem [shape: f32[32,128], index: 3, kind: input, shape index: {}]
  %s4 = inlined_call_operand.vmem [shape: f32[64,128], index: 4, kind: output, shape index: {}]
  %s5 = sld [smem:[#allocation0]]
  $region49: #{lenet5_forward.4} parent=0
    _
  %s7 = ssub.s32 1, %s5
  %s8 = scalar_select 0, %s7, %s5
  loop: start=0, step=1, limit=4
  $region2: #{lenet5_forward.4} parent=0 // loop_pre_header
    _
  $region3: #{lenet5_forward.4} parent=0 // loop_header
    %s10 = sphi 0, %s14
    %p11 = scmp.ge.s32.totalorder %s10, 4
    %s20 = sphi 0, %s22
    %s23 = sphi 0, %s20
    %s24 = sphi 0, %s23
    %s40 = sphi 0, %s24
    %s44 = sphi 0, %s44
    %s46 = sphi 0, %s44
    %s47 = sphi 0, %s46
    %s61 = sphi 0, %s47
    %s65 = sphi 0, %s65
    %s67 = sphi 0, %s65
    %s68 = sphi 0, %s67
    %s82 = sphi 0, %s68
    %s86 = sphi 0, %s86
    %s88 = sphi 0, %s86
    %s89 = sphi 0, %s88
    %s103 = sphi 0, %s89
    %s109 = sphi 0, %s111
    %s112 = sphi 0, %s109
    %s113 = sphi 0, %s112
    %s129 = sphi 0, %s113
  $region4: #{lenet5_forward.4} parent=0 // loop_header_branch
    %13 = sbr.rel (%p11) target = $region8
  $region5: #{lenet5_forward.4} parent=0 // loop_body
    %s15 = ssub.s32 %s10, 1
    %s16 = ssub.s32 %s10, 2
    %s17 = sadd.s32 %s10, 1
    %s18 = ssub.s32 %s10, %s17
    %p19 = scmp.eq.s32.totalorder %s18, 0
    %s21 = sadd.s32 %s20, 1
    %s22 = scalar_select %p19, %s20, %s21
    %p25 = pneg %p19
    %p26 = scmp.eq.s32.totalorder %s10, 1
    %p27 = por %p25, %p26
    %p28 = scmp.ne.s32.totalorder %s20, %s23
    %p29 = scmp.eq.s32.totalorder %s10, 0
    %p30 = por %p28, %p29
    %p31 = scmp.ne.s32.totalorder %s20, %s23
    %p32 = scmp.eq.s32.totalorder %s15, 1
    %p33 = por %p31, %p32
    %p34 = scmp.ne.s32.totalorder %s23, %s24
    %p35 = scmp.eq.s32.totalorder %s15, 0
    %p36 = por %p34, %p35
    %p37 = scmp.ne.s32.totalorder %s23, %s24
    %p38 = scmp.eq.s32.totalorder %s16, 1
    %p39 = por %p37, %p38
    %p41 = scmp.ne.s32.totalorder %s24, %s40
    %p42 = scmp.eq.s32.totalorder %s16, 0
    %p43 = por %p41, %p42
    %s45 = sadd.s32 %s44, 1
    %p48 = scmp.eq.s32.totalorder %s10, 1
    %p49 = scmp.ne.s32.totalorder %s44, %s46
    %p50 = scmp.eq.s32.totalorder %s10, 0
    %p51 = por %p49, %p50
    %p52 = scmp.ne.s32.totalorder %s44, %s46
    %p53 = scmp.eq.s32.totalorder %s15, 1
    %p54 = por %p52, %p53
    %p55 = scmp.ne.s32.totalorder %s46, %s47
    %p56 = scmp.eq.s32.totalorder %s15, 0
    %p57 = por %p55, %p56
    %p58 = scmp.ne.s32.totalorder %s46, %s47
    %p59 = scmp.eq.s32.totalorder %s16, 1
    %p60 = por %p58, %p59
    %p62 = scmp.ne.s32.totalorder %s47, %s61
    %p63 = scmp.eq.s32.totalorder %s16, 0
    %p64 = por %p62, %p63
    %s66 = sadd.s32 %s65, 1
    %p69 = scmp.eq.s32.totalorder %s10, 1
    %p70 = scmp.ne.s32.totalorder %s65, %s67
    %p71 = scmp.eq.s32.totalorder %s10, 0
    %p72 = por %p70, %p71
    %p73 = scmp.ne.s32.totalorder %s65, %s67
    %p74 = scmp.eq.s32.totalorder %s15, 1
    %p75 = por %p73, %p74
    %p76 = scmp.ne.s32.totalorder %s67, %s68
    %p77 = scmp.eq.s32.totalorder %s15, 0
    %p78 = por %p76, %p77
    %p79 = scmp.ne.s32.totalorder %s67, %s68
    %p80 = scmp.eq.s32.totalorder %s16, 1
    %p81 = por %p79, %p80
    %p83 = scmp.ne.s32.totalorder %s68, %s82
    %p84 = scmp.eq.s32.totalorder %s16, 0
    %p85 = por %p83, %p84
    %s87 = sadd.s32 %s86, 1
    %p90 = scmp.eq.s32.totalorder %s10, 1
    %p91 = scmp.ne.s32.totalorder %s86, %s88
    %p92 = scmp.eq.s32.totalorder %s10, 0
    %p93 = por %p91, %p92
    %p94 = scmp.ne.s32.totalorder %s86, %s88
    %p95 = scmp.eq.s32.totalorder %s15, 1
    %p96 = por %p94, %p95
    %p97 = scmp.ne.s32.totalorder %s88, %s89
    %p98 = scmp.eq.s32.totalorder %s15, 0
    %p99 = por %p97, %p98
    %p100 = scmp.ne.s32.totalorder %s88, %s89
    %p101 = scmp.eq.s32.totalorder %s16, 1
    %p102 = por %p100, %p101
    %p104 = scmp.ne.s32.totalorder %s89, %s103
    %p105 = scmp.eq.s32.totalorder %s16, 0
    %p106 = por %p104, %p105
    %s107 = ssub.s32 %s10, %s17
    %p108 = scmp.eq.s32.totalorder %s107, 0
    %s110 = sadd.s32 %s109, 1
    %s111 = scalar_select %p108, %s109, %s110
    %p114 = pneg %p108
    %p115 = scmp.eq.s32.totalorder %s10, 1
    %p116 = por %p114, %p115
    %p117 = scmp.ne.s32.totalorder %s109, %s112
    %p118 = scmp.eq.s32.totalorder %s10, 0
    %p119 = por %p117, %p118
    %p120 = scmp.ne.s32.totalorder %s109, %s112
    %p121 = scmp.eq.s32.totalorder %s15, 1
    %p122 = por %p120, %p121
    %p123 = scmp.ne.s32.totalorder %s112, %s113
    %p124 = scmp.eq.s32.totalorder %s15, 0
    %p125 = por %p123, %p124
    %p126 = scmp.ne.s32.totalorder %s112, %s113
    %p127 = scmp.eq.s32.totalorder %s16, 1
    %p128 = por %p126, %p127
    %p130 = scmp.ne.s32.totalorder %s113, %s129
    %p131 = scmp.eq.s32.totalorder %s16, 0
    %p132 = por %p130, %p131
    %p133 = scmp.le.s32.totalorder 1, %s10
    %p134 = scmp.lt.s32.totalorder %s10, 3
    %p135 = pnand %p133, %p134
    %p136 = pneg %p135
    // Predicated region
    $region9: #{lenet5_forward.4} parent=5 // pred_check
      _
    $region10: #{lenet5_forward.4} parent=5 // pred_check_branch
      %138 = sbr.rel (%p135) target = $region12
    $region11: #{lenet5_forward.4} parent=5 // pred_region
      %s139 = ssub.s32 %s10, 1
      // Predicated region
      $region13: #{lenet5_forward.4} parent=11 // pred_check
        %p140 = pneg %p57
      $region14: #{lenet5_forward.4} parent=11 // pred_check_branch
        %142 = sbr.rel (%p140) target = $region16
      $region15: #{lenet5_forward.4} parent=11 // pred_region
        _
      $region16: #{lenet5_forward.4} parent=11 // pred_fallthru
        _
      // Predicated region
      $region17: #{lenet5_forward.4} parent=11 // pred_check
        %p143 = pneg %p78
      $region18: #{lenet5_forward.4} parent=11 // pred_check_branch
        %145 = sbr.rel (%p143) target = $region20
      $region19: #{lenet5_forward.4} parent=11 // pred_region
        _
      $region20: #{lenet5_forward.4} parent=11 // pred_fallthru
        _
      // Predicated region
      $region21: #{lenet5_forward.4} parent=11 // pred_check
        %p146 = pneg %p99
      $region22: #{lenet5_forward.4} parent=11 // pred_check_branch
        %148 = sbr.rel (%p146) target = $region24
      $region23: #{lenet5_forward.4} parent=11 // pred_region
        _
      $region24: #{lenet5_forward.4} parent=11 // pred_fallthru
        _
    $region12: #{lenet5_forward.4} parent=5 // pred_fallthru
      _
    %p149 = scmp.lt.s32.totalorder %s10, 2
    // Predicated region
    $region25: #{lenet5_forward.4} parent=5 // pred_check
      %p150 = pneg %p149
    $region26: #{lenet5_forward.4} parent=5 // pred_check_branch
      %152 = sbr.rel (%p150) target = $region28
    $region27: #{lenet5_forward.4} parent=5 // pred_region
      // Predicated region
      $region29: #{lenet5_forward.4} parent=27 // pred_check
        %p153 = pneg %p30
      $region30: #{lenet5_forward.4} parent=27 // pred_check_branch
        %155 = sbr.rel (%p153) target = $region32
      $region31: #{lenet5_forward.4} parent=27 // pred_region
        %s156 = smul.u32 16, %s10
        %p157 = scmp.lt.s32.totalorder %s156, 31
        %s158 = scalar_select %p157, %s156, 31
        %s159 = smul.addr %s158, 2
        %s160 = smul.addr %s159, 4
        %s161 = scalar_lea.vmem %s0, %s160
        %s162 = smul.u32 16, %s10
      $region32: #{lenet5_forward.4} parent=27 // pred_fallthru
        _
    $region28: #{lenet5_forward.4} parent=5 // pred_fallthru
      _
    %p163 = scmp.le.s32.totalorder 1, %s10
    %p164 = scmp.lt.s32.totalorder %s10, 3
    %p165 = pnand %p163, %p164
    %p166 = pneg %p165
    // Predicated region
    $region33: #{lenet5_forward.4} parent=5 // pred_check
      _
    $region34: #{lenet5_forward.4} parent=5 // pred_check_branch
      %168 = sbr.rel (%p165) target = $region36
    $region35: #{lenet5_forward.4} parent=5 // pred_region
      %s169 = ssub.s32 %s10, 1
      %s170 = smul.u32 16, %s15
      %p171 = scmp.lt.s32.totalorder %s170, 31
      %s172 = scalar_select %p171, %s170, 31
      %s173 = smul.addr %s172, 2
      %s174 = smul.addr %s173, 4
      %s175 = scalar_lea.vmem %s0, %s174
      %p176 = pneg %p36
      %p177 = pneg %p33
      %p178 = pneg %p57
      %p179 = pneg %p54
      %p180 = pneg %p78
      %p181 = pneg %p75
      %p182 = pneg %p99
      %p183 = pneg %p96
      %p184 = pneg %p125
      %p185 = pneg %p122
      %s186 = smul.u32 4, %s15
      %p187 = scmp.lt.s32.totalorder %s186, 7
      %s188 = scalar_select %p187, %s186, 7
      %s189 = smul.addr %s188, 8
      %s190 = scalar_lea.vmem %s4, %s189
      %s191 = smul.u32 16, %s15
      %p192 = scmp.lt.s32.totalorder %s191, 31
      %s193 = scalar_select %p192, %s191, 31
      %s194 = smul.addr %s193, 2
      %s195 = smul.addr %s194, 4
      %s196 = scalar_lea.vmem %s0, %s195
      %s197 = smul.u32 16, %s15
      %s198 = smul.u32 4, %s15
      %p199 = scmp.lt.s32.totalorder %s198, 7
      %s200 = scalar_select %p199, %s198, 7
      %s201 = smul.addr %s200, 8
      %s202 = scalar_lea.vmem %s4, %s201
      %s203 = smul.u32 4, %s15
      %v205 = vld [vmem:[%s196] sm:$0xff]
      %v206 = vld [vmem:[%s196 + $0x8] sm:$0xff]
      %v207 = vld [vmem:[%s196 + $0x10] sm:$0xff]
      %v208 = vld [vmem:[%s196 + $0x18] sm:$0xff]
      %v209 = vld [vmem:[%s196 + $0x20] sm:$0xff]
      %v210 = vld [vmem:[%s196 + $0x28] sm:$0xff]
      %v211 = vld [vmem:[%s196 + $0x30] sm:$0xff]
      %v212 = vld [vmem:[%s196 + $0x38] sm:$0xff]
      %v213 = vld [vmem:[%s196 + $0x40] sm:$0xff]
      %v214 = vld [vmem:[%s196 + $0x48] sm:$0xff]
      %v215 = vld [vmem:[%s196 + $0x50] sm:$0xff]
      %v216 = vld [vmem:[%s196 + $0x58] sm:$0xff]
      %v217 = vld [vmem:[%s196 + $0x60] sm:$0xff]
      %v218 = vld [vmem:[%s196 + $0x68] sm:$0xff]
      %v219 = vld [vmem:[%s196 + $0x70] sm:$0xff]
      %v220 = vld [vmem:[%s196 + $0x78] sm:$0xff]
      %v221 = vld [vmem:[%s1] sm:$0xf]
      %v222 = vld [vmem:[%s1 + $0x4] sm:$0xf]
      %v223 = vld [vmem:[%s1 + $0x8] sm:$0xf]
      %v224 = vld [vmem:[%s1 + $0xc] sm:$0xf]
      %v225 = vld [vmem:[%s1 + $0x10] sm:$0xf]
      %v226 = vld [vmem:[%s1 + $0x14] sm:$0xf]
      %v227 = vld [vmem:[%s1 + $0x18] sm:$0xf]
      %v228 = vld [vmem:[%s1 + $0x1c] sm:$0xf]
      %v229 = vld [vmem:[%s1 + $0x20] sm:$0xf]
      %v230 = vld [vmem:[%s1 + $0x24] sm:$0xf]
      %v231 = vld [vmem:[%s1 + $0x28] sm:$0xf]
      %v232 = vld [vmem:[%s1 + $0x2c] sm:$0xf]
      %v233 = vld [vmem:[%s1 + $0x30] sm:$0xf]
      %v234 = vld [vmem:[%s1 + $0x34] sm:$0xf]
      %v235 = vld [vmem:[%s1 + $0x38] sm:$0xf]
      %v236 = vld [vmem:[%s1 + $0x3c] sm:$0xf]
      %v237 = vld [vmem:[%s1 + $0x40] sm:$0xf]
      %v238 = vld [vmem:[%s1 + $0x44] sm:$0xf]
      %v239 = vld [vmem:[%s1 + $0x48] sm:$0xf]
      %v240 = vld [vmem:[%s1 + $0x4c] sm:$0xf]
      %v241 = vld [vmem:[%s1 + $0x50] sm:$0xf]
      %v242 = vld [vmem:[%s1 + $0x54] sm:$0xf]
      %v243 = vld [vmem:[%s1 + $0x58] sm:$0xf]
      %v244 = vld [vmem:[%s1 + $0x5c] sm:$0xf]
      %v245 = vld [vmem:[%s1 + $0x60] sm:$0xf]
      %v246 = vld [vmem:[%s1 + $0x64] sm:$0xf]
      %v247 = vld [vmem:[%s1 + $0x68] sm:$0xf]
      %v248 = vld [vmem:[%s1 + $0x6c] sm:$0xf]
      %v249 = vld [vmem:[%s1 + $0x70] sm:$0xf]
      %v250 = vld [vmem:[%s1 + $0x74] sm:$0xf]
      %v251 = vld [vmem:[%s1 + $0x78] sm:$0xf]
      %v252 = vld [vmem:[%s1 + $0x7c] sm:$0xf]
      %v253 = vld [vmem:[%s2] sm:$0x1]
      %v255 = vlaneseq
      %v256 = vshrl.u32 %v255, 7
      %v257 = vsub.s32 0, %v256
      %v258 = vrot.slane %v253, %v257
      %v276 = vunpack.c.l.b16 %v205
      %v277 = vunpack.c.h.b16 %v205
      %v278 = vunpack.c.l.b16 %v206
      %v279 = vunpack.c.h.b16 %v206
      %v280 = vunpack.c.l.b16 %v207
      %v281 = vunpack.c.h.b16 %v207
      %v282 = vunpack.c.l.b16 %v208
      %v283 = vunpack.c.h.b16 %v208
      %v284 = vunpack.c.l.b16 %v209
      %v285 = vunpack.c.h.b16 %v209
      %v286 = vunpack.c.l.b16 %v210
      %v287 = vunpack.c.h.b16 %v210
      %v288 = vunpack.c.l.b16 %v211
      %v289 = vunpack.c.h.b16 %v211
      %v290 = vunpack.c.l.b16 %v212
      %v291 = vunpack.c.h.b16 %v212
      %v292 = vunpack.c.l.b16 %v213
      %v293 = vunpack.c.h.b16 %v213
      %v294 = vunpack.c.l.b16 %v214
      %v295 = vunpack.c.h.b16 %v214
      %v296 = vunpack.c.l.b16 %v215
      %v297 = vunpack.c.h.b16 %v215
      %v298 = vunpack.c.l.b16 %v216
      %v299 = vunpack.c.h.b16 %v216
      %v300 = vunpack.c.l.b16 %v217
      %v301 = vunpack.c.h.b16 %v217
      %v302 = vunpack.c.l.b16 %v218
      %v303 = vunpack.c.h.b16 %v218
      %v304 = vunpack.c.l.b16 %v219
      %v305 = vunpack.c.h.b16 %v219
      %v306 = vunpack.c.l.b16 %v220
      %v307 = vunpack.c.h.b16 %v220
      %v308 = vpack.c.b16 %v278, %v276
      %v309 = vpack.c.b16 %v279, %v277
      %v310 = vpack.c.b16 %v282, %v280
      %v311 = vpack.c.b16 %v283, %v281
      %v312 = vpack.c.b16 %v286, %v284
      %v313 = vpack.c.b16 %v287, %v285
      %v314 = vpack.c.b16 %v290, %v288
      %v315 = vpack.c.b16 %v291, %v289
      %v316 = vpack.c.b16 %v294, %v292
      %v317 = vpack.c.b16 %v295, %v293
      %v318 = vpack.c.b16 %v298, %v296
      %v319 = vpack.c.b16 %v299, %v297
      %v320 = vpack.c.b16 %v302, %v300
      %v321 = vpack.c.b16 %v303, %v301
      %v322 = vpack.c.b16 %v306, %v304
      %v323 = vpack.c.b16 %v307, %v305
      %v372 = vunpack.c.l.b16 %v221
      %v373 = vunpack.c.l.b16 %v222
      %v374 = vunpack.c.l.b16 %v223
      %v375 = vunpack.c.l.b16 %v224
      %v376 = vunpack.c.l.b16 %v225
      %v377 = vunpack.c.l.b16 %v226
      %v378 = vunpack.c.l.b16 %v227
      %v379 = vunpack.c.l.b16 %v228
      %v380 = vunpack.c.l.b16 %v229
      %v381 = vunpack.c.l.b16 %v230
      %v382 = vunpack.c.l.b16 %v231
      %v383 = vunpack.c.l.b16 %v232
      %v384 = vunpack.c.l.b16 %v233
      %v385 = vunpack.c.l.b16 %v234
      %v386 = vunpack.c.l.b16 %v235
      %v387 = vunpack.c.l.b16 %v236
      %v388 = vunpack.c.l.b16 %v237
      %v389 = vunpack.c.l.b16 %v238
      %v390 = vunpack.c.l.b16 %v239
      %v391 = vunpack.c.l.b16 %v240
      %v392 = vunpack.c.l.b16 %v241
      %v393 = vunpack.c.l.b16 %v242
      %v394 = vunpack.c.l.b16 %v243
      %v395 = vunpack.c.l.b16 %v244
      %v396 = vunpack.c.l.b16 %v245
      %v397 = vunpack.c.l.b16 %v246
      %v398 = vunpack.c.l.b16 %v247
      %v399 = vunpack.c.l.b16 %v248
      %v400 = vunpack.c.l.b16 %v249
      %v401 = vunpack.c.l.b16 %v250
      %v402 = vunpack.c.l.b16 %v251
      %v403 = vunpack.c.l.b16 %v252
      %v404 = vpack.c.b16 %v373, %v372
      %v405 = vpack.c.b16 %v375, %v374
      %v406 = vpack.c.b16 %v377, %v376
      %v407 = vpack.c.b16 %v379, %v378
      %v408 = vpack.c.b16 %v381, %v380
      %v409 = vpack.c.b16 %v383, %v382
      %v410 = vpack.c.b16 %v385, %v384
      %v411 = vpack.c.b16 %v387, %v386
      %v412 = vpack.c.b16 %v389, %v388
      %v413 = vpack.c.b16 %v391, %v390
      %v414 = vpack.c.b16 %v393, %v392
      %v415 = vpack.c.b16 %v395, %v394
      %v416 = vpack.c.b16 %v397, %v396
      %v417 = vpack.c.b16 %v399, %v398
      %v418 = vpack.c.b16 %v401, %v400
      %v419 = vpack.c.b16 %v403, %v402
      %436 = vmatprep.subr.bf16.mxu0 0
      %437 = vmatpush1.bf16.msra.mxu0 %v411
      %438 = vmatprep.subr.bf16.mxu0 0
      %439 = vmatpush1.bf16.msra.mxu0 %v410
      %440 = vmatprep.subr.bf16.mxu0 0
      %441 = vmatpush1.bf16.msra.mxu0 %v409
      %442 = vmatprep.subr.bf16.mxu0 0
      %443 = vmatpush1.bf16.msra.mxu0 %v408
      %444 = vmatprep.subr.bf16.mxu0 0
      %445 = vmatpush1.bf16.msra.mxu0 %v407
      %446 = vmatprep.subr.bf16.mxu0 0
      %447 = vmatpush1.bf16.msra.mxu0 %v406
      %448 = vmatprep.subr.bf16.mxu0 0
      %449 = vmatpush1.bf16.msra.mxu0 %v405
      %450 = vmatprep.subr.bf16.mxu0 0
      %451 = vmatpush1.bf16.msra.mxu0 %v404
      %452 = vmatprep.subr.bf16.mxu0 0
      %453 = vmatpush2.bf16.msra.mxu0 %v419
      %454 = vmatprep.subr.bf16.mxu0 0
      %455 = vmatpush2.bf16.msra.mxu0 %v418
      %456 = vmatprep.subr.bf16.mxu0 0
      %457 = vmatpush2.bf16.msra.mxu0 %v417
      %458 = vmatprep.subr.bf16.mxu0 0
      %459 = vmatpush2.bf16.msra.mxu0 %v416
      %460 = vmatprep.subr.bf16.mxu0 0
      %461 = vmatpush2.bf16.msra.mxu0 %v415
      %462 = vmatprep.subr.bf16.mxu0 0
      %463 = vmatpush2.bf16.msra.mxu0 %v414
      %464 = vmatprep.subr.bf16.mxu0 0
      %465 = vmatpush2.bf16.msra.mxu0 %v413
      %466 = vmatprep.subr.bf16.mxu0 0
      %467 = vmatpush2.bf16.msra.mxu0 %v412
      %468 = vmatprep.mubr.bf16.mxu0 %v309
      %469 = vmatmul.mubr.bf16.gmra.mxu0 %v308
      %v470 = vpop.f32.mrf.mxu0
      %v471 = vadd.f32 %v258, %v470
      %v472 = vpop.f32.mrf.mxu0
      %v473 = vpop.f32.mrf.mxu0
      %v474 = vadd.f32 %v258, %v473
      %v475 = vpop.f32.mrf.mxu0
      %476 = vmatprep.mubr.bf16.mxu0 %v311
      %477 = vmatmul.mubr.bf16.gmra.mxu0 %v310
      %v478 = vpop.f32.mrf.mxu0
      %v479 = vadd.f32 %v258, %v478
      %v480 = vpop.f32.mrf.mxu0
      %v481 = vpop.f32.mrf.mxu0
      %v482 = vadd.f32 %v258, %v481
      %v483 = vpop.f32.mrf.mxu0
      %484 = vmatprep.mubr.bf16.mxu0 %v313
      %485 = vmatmul.mubr.bf16.gmra.mxu0 %v312
      %v486 = vpop.f32.mrf.mxu0
      %v487 = vadd.f32 %v258, %v486
      %v488 = vpop.f32.mrf.mxu0
      %v489 = vpop.f32.mrf.mxu0
      %v490 = vadd.f32 %v258, %v489
      %v491 = vpop.f32.mrf.mxu0
      %492 = vmatprep.mubr.bf16.mxu0 %v315
      %493 = vmatmul.mubr.bf16.gmra.mxu0 %v314
      %v494 = vpop.f32.mrf.mxu0
      %v495 = vadd.f32 %v258, %v494
      %v496 = vpop.f32.mrf.mxu0
      %v497 = vpop.f32.mrf.mxu0
      %v498 = vadd.f32 %v258, %v497
      %v499 = vpop.f32.mrf.mxu0
      %500 = vmatprep.mubr.bf16.mxu0 %v317
      %501 = vmatmul.mubr.bf16.gmra.mxu0 %v316
      %v502 = vpop.f32.mrf.mxu0
      %v503 = vadd.f32 %v258, %v502
      %v504 = vpop.f32.mrf.mxu0
      %v505 = vpop.f32.mrf.mxu0
      %v506 = vadd.f32 %v258, %v505
      %v507 = vpop.f32.mrf.mxu0
      %508 = vmatprep.mubr.bf16.mxu0 %v319
      %509 = vmatmul.mubr.bf16.gmra.mxu0 %v318
      %v510 = vpop.f32.mrf.mxu0
      %v511 = vadd.f32 %v258, %v510
      %v512 = vpop.f32.mrf.mxu0
      %v513 = vpop.f32.mrf.mxu0
      %v514 = vadd.f32 %v258, %v513
      %v515 = vpop.f32.mrf.mxu0
      %516 = vmatprep.mubr.bf16.mxu0 %v321
      %517 = vmatmul.mubr.bf16.gmra.mxu0 %v320
      %v518 = vpop.f32.mrf.mxu0
      %v519 = vadd.f32 %v258, %v518
      %v520 = vpop.f32.mrf.mxu0
      %v521 = vpop.f32.mrf.mxu0
      %v522 = vadd.f32 %v258, %v521
      %v523 = vpop.f32.mrf.mxu0
      %524 = vmatprep.mubr.bf16.mxu0 %v323
      %525 = vmatmul.mubr.bf16.gmra.mxu0 %v322
      %v526 = vpop.f32.mrf.mxu0
      %v527 = vadd.f32 %v258, %v526
      %v528 = vpop.f32.mrf.mxu0
      %v529 = vpop.f32.mrf.mxu0
      %v530 = vadd.f32 %v258, %v529
      %v531 = vpop.f32.mrf.mxu0
      %532 = vdwg.mxu0
      %v533 = vtanh.pop %v471
      %v534 = vtanh.pop %v474
      %v535 = vtanh.pop %v479
      %v536 = vtanh.pop %v482
      %v537 = vtanh.pop %v487
      %v538 = vtanh.pop %v490
      %v539 = vtanh.pop %v495
      %v540 = vtanh.pop %v498
      %v541 = vtanh.pop %v503
      %v542 = vtanh.pop %v506
      %v543 = vtanh.pop %v511
      %v544 = vtanh.pop %v514
      %v545 = vtanh.pop %v519
      %v546 = vtanh.pop %v522
      %v547 = vtanh.pop %v527
      %v548 = vtanh.pop %v530
      %v549 = vld [vmem:[%s3] sm:$0xff]
      %v550 = vld [vmem:[%s3 + $0x8] sm:$0xff]
      %v551 = vld [vmem:[%s3 + $0x10] sm:$0xff]
      %v552 = vld [vmem:[%s3 + $0x18] sm:$0xff]
      %553 = vmatprep.subr.mxu0 0.0
      %554 = vmatpush1.msra.mxu0 %v548
      %555 = vmatprep.subr.mxu0 0.0
      %556 = vmatpush1.msra.mxu0 %v547
      %557 = vmatprep.subr.mxu0 0.0
      %558 = vmatpush1.msra.mxu0 %v546
      %559 = vmatprep.subr.mxu0 0.0
      %560 = vmatpush1.msra.mxu0 %v545
      %561 = vmatprep.subr.mxu0 0.0
      %562 = vmatpush1.msra.mxu0 %v544
      %563 = vmatprep.subr.mxu0 0.0
      %564 = vmatpush1.msra.mxu0 %v543
      %565 = vmatprep.subr.mxu0 0.0
      %566 = vmatpush1.msra.mxu0 %v542
      %567 = vmatprep.subr.mxu0 0.0
      %568 = vmatpush1.msra.mxu0 %v541
      %569 = vmatprep.subr.mxu0 0.0
      %570 = vmatpush1.msra.mxu0 %v540
      %571 = vmatprep.subr.mxu0 0.0
      %572 = vmatpush1.msra.mxu0 %v539
      %573 = vmatprep.subr.mxu0 0.0
      %574 = vmatpush1.msra.mxu0 %v538
      %575 = vmatprep.subr.mxu0 0.0
      %576 = vmatpush1.msra.mxu0 %v537
      %577 = vmatprep.subr.mxu0 0.0
      %578 = vmatpush1.msra.mxu0 %v536
      %579 = vmatprep.subr.mxu0 0.0
      %580 = vmatpush1.msra.mxu0 %v535
      %581 = vmatprep.subr.mxu0 0.0
      %582 = vmatpush1.msra.mxu0 %v534
      %583 = vmatprep.subr.mxu0 0.0
      %584 = vmatpush1.msra.mxu0 %v533
      %585 = vmatprep.subr.mxu0 0.0
      %586 = vmatpush2.msra.mxu0 0.0
      %587 = vmatprep.subr.mxu0 0.0
      %588 = vmatpush2.msra.mxu0 0.0
      %589 = vmatprep.subr.mxu0 0.0
      %590 = vmatpush2.msra.mxu0 0.0
      %591 = vmatprep.subr.mxu0 0.0
      %592 = vmatpush2.msra.mxu0 0.0
      %593 = vmatprep.subr.mxu0 0.0
      %594 = vmatpush2.msra.mxu0 0.0
      %595 = vmatprep.subr.mxu0 0.0
      %596 = vmatpush2.msra.mxu0 0.0
      %597 = vmatprep.subr.mxu0 0.0
      %598 = vmatpush2.msra.mxu0 0.0
      %599 = vmatprep.subr.mxu0 0.0
      %600 = vmatpush2.msra.mxu0 0.0
      %601 = vmatprep.subr.mxu0 0.0
      %602 = vmatpush2.msra.mxu0 0.0
      %603 = vmatprep.subr.mxu0 0.0
      %604 = vmatpush2.msra.mxu0 0.0
      %605 = vmatprep.subr.mxu0 0.0
      %606 = vmatpush2.msra.mxu0 0.0
      %607 = vmatprep.subr.mxu0 0.0
      %608 = vmatpush2.msra.mxu0 0.0
      %609 = vmatprep.subr.mxu0 0.0
      %610 = vmatpush2.msra.mxu0 0.0
      %611 = vmatprep.subr.mxu0 0.0
      %612 = vmatpush2.msra.mxu0 0.0
      %613 = vmatprep.subr.mxu0 0.0
      %614 = vmatpush2.msra.mxu0 0.0
      %615 = vmatprep.subr.mxu0 0.0
      %616 = vmatpush2.msra.mxu0 0.0
      %617 = vmatprep.mubr.f32.mxu0 0.0
      %618 = vmatmul.mubr.f32.gmra.mxu0 %v549
      %v619 = vpop.f32.mrf.mxu0
      %v620 = vadd.f32 0.0, %v619
      %v621 = vpop.f32.mrf.mxu0
      %622 = vmatprep.mubr.f32.mxu0 0.0
      %623 = vmatmul.mubr.f32.gmra.mxu0 %v550
      %v624 = vpop.f32.mrf.mxu0
      %v625 = vadd.f32 0.0, %v624
      %v626 = vpop.f32.mrf.mxu0
      %627 = vmatprep.mubr.f32.mxu0 0.0
      %628 = vmatmul.mubr.f32.gmra.mxu0 %v551
      %v629 = vpop.f32.mrf.mxu0
      %v630 = vadd.f32 0.0, %v629
      %v631 = vpop.f32.mrf.mxu0
      %632 = vmatprep.mubr.f32.mxu0 0.0
      %633 = vmatmul.mubr.f32.gmra.mxu0 %v552
      %v634 = vpop.f32.mrf.mxu0
      %v635 = vadd.f32 0.0, %v634
      %v636 = vpop.f32.mrf.mxu0
      %637 = vdwg.mxu0
      %638 = vst [vmem:[%s202] sm:$0xff] %v620
      %639 = vst [vmem:[%s202 + $0x8] sm:$0xff] %v625
      %640 = vst [vmem:[%s202 + $0x10] sm:$0xff] %v630
      %641 = vst [vmem:[%s202 + $0x18] sm:$0xff] %v635
      %s642 = smul.u32 4, %s15
      %p643 = scmp.lt.s32.totalorder %s642, 7
      %s644 = scalar_select %p643, %s642, 7
      %s645 = smul.addr %s644, 8
      %s646 = scalar_lea.vmem %s4, %s645
      // Predicated region
      $region37: #{lenet5_forward.4} parent=35 // pred_check
        %p647 = pneg %p122
      $region38: #{lenet5_forward.4} parent=35 // pred_check_branch
        %649 = sbr.rel (%p647) target = $region40
      $region39: #{lenet5_forward.4} parent=35 // pred_region
        %s650 = smul.u32 4, %s15
      $region40: #{lenet5_forward.4} parent=35 // pred_fallthru
        _
    $region36: #{lenet5_forward.4} parent=5 // pred_fallthru
      _
    %p651 = scmp.le.s32.totalorder 2, %s10
    // Predicated region
    $region41: #{lenet5_forward.4} parent=5 // pred_check
      %p652 = pneg %p651
    $region42: #{lenet5_forward.4} parent=5 // pred_check_branch
      %654 = sbr.rel (%p652) target = $region44
    $region43: #{lenet5_forward.4} parent=5 // pred_region
      %s655 = ssub.s32 %s10, 2
      // Predicated region
      $region45: #{lenet5_forward.4} parent=43 // pred_check
        %p656 = pneg %p128
      $region46: #{lenet5_forward.4} parent=43 // pred_check_branch
        %658 = sbr.rel (%p656) target = $region48
      $region47: #{lenet5_forward.4} parent=43 // pred_region
        %s659 = smul.u32 4, %s16
        %p660 = scmp.lt.s32.totalorder %s659, 7
        %s661 = scalar_select %p660, %s659, 7
        %s662 = smul.addr %s661, 8
        %s663 = scalar_lea.vmem %s4, %s662
      $region48: #{lenet5_forward.4} parent=43 // pred_fallthru
        _
    $region44: #{lenet5_forward.4} parent=5 // pred_fallthru
      _
  $region6: #{lenet5_forward.4} parent=0 // loop_footer
    %s14 = sadd.s32 1, %s10
  $region7: #{lenet5_forward.4} parent=0 // loop_footer_branch
    %9 = sbr.rel target = $region3
  $region8: #{lenet5_forward.4} parent=0 // loop_exit
    _

// kernel: lenet5_forward.5
$region0: #{lenet5_forward.5}
  #allocation0 [shape = 'u32[]', space=smem, size = 0x4, offset = 0x4, fixed_abs, tag = 'smem constant byte address 0x4 - core index']
  #allocation1 [shape = 'u32[144,128]{1,0:T(1,128)}', space=vmem, size = 0x12000, scoped, tag = 'internal scratch']
  %s0 = inlined_call_operand.vmem [shape: bf16[8,512], index: 0, kind: input, shape index: {}]
  %s1 = inlined_call_operand.vmem [shape: bf16[512,128], index: 1, kind: input, shape index: {}]
  %s2 = inlined_call_operand.vmem [shape: f32[1,128], index: 2, kind: input, shape index: {}]
  %s3 = inlined_call_operand.vmem [shape: bf16[128,128], index: 3, kind: input, shape index: {}]
  %s4 = inlined_call_operand.vmem [shape: f32[1,128], index: 4, kind: input, shape index: {}]
  %s5 = inlined_call_operand.vmem [shape: bf16[128,128], index: 5, kind: input, shape index: {}]
  %s6 = inlined_call_operand.vmem [shape: f32[1,128], index: 6, kind: input, shape index: {}]
  %s7 = inlined_call_operand.vmem [shape: f32[8,128], index: 7, kind: output, shape index: {}]
  %s8 = sld [smem:[#allocation0]]
  $region38: #{lenet5_forward.5} parent=0
    _
  %s10 = ssub.s32 1, %s8
  %s11 = scalar_select 0, %s10, %s8
  // Predicated region
  $region2: #{lenet5_forward.5} parent=0 // pred_check
    _
  $region3: #{lenet5_forward.5} parent=0 // pred_check_branch
    %13 = sbr.rel (0) target = $region5
  $region4: #{lenet5_forward.5} parent=0 // pred_region
    _
  $region5: #{lenet5_forward.5} parent=0 // pred_fallthru
    _
  // Predicated region
  $region6: #{lenet5_forward.5} parent=0 // pred_check
    _
  $region7: #{lenet5_forward.5} parent=0 // pred_check_branch
    %15 = sbr.rel (0) target = $region9
  $region8: #{lenet5_forward.5} parent=0 // pred_region
    _
  $region9: #{lenet5_forward.5} parent=0 // pred_fallthru
    _
  // Predicated region
  $region10: #{lenet5_forward.5} parent=0 // pred_check
    _
  $region11: #{lenet5_forward.5} parent=0 // pred_check_branch
    %17 = sbr.rel (0) target = $region13
  $region12: #{lenet5_forward.5} parent=0 // pred_region
    _
  $region13: #{lenet5_forward.5} parent=0 // pred_fallthru
    _
  // Predicated region
  $region14: #{lenet5_forward.5} parent=0 // pred_check
    _
  $region15: #{lenet5_forward.5} parent=0 // pred_check_branch
    %19 = sbr.rel (0) target = $region17
  $region16: #{lenet5_forward.5} parent=0 // pred_region
    _
  $region17: #{lenet5_forward.5} parent=0 // pred_fallthru
    _
  // Predicated region
  $region18: #{lenet5_forward.5} parent=0 // pred_check
    _
  $region19: #{lenet5_forward.5} parent=0 // pred_check_branch
    %21 = sbr.rel (0) target = $region21
  $region20: #{lenet5_forward.5} parent=0 // pred_region
    _
  $region21: #{lenet5_forward.5} parent=0 // pred_fallthru
    _
  // Predicated region
  $region22: #{lenet5_forward.5} parent=0 // pred_check
    _
  $region23: #{lenet5_forward.5} parent=0 // pred_check_branch
    %23 = sbr.rel (0) target = $region25
  $region24: #{lenet5_forward.5} parent=0 // pred_region
    _
  $region25: #{lenet5_forward.5} parent=0 // pred_fallthru
    _
  // Predicated region
  $region26: #{lenet5_forward.5} parent=0 // pred_check
    _
  $region27: #{lenet5_forward.5} parent=0 // pred_check_branch
    %25 = sbr.rel (0) target = $region29
  $region28: #{lenet5_forward.5} parent=0 // pred_region
    _
  $region29: #{lenet5_forward.5} parent=0 // pred_fallthru
    _
  %v27 = vld [vmem:[%s0] sm:$0xff]
  %v28 = vld [vmem:[%s0 + $0x8] sm:$0xff]
  %v29 = vld [vmem:[%s1] sm:$0xf]
  %v30 = vld [vmem:[%s1 + $0x4] sm:$0xf]
  %v31 = vld [vmem:[%s1 + $0x8] sm:$0xf]
  %v32 = vld [vmem:[%s1 + $0xc] sm:$0xf]
  %v33 = vld [vmem:[%s1 + $0x10] sm:$0xf]
  %v34 = vld [vmem:[%s1 + $0x14] sm:$0xf]
  %v35 = vld [vmem:[%s1 + $0x18] sm:$0xf]
  %v36 = vld [vmem:[%s1 + $0x1c] sm:$0xf]
  %v37 = vld [vmem:[%s1 + $0x20] sm:$0xf]
  %v38 = vld [vmem:[%s1 + $0x24] sm:$0xf]
  %v39 = vld [vmem:[%s1 + $0x28] sm:$0xf]
  %v40 = vld [vmem:[%s1 + $0x2c] sm:$0xf]
  %v41 = vld [vmem:[%s1 + $0x30] sm:$0xf]
  %v42 = vld [vmem:[%s1 + $0x34] sm:$0xf]
  %v43 = vld [vmem:[%s1 + $0x38] sm:$0xf]
  %v44 = vld [vmem:[%s1 + $0x3c] sm:$0xf]
  %v45 = vld [vmem:[%s1 + $0x40] sm:$0xf]
  %v46 = vld [vmem:[%s1 + $0x44] sm:$0xf]
  %v47 = vld [vmem:[%s1 + $0x48] sm:$0xf]
  %v48 = vld [vmem:[%s1 + $0x4c] sm:$0xf]
  %v49 = vld [vmem:[%s1 + $0x50] sm:$0xf]
  %v50 = vld [vmem:[%s1 + $0x54] sm:$0xf]
  %v51 = vld [vmem:[%s1 + $0x58] sm:$0xf]
  %v52 = vld [vmem:[%s1 + $0x5c] sm:$0xf]
  %v53 = vld [vmem:[%s1 + $0x60] sm:$0xf]
  %v54 = vld [vmem:[%s1 + $0x64] sm:$0xf]
  %v55 = vld [vmem:[%s1 + $0x68] sm:$0xf]
  %v56 = vld [vmem:[%s1 + $0x6c] sm:$0xf]
  %v57 = vld [vmem:[%s1 + $0x70] sm:$0xf]
  %v58 = vld [vmem:[%s1 + $0x74] sm:$0xf]
  %v59 = vld [vmem:[%s1 + $0x78] sm:$0xf]
  %v60 = vld [vmem:[%s1 + $0x7c] sm:$0xf]
  %v61 = vld [vmem:[%s1 + $0x80] sm:$0xf]
  %v62 = vld [vmem:[%s1 + $0x84] sm:$0xf]
  %v63 = vld [vmem:[%s1 + $0x88] sm:$0xf]
  %v64 = vld [vmem:[%s1 + $0x8c] sm:$0xf]
  %v65 = vld [vmem:[%s1 + $0x90] sm:$0xf]
  %v66 = vld [vmem:[%s1 + $0x94] sm:$0xf]
  %v67 = vld [vmem:[%s1 + $0x98] sm:$0xf]
  %v68 = vld [vmem:[%s1 + $0x9c] sm:$0xf]
  %v69 = vld [vmem:[%s1 + $0xa0] sm:$0xf]
  %v70 = vld [vmem:[%s1 + $0xa4] sm:$0xf]
  %v71 = vld [vmem:[%s1 + $0xa8] sm:$0xf]
  %v72 = vld [vmem:[%s1 + $0xac] sm:$0xf]
  %v73 = vld [vmem:[%s1 + $0xb0] sm:$0xf]
  %v74 = vld [vmem:[%s1 + $0xb4] sm:$0xf]
  %v75 = vld [vmem:[%s1 + $0xb8] sm:$0xf]
  %v76 = vld [vmem:[%s1 + $0xbc] sm:$0xf]
  %v77 = vld [vmem:[%s1 + $0xc0] sm:$0xf]
  %v78 = vld [vmem:[%s1 + $0xc4] sm:$0xf]
  %v79 = vld [vmem:[%s1 + $0xc8] sm:$0xf]
  %v80 = vld [vmem:[%s1 + $0xcc] sm:$0xf]
  %v81 = vld [vmem:[%s1 + $0xd0] sm:$0xf]
  %v82 = vld [vmem:[%s1 + $0xd4] sm:$0xf]
  %v83 = vld [vmem:[%s1 + $0xd8] sm:$0xf]
  %v84 = vld [vmem:[%s1 + $0xdc] sm:$0xf]
  %v85 = vld [vmem:[%s1 + $0xe0] sm:$0xf]
  %v86 = vld [vmem:[%s1 + $0xe4] sm:$0xf]
  %v87 = vld [vmem:[%s1 + $0xe8] sm:$0xf]
  %v88 = vld [vmem:[%s1 + $0xec] sm:$0xf]
  %v89 = vld [vmem:[%s1 + $0xf0] sm:$0xf]
  %v90 = vld [vmem:[%s1 + $0xf4] sm:$0xf]
  %v91 = vld [vmem:[%s1 + $0xf8] sm:$0xf]
  %v92 = vld [vmem:[%s1 + $0xfc] sm:$0xf]
  %v93 = vld [vmem:[%s2] sm:$0x1]
  %v95 = vlaneseq
  %v96 = vshrl.u32 %v95, 7
  %v97 = vsub.s32 0, %v96
  %v98 = vrot.slane %v93, %v97
  %v102 = vunpack.c.l.b16 %v27
  %v103 = vunpack.c.h.b16 %v27
  %v104 = vunpack.c.l.b16 %v28
  %v105 = vunpack.c.h.b16 %v28
  %v106 = vpack.c.b16 %v102, %v102
  %v107 = vpack.c.b16 %v103, %v103
  %v108 = vpack.c.b16 %v104, %v104
  %v109 = vpack.c.b16 %v105, %v105
  %v178 = vunpack.c.l.b16 %v29
  %v179 = vunpack.c.l.b16 %v30
  %v180 = vunpack.c.l.b16 %v31
  %v181 = vunpack.c.l.b16 %v32
  %v182 = vunpack.c.l.b16 %v33
  %v183 = vunpack.c.l.b16 %v34
  %v184 = vunpack.c.l.b16 %v35
  %v185 = vunpack.c.l.b16 %v36
  %v186 = vunpack.c.l.b16 %v37
  %v187 = vunpack.c.l.b16 %v38
  %v188 = vunpack.c.l.b16 %v39
  %v189 = vunpack.c.l.b16 %v40
  %v190 = vunpack.c.l.b16 %v41
  %v191 = vunpack.c.l.b16 %v42
  %v192 = vunpack.c.l.b16 %v43
  %v193 = vunpack.c.l.b16 %v44
  %v194 = vunpack.c.l.b16 %v45
  %v195 = vunpack.c.l.b16 %v46
  %v196 = vunpack.c.l.b16 %v47
  %v197 = vunpack.c.l.b16 %v48
  %v198 = vunpack.c.l.b16 %v49
  %v199 = vunpack.c.l.b16 %v50
  %v200 = vunpack.c.l.b16 %v51
  %v201 = vunpack.c.l.b16 %v52
  %v202 = vunpack.c.l.b16 %v53
  %v203 = vunpack.c.l.b16 %v54
  %v204 = vunpack.c.l.b16 %v55
  %v205 = vunpack.c.l.b16 %v56
  %v206 = vunpack.c.l.b16 %v57
  %v207 = vunpack.c.l.b16 %v58
  %v208 = vunpack.c.l.b16 %v59
  %v209 = vunpack.c.l.b16 %v60
  %v210 = vunpack.c.l.b16 %v61
  %v211 = vunpack.c.l.b16 %v62
  %v212 = vunpack.c.l.b16 %v63
  %v213 = vunpack.c.l.b16 %v64
  %v214 = vunpack.c.l.b16 %v65
  %v215 = vunpack.c.l.b16 %v66
  %v216 = vunpack.c.l.b16 %v67
  %v217 = vunpack.c.l.b16 %v68
  %v218 = vunpack.c.l.b16 %v69
  %v219 = vunpack.c.l.b16 %v70
  %v220 = vunpack.c.l.b16 %v71
  %v221 = vunpack.c.l.b16 %v72
  %v222 = vunpack.c.l.b16 %v73
  %v223 = vunpack.c.l.b16 %v74
  %v224 = vunpack.c.l.b16 %v75
  %v225 = vunpack.c.l.b16 %v76
  %v226 = vunpack.c.l.b16 %v77
  %v227 = vunpack.c.l.b16 %v78
  %v228 = vunpack.c.l.b16 %v79
  %v229 = vunpack.c.l.b16 %v80
  %v230 = vunpack.c.l.b16 %v81
  %v231 = vunpack.c.l.b16 %v82
  %v232 = vunpack.c.l.b16 %v83
  %v233 = vunpack.c.l.b16 %v84
  %v234 = vunpack.c.l.b16 %v85
  %v235 = vunpack.c.l.b16 %v86
  %v236 = vunpack.c.l.b16 %v87
  %v237 = vunpack.c.l.b16 %v88
  %v238 = vunpack.c.l.b16 %v89
  %v239 = vunpack.c.l.b16 %v90
  %v240 = vunpack.c.l.b16 %v91
  %v241 = vunpack.c.l.b16 %v92
  %v242 = vpack.c.b16 %v179, %v178
  %v243 = vpack.c.b16 %v181, %v180
  %v244 = vpack.c.b16 %v183, %v182
  %v245 = vpack.c.b16 %v185, %v184
  %v246 = vpack.c.b16 %v187, %v186
  %v247 = vpack.c.b16 %v189, %v188
  %v248 = vpack.c.b16 %v191, %v190
  %v249 = vpack.c.b16 %v193, %v192
  %v250 = vpack.c.b16 %v195, %v194
  %v251 = vpack.c.b16 %v197, %v196
  %v252 = vpack.c.b16 %v199, %v198
  %v253 = vpack.c.b16 %v201, %v200
  %v254 = vpack.c.b16 %v203, %v202
  %v255 = vpack.c.b16 %v205, %v204
  %v256 = vpack.c.b16 %v207, %v206
  %v257 = vpack.c.b16 %v209, %v208
  %v258 = vpack.c.b16 %v211, %v210
  %v259 = vpack.c.b16 %v213, %v212
  %v260 = vpack.c.b16 %v215, %v214
  %v261 = vpack.c.b16 %v217, %v216
  %v262 = vpack.c.b16 %v219, %v218
  %v263 = vpack.c.b16 %v221, %v220
  %v264 = vpack.c.b16 %v223, %v222
  %v265 = vpack.c.b16 %v225, %v224
  %v266 = vpack.c.b16 %v227, %v226
  %v267 = vpack.c.b16 %v229, %v228
  %v268 = vpack.c.b16 %v231, %v230
  %v269 = vpack.c.b16 %v233, %v232
  %v270 = vpack.c.b16 %v235, %v234
  %v271 = vpack.c.b16 %v237, %v236
  %v272 = vpack.c.b16 %v239, %v238
  %v273 = vpack.c.b16 %v241, %v240
  %306 = vmatprep.subr.bf16.mxu0 0
  %307 = vmatpush1.bf16.msra.mxu0 %v249
  %308 = vmatprep.subr.bf16.mxu0 0
  %309 = vmatpush1.bf16.msra.mxu0 %v248
  %310 = vmatprep.subr.bf16.mxu0 0
  %311 = vmatpush1.bf16.msra.mxu0 %v247
  %312 = vmatprep.subr.bf16.mxu0 0
  %313 = vmatpush1.bf16.msra.mxu0 %v246
  %314 = vmatprep.subr.bf16.mxu0 0
  %315 = vmatpush1.bf16.msra.mxu0 %v245
  %316 = vmatprep.subr.bf16.mxu0 0
  %317 = vmatpush1.bf16.msra.mxu0 %v244
  %318 = vmatprep.subr.bf16.mxu0 0
  %319 = vmatpush1.bf16.msra.mxu0 %v243
  %320 = vmatprep.subr.bf16.mxu0 0
  %321 = vmatpush1.bf16.msra.mxu0 %v242
  %322 = vmatprep.subr.bf16.mxu0 0
  %323 = vmatpush2.bf16.msra.mxu0 %v257
  %324 = vmatprep.subr.bf16.mxu0 0
  %325 = vmatpush2.bf16.msra.mxu0 %v256
  %326 = vmatprep.subr.bf16.mxu0 0
  %327 = vmatpush2.bf16.msra.mxu0 %v255
  %328 = vmatprep.subr.bf16.mxu0 0
  %329 = vmatpush2.bf16.msra.mxu0 %v254
  %330 = vmatprep.subr.bf16.mxu0 0
  %331 = vmatpush2.bf16.msra.mxu0 %v253
  %332 = vmatprep.subr.bf16.mxu0 0
  %333 = vmatpush2.bf16.msra.mxu0 %v252
  %334 = vmatprep.subr.bf16.mxu0 0
  %335 = vmatpush2.bf16.msra.mxu0 %v251
  %336 = vmatprep.subr.bf16.mxu0 0
  %337 = vmatpush2.bf16.msra.mxu0 %v250
  %338 = vmatprep.mubr.bf16.mxu0 %v107
  %339 = vmatmul.mubr.bf16.gmra.mxu0 %v106
  %v340 = vpop.f32.mrf.mxu0
  %v341 = vadd.f32 %v98, %v340
  %v342 = vpop.f32.mrf.mxu0
  %v343 = vpop.f32.mrf.mxu0
  %v344 = vpop.f32.mrf.mxu0
  %345 = vdwg.mxu0
  %346 = vmatprep.subr.bf16.mxu0 0
  %347 = vmatpush1.bf16.msra.mxu0 %v265
  %348 = vmatprep.subr.bf16.mxu0 0
  %349 = vmatpush1.bf16.msra.mxu0 %v264
  %350 = vmatprep.subr.bf16.mxu0 0
  %351 = vmatpush1.bf16.msra.mxu0 %v263
  %352 = vmatprep.subr.bf16.mxu0 0
  %353 = vmatpush1.bf16.msra.mxu0 %v262
  %354 = vmatprep.subr.bf16.mxu0 0
  %355 = vmatpush1.bf16.msra.mxu0 %v261
  %356 = vmatprep.subr.bf16.mxu0 0
  %357 = vmatpush1.bf16.msra.mxu0 %v260
  %358 = vmatprep.subr.bf16.mxu0 0
  %359 = vmatpush1.bf16.msra.mxu0 %v259
  %360 = vmatprep.subr.bf16.mxu0 0
  %361 = vmatpush1.bf16.msra.mxu0 %v258
  %362 = vmatprep.subr.bf16.mxu0 0
  %363 = vmatpush2.bf16.msra.mxu0 %v273
  %364 = vmatprep.subr.bf16.mxu0 0
  %365 = vmatpush2.bf16.msra.mxu0 %v272
  %366 = vmatprep.subr.bf16.mxu0 0
  %367 = vmatpush2.bf16.msra.mxu0 %v271
  %368 = vmatprep.subr.bf16.mxu0 0
  %369 = vmatpush2.bf16.msra.mxu0 %v270
  %370 = vmatprep.subr.bf16.mxu0 0
  %371 = vmatpush2.bf16.msra.mxu0 %v269
  %372 = vmatprep.subr.bf16.mxu0 0
  %373 = vmatpush2.bf16.msra.mxu0 %v268
  %374 = vmatprep.subr.bf16.mxu0 0
  %375 = vmatpush2.bf16.msra.mxu0 %v267
  %376 = vmatprep.subr.bf16.mxu0 0
  %377 = vmatpush2.bf16.msra.mxu0 %v266
  %378 = vmatprep.mubr.bf16.mxu0 %v109
  %379 = vmatmul.mubr.bf16.gmra.mxu0 %v108
  %v380 = vpop.f32.mrf.mxu0
  %v381 = vadd.f32 %v341, %v380
  %v382 = vpop.f32.mrf.mxu0
  %v383 = vpop.f32.mrf.mxu0
  %v384 = vpop.f32.mrf.mxu0
  %385 = vdwg.mxu0
  %v386 = vtanh.pop %v381
  %v387 = vpack.c.bf16 %v386, %v386
  %v388 = vld [vmem:[%s3] sm:$0xf]
  %v389 = vld [vmem:[%s3 + $0x4] sm:$0xf]
  %v390 = vld [vmem:[%s3 + $0x8] sm:$0xf]
  %v391 = vld [vmem:[%s3 + $0xc] sm:$0xf]
  %v392 = vld [vmem:[%s3 + $0x10] sm:$0xf]
  %v393 = vld [vmem:[%s3 + $0x14] sm:$0xf]
  %v394 = vld [vmem:[%s3 + $0x18] sm:$0xf]
  %v395 = vld [vmem:[%s3 + $0x1c] sm:$0xf]
  %v396 = vld [vmem:[%s3 + $0x20] sm:$0xf]
  %v397 = vld [vmem:[%s3 + $0x24] sm:$0xf]
  %v398 = vld [vmem:[%s3 + $0x28] sm:$0xf]
  %v399 = vld [vmem:[%s3 + $0x2c] sm:$0xf]
  %v400 = vld [vmem:[%s3 + $0x30] sm:$0xf]
  %v401 = vld [vmem:[%s3 + $0x34] sm:$0xf]
  %v402 = vld [vmem:[%s3 + $0x38] sm:$0xf]
  %v403 = vld [vmem:[%s3 + $0x3c] sm:$0xf]
  %v404 = vld [vmem:[%s4] sm:$0x1]
  %v406 = vlaneseq
  %v407 = vshrl.u32 %v406, 7
  %v408 = vsub.s32 0, %v407
  %v409 = vrot.slane %v404, %v408
  %v427 = vunpack.c.l.b16 %v388
  %v428 = vunpack.c.l.b16 %v389
  %v429 = vunpack.c.l.b16 %v390
  %v430 = vunpack.c.l.b16 %v391
  %v431 = vunpack.c.l.b16 %v392
  %v432 = vunpack.c.l.b16 %v393
  %v433 = vunpack.c.l.b16 %v394
  %v434 = vunpack.c.l.b16 %v395
  %v435 = vunpack.c.l.b16 %v396
  %v436 = vunpack.c.l.b16 %v397
  %v437 = vunpack.c.l.b16 %v398
  %v438 = vunpack.c.l.b16 %v399
  %v439 = vunpack.c.l.b16 %v400
  %v440 = vunpack.c.l.b16 %v401
  %v441 = vunpack.c.l.b16 %v402
  %v442 = vunpack.c.l.b16 %v403
  %v443 = vpack.c.b16 %v428, %v427
  %v444 = vpack.c.b16 %v430, %v429
  %v445 = vpack.c.b16 %v432, %v431
  %v446 = vpack.c.b16 %v434, %v433
  %v447 = vpack.c.b16 %v436, %v435
  %v448 = vpack.c.b16 %v438, %v437
  %v449 = vpack.c.b16 %v440, %v439
  %v450 = vpack.c.b16 %v442, %v441
  %459 = vmatprep.subr.bf16.mxu0 0
  %460 = vmatpush1.bf16.msra.mxu0 %v450
  %461 = vmatprep.subr.bf16.mxu0 0
  %462 = vmatpush1.bf16.msra.mxu0 %v449
  %463 = vmatprep.subr.bf16.mxu0 0
  %464 = vmatpush1.bf16.msra.mxu0 %v448
  %465 = vmatprep.subr.bf16.mxu0 0
  %466 = vmatpush1.bf16.msra.mxu0 %v447
  %467 = vmatprep.subr.bf16.mxu0 0
  %468 = vmatpush1.bf16.msra.mxu0 %v446
  %469 = vmatprep.subr.bf16.mxu0 0
  %470 = vmatpush1.bf16.msra.mxu0 %v445
  %471 = vmatprep.subr.bf16.mxu0 0
  %472 = vmatpush1.bf16.msra.mxu0 %v444
  %473 = vmatprep.subr.bf16.mxu0 0
  %474 = vmatpush1.bf16.msra.mxu0 %v443
  %475 = vmatprep.subr.bf16.mxu0 0
  %476 = vmatpush2.bf16.msra.mxu0 0
  %477 = vmatprep.subr.bf16.mxu0 0
  %478 = vmatpush2.bf16.msra.mxu0 0
  %479 = vmatprep.subr.bf16.mxu0 0
  %480 = vmatpush2.bf16.msra.mxu0 0
  %481 = vmatprep.subr.bf16.mxu0 0
  %482 = vmatpush2.bf16.msra.mxu0 0
  %483 = vmatprep.subr.bf16.mxu0 0
  %484 = vmatpush2.bf16.msra.mxu0 0
  %485 = vmatprep.subr.bf16.mxu0 0
  %486 = vmatpush2.bf16.msra.mxu0 0
  %487 = vmatprep.subr.bf16.mxu0 0
  %488 = vmatpush2.bf16.msra.mxu0 0
  %489 = vmatprep.subr.bf16.mxu0 0
  %490 = vmatpush2.bf16.msra.mxu0 0
  %491 = vmatprep.mubr.bf16.mxu0 0
  %492 = vmatmul.mubr.bf16.gmra.mxu0 %v387
  %v493 = vpop.f32.mrf.mxu0
  %v494 = vadd.f32 %v409, %v493
  %v495 = vpop.f32.mrf.mxu0
  %v496 = vpop.f32.mrf.mxu0
  %v497 = vpop.f32.mrf.mxu0
  %498 = vdwg.mxu0
  %v499 = vtanh.pop %v494
  %v500 = vpack.c.bf16 %v499, %v499
  %v501 = vld [vmem:[%s5] sm:$0xf]
  %v502 = vld [vmem:[%s5 + $0x4] sm:$0xf]
  %v503 = vld [vmem:[%s5 + $0x8] sm:$0xf]
  %v504 = vld [vmem:[%s5 + $0xc] sm:$0xf]
  %v505 = vld [vmem:[%s5 + $0x10] sm:$0xf]
  %v506 = vld [vmem:[%s5 + $0x14] sm:$0xf]
  %v507 = vld [vmem:[%s5 + $0x18] sm:$0xf]
  %v508 = vld [vmem:[%s5 + $0x1c] sm:$0xf]
  %v509 = vld [vmem:[%s5 + $0x20] sm:$0xf]
  %v510 = vld [vmem:[%s5 + $0x24] sm:$0xf]
  %v511 = vld [vmem:[%s5 + $0x28] sm:$0xf]
  %v512 = vld [vmem:[%s5 + $0x2c] sm:$0xf]
  %v513 = vld [vmem:[%s5 + $0x30] sm:$0xf]
  %v514 = vld [vmem:[%s5 + $0x34] sm:$0xf]
  %v515 = vld [vmem:[%s5 + $0x38] sm:$0xf]
  %v516 = vld [vmem:[%s5 + $0x3c] sm:$0xf]
  %v517 = vld [vmem:[%s6] sm:$0x1]
  %v519 = vlaneseq
  %v520 = vshrl.u32 %v519, 7
  %v521 = vsub.s32 0, %v520
  %v522 = vrot.slane %v517, %v521
  %v540 = vunpack.c.l.b16 %v501
  %v541 = vunpack.c.l.b16 %v502
  %v542 = vunpack.c.l.b16 %v503
  %v543 = vunpack.c.l.b16 %v504
  %v544 = vunpack.c.l.b16 %v505
  %v545 = vunpack.c.l.b16 %v506
  %v546 = vunpack.c.l.b16 %v507
  %v547 = vunpack.c.l.b16 %v508
  %v548 = vunpack.c.l.b16 %v509
  %v549 = vunpack.c.l.b16 %v510
  %v550 = vunpack.c.l.b16 %v511
  %v551 = vunpack.c.l.b16 %v512
  %v552 = vunpack.c.l.b16 %v513
  %v553 = vunpack.c.l.b16 %v514
  %v554 = vunpack.c.l.b16 %v515
  %v555 = vunpack.c.l.b16 %v516
  %v556 = vpack.c.b16 %v541, %v540
  %v557 = vpack.c.b16 %v543, %v542
  %v558 = vpack.c.b16 %v545, %v544
  %v559 = vpack.c.b16 %v547, %v546
  %v560 = vpack.c.b16 %v549, %v548
  %v561 = vpack.c.b16 %v551, %v550
  %v562 = vpack.c.b16 %v553, %v552
  %v563 = vpack.c.b16 %v555, %v554
  %572 = vmatprep.subr.bf16.mxu0 0
  %573 = vmatpush1.bf16.msra.mxu0 %v563
  %574 = vmatprep.subr.bf16.mxu0 0
  %575 = vmatpush1.bf16.msra.mxu0 %v562
  %576 = vmatprep.subr.bf16.mxu0 0
  %577 = vmatpush1.bf16.msra.mxu0 %v561
  %578 = vmatprep.subr.bf16.mxu0 0
  %579 = vmatpush1.bf16.msra.mxu0 %v560
  %580 = vmatprep.subr.bf16.mxu0 0
  %581 = vmatpush1.bf16.msra.mxu0 %v559
  %582 = vmatprep.subr.bf16.mxu0 0
  %583 = vmatpush1.bf16.msra.mxu0 %v558
  %584 = vmatprep.subr.bf16.mxu0 0
  %585 = vmatpush1.bf16.msra.mxu0 %v557
  %586 = vmatprep.subr.bf16.mxu0 0
  %587 = vmatpush1.bf16.msra.mxu0 %v556
  %588 = vmatprep.subr.bf16.mxu0 0
  %589 = vmatpush2.bf16.msra.mxu0 0
  %590 = vmatprep.subr.bf16.mxu0 0
  %591 = vmatpush2.bf16.msra.mxu0 0
  %592 = vmatprep.subr.bf16.mxu0 0
  %593 = vmatpush2.bf16.msra.mxu0 0
  %594 = vmatprep.subr.bf16.mxu0 0
  %595 = vmatpush2.bf16.msra.mxu0 0
  %596 = vmatprep.subr.bf16.mxu0 0
  %597 = vmatpush2.bf16.msra.mxu0 0
  %598 = vmatprep.subr.bf16.mxu0 0
  %599 = vmatpush2.bf16.msra.mxu0 0
  %600 = vmatprep.subr.bf16.mxu0 0
  %601 = vmatpush2.bf16.msra.mxu0 0
  %602 = vmatprep.subr.bf16.mxu0 0
  %603 = vmatpush2.bf16.msra.mxu0 0
  %604 = vmatprep.mubr.bf16.mxu0 0
  %605 = vmatmul.mubr.bf16.gmra.mxu0 %v500
  %v606 = vpop.f32.mrf.mxu0
  %v607 = vadd.f32 %v522, %v606
  %v608 = vpop.f32.mrf.mxu0
  %v609 = vpop.f32.mrf.mxu0
  %v610 = vpop.f32.mrf.mxu0
  %611 = vdwg.mxu0
  %612 = vst [vmem:[%s7] sm:$0xff] %v607
  // Predicated region
  $region30: #{lenet5_forward.5} parent=0 // pred_check
    _
  $region31: #{lenet5_forward.5} parent=0 // pred_check_branch
    %614 = sbr.rel (0) target = $region33
  $region32: #{lenet5_forward.5} parent=0 // pred_region
    _
  $region33: #{lenet5_forward.5} parent=0 // pred_fallthru
    _
  // Predicated region
  $region34: #{lenet5_forward.5} parent=0 // pred_check
    _
  $region35: #{lenet5_forward.5} parent=0 // pred_check_branch
    %616 = sbr.rel (0) target = $region37
  $region36: #{lenet5_forward.5} parent=0 // pred_region
    _
  $region37: #{lenet5_forward.5} parent=0 // pred_fallthru
    _

</llo_original>
